<compile_context>
chip_gen: v6e
topology: v6e:2x2x1
jax: 0.10.0
libtpu: 0.0.40
codegen_flags: <defaults>
</compile_context>

<pallas_src>
import functools

import numpy as np
import jax
import jax.numpy as jnp
from jax.experimental import pallas as pl
from jax.experimental.pallas import tpu as pltpu


# ----------------------------------------------------------------------------
# Host-side weight preparation (done once, outside the jitted forward).
# ----------------------------------------------------------------------------
def _toeplitz_conv(w_oihw, wc, s_in, l_in, half, dtype=jnp.bfloat16):
    """Zero-filled block-Toeplitz weight for a 3x3 valid conv on a row whose
    lanes encode (w_in, c_in) as lane = s_in*w_in + c_in.

    Output column for conv position (w, co):
      w even (= 2q): col = Cout*q + co            (lanes [0, half))
      w odd  (= 2q+1): col = half + Cout*q + co   (lanes [half, 2*half))
    so the 2x2 width max-pool becomes max(Y[..., :half], Y[..., half:]).
    Returns (3, l_in, 2*half): one matrix per ky tap.
    """
    co_n, ci_n, kh, kw = w_oihw.shape
    ky, kx, ci, co, w = np.meshgrid(
        np.arange(kh), np.arange(kw), np.arange(ci_n), np.arange(co_n),
        np.arange(wc), indexing="ij")
    rows = s_in * (w + kx) + ci
    cols = (w % 2) * half + co_n * (w // 2) + co
    vals = jnp.asarray(w_oihw)[co, ci, ky, kx]
    t = jnp.zeros((kh, l_in, 2 * half), jnp.float32)
    return t.at[ky, rows, cols].set(vals).astype(dtype)


def _lin1_blocks(lin1_w, dtype=jnp.bfloat16):
    """lin1 (512, 256) in PyTorch CHW-flatten order -> two (128, 512) blocks.

    Kernel feature layout: A3[h, b, 64*w + c] = pooled conv3 value (c, h, w),
    PyTorch flatten index = c*4 + h*2 + w.
    """
    h, w, c = np.meshgrid(np.arange(2), np.arange(2), np.arange(64),
                          indexing="ij")
    rows = 64 * w + c
    src = c * 4 + h * 2 + w
    wt = jnp.asarray(lin1_w).T                               # (256, 512)
    t = jnp.zeros((2, 128, 512), jnp.float32)
    return t.at[h, rows, :].set(wt[src, :]).astype(dtype)


def prepare_params(params, dtype=jnp.bfloat16):
    """One-time conversion of PyTorch-layout params into kernel operands."""
    l2p = jnp.zeros((512, 128), jnp.float32).at[:, :10].set(
        jnp.asarray(params["lin2_w"]).T)
    return dict(
        w1=_toeplitz_conv(params["conv1_w"], wc=30, s_in=3, l_in=96,
                          half=256, dtype=dtype),            # (3,  96, 512)
        b1=jnp.tile(jnp.asarray(params["conv1_b"], jnp.float32), 32
                    ).reshape(1, 512),
        w2=_toeplitz_conv(params["conv2_w"], wc=13, s_in=16, l_in=256,
                          half=256, dtype=dtype),            # (3, 256, 512)
        b2=jnp.tile(jnp.asarray(params["conv2_b"], jnp.float32), 16
                    ).reshape(1, 512),
        w3=_toeplitz_conv(params["conv3_w"], wc=4, s_in=32, l_in=256,
                          half=128, dtype=dtype),            # (3, 256, 256)
        b3=jnp.tile(jnp.asarray(params["conv3_b"], jnp.float32), 4
                    ).reshape(1, 256),
        l1=_lin1_blocks(params["lin1_w"], dtype),            # (2, 128, 512)
        lb1=jnp.asarray(params["lin1_b"], jnp.float32).reshape(1, 512),
        l2=l2p.astype(dtype),                                # (512, 128)
    )


# ----------------------------------------------------------------------------
# Fused DNet kernel.
# ----------------------------------------------------------------------------
def _dnet_kernel(x_ref, w1_ref, b1_ref, w2_ref, b2_ref, w3_ref, b3_ref,
                 l1_ref, lb1_ref, l2_ref, o_ref, *, bb):
    def conv_relu_pool(a, w_ref, b_ref, hc, hp, half):
        """a: (H_in, bb, L_in) f32.  3 Toeplitz matmuls (one per ky) + bias +
        ReLU, then 2x2/2 max pool.  Returns (hp, bb, half) f32."""
        l_in = a.shape[-1]
        acc = None
        for ky in range(3):
            # Leading-dim slice + (hc, bb, L)->(hc*bb, L) merge (bb % 8 == 0,
            # so it is tile-aligned / layout-free); bf16 only on MXU operands.
            lhs = a[ky:ky + hc].reshape(hc * bb, l_in).astype(jnp.bfloat16)
            d = jnp.dot(lhs, w_ref[ky], preferred_element_type=jnp.float32)
            acc = d if acc is None else acc + d
        y = jnp.maximum(acc + b_ref[...], 0.0)               # (hc*bb, 2*half)
        y = y.reshape(hc, bb, 2 * half)
        # Height pool: leading-dim pair split + max (layout-free).
        y = y[:2 * hp].reshape(hp, 2, bb, 2 * half)
        p = jnp.maximum(y[:, 0], y[:, 1])                    # (hp, bb, 2*half)
        # Width pool: even/odd w live in separate 128-aligned lane halves.
        return jnp.maximum(p[..., :half], p[..., half:])     # (hp, bb, half)

    a = x_ref[...]                                           # (32, bb, 96) f32
    a = conv_relu_pool(a, w1_ref, b1_ref, hc=30, hp=15, half=256)  # (15,bb,256)
    a = conv_relu_pool(a, w2_ref, b2_ref, hc=13, hp=6, half=256)   # ( 6,bb,256)
    a = conv_relu_pool(a, w3_ref, b3_ref, hc=4, hp=2, half=128)    # ( 2,bb,128)

    # TODO(synk): nn.Dropout treated as identity (eval mode); training-mode
    # dropout would mask the features / hidden via pltpu.prng_seed/random_bits.
    f0 = a[0].astype(jnp.bfloat16)                           # (bb, 128)
    f1 = a[1].astype(jnp.bfloat16)
    h = jnp.dot(f0, l1_ref[0], preferred_element_type=jnp.float32)
    h = h + jnp.dot(f1, l1_ref[1], preferred_element_type=jnp.float32)
    h = jnp.maximum(h + lb1_ref[...], 0.0)                   # (bb, 512)
    out = jnp.dot(h.astype(jnp.bfloat16), l2_ref[...],
                  preferred_element_type=jnp.float32)        # (bb, 128)
    o_ref[...] = out


# ----------------------------------------------------------------------------
# Public forward (accepts NCHW like the PyTorch module).
# ----------------------------------------------------------------------------
def _round_up(x, m):
    return ((x + m - 1) // m) * m


@functools.partial(jax.jit, static_argnames=("batch_block",))
def dnet_forward(kparams, x_nchw, batch_block=32):
    """x_nchw: (B, 3, 32, 32) float -> (B, 10) f32 logits (eval-mode DNet).

    For v7x, pick batch_block <= B/2 so the grid has >= 2 steps and both
    TensorCores are used; batch_block must end up a multiple of 8.
    """
    B = x_nchw.shape[0]
    bb = _round_up(min(batch_block, _round_up(B, 8)), 8)
    pad_b = (-B) % bb
    nb = (B + pad_b) // bb

    # Lane-dense input layout: (H, B, W*C) = (32, B, 96), batch in sublanes.
    x = jnp.transpose(x_nchw.astype(jnp.float32), (2, 0, 3, 1)).reshape(32, B, 96)
    x = jnp.pad(x, ((0, 0), (0, pad_b), (0, 0)))

    kernel = functools.partial(_dnet_kernel, bb=bb)
    out = pl.pallas_call(
        kernel,
        out_shape=jax.ShapeDtypeStruct((nb * bb, 128), jnp.float32),
        grid=(nb,),
        in_specs=[
            pl.BlockSpec((32, bb, 96), lambda n: (0, n, 0)),
            pl.BlockSpec((3, 96, 512), lambda n: (0, 0, 0)),
            pl.BlockSpec((1, 512), lambda n: (0, 0)),
            pl.BlockSpec((3, 256, 512), lambda n: (0, 0, 0)),
            pl.BlockSpec((1, 512), lambda n: (0, 0)),
            pl.BlockSpec((3, 256, 256), lambda n: (0, 0, 0)),
            pl.BlockSpec((1, 256), lambda n: (0, 0)),
            pl.BlockSpec((2, 128, 512), lambda n: (0, 0, 0)),
            pl.BlockSpec((1, 512), lambda n: (0, 0)),
            pl.BlockSpec((512, 128), lambda n: (0, 0)),
        ],
        out_specs=pl.BlockSpec((bb, 128), lambda n: (n, 0)),
        compiler_params=pltpu.CompilerParams(
            dimension_semantics=("parallel",),
            vmem_limit_bytes=40 * 1024 * 1024),
    )(x, kparams["w1"], kparams["b1"], kparams["w2"], kparams["b2"],
      kparams["w3"], kparams["b3"], kparams["l1"], kparams["lb1"],
      kparams["l2"])
    return out[:B, :10]


# ----------------------------------------------------------------------------
# Parameter init (PyTorch layouts) + pure-JAX reference for validation.
# ----------------------------------------------------------------------------
def init_params(key):
    ks = jax.random.split(key, 8)

    def conv_init(k, shape):  # OIHW
        fan_in = shape[1] * shape[2] * shape[3]
        return jax.random.normal(k, shape, jnp.float32) / np.sqrt(fan_in)

    def lin_init(k, shape):   # (out, in)
        return jax.random.normal(k, shape, jnp.float32) / np.sqrt(shape[1])

    return {
        "conv1_w": conv_init(ks[0], (16, 3, 3, 3)),
        "conv1_b": 0.1 * jax.random.normal(ks[1], (16,), jnp.float32),
        "conv2_w": conv_init(ks[2], (32, 16, 3, 3)),
        "conv2_b": 0.1 * jax.random.normal(ks[3], (32,), jnp.float32),
        "conv3_w": conv_init(ks[4], (64, 32, 3, 3)),
        "conv3_b": 0.1 * jax.random.normal(ks[5], (64,), jnp.float32),
        "lin1_w": lin_init(ks[6], (512, 256)),
        "lin1_b": 0.1 * jax.random.normal(ks[7], (512,), jnp.float32),
        "lin2_w": lin_init(jax.random.fold_in(ks[0], 1), (10, 512)),
    }


def dnet_reference(params, x_nchw):
    def conv(x, w, b):
        y = jax.lax.conv_general_dilated(
            x, w, window_strides=(1, 1), padding="VALID",
            dimension_numbers=("NCHW", "OIHW", "NCHW"))
        return jax.nn.relu(y + b[None, :, None, None])

    def pool(x):
        return jax.lax.reduce_window(x, -jnp.inf, jax.lax.max,
                                     (1, 1, 2, 2), (1, 1, 2, 2), "VALID")

    x = pool(conv(x_nchw.astype(jnp.float32), params["conv1_w"], params["conv1_b"]))
    x = pool(conv(x, params["conv2_w"], params["conv2_b"]))
    x = pool(conv(x, params["conv3_w"], params["conv3_b"]))
    f = x.reshape(x.shape[0], -1)
    h = jax.nn.relu(f @ params["lin1_w"].T + params["lin1_b"])
    return h @ params["lin2_w"].T


if __name__ == "__main__":
    key = jax.random.PRNGKey(0)
    pkey, xkey = jax.random.split(key)
    params = init_params(pkey)
    kparams = prepare_params(params)

    # 32x32 input is implied by the 64*2*2 flatten in the PyTorch module.
    x = jax.random.normal(xkey, (2, 3, 32, 32), jnp.float32)
    out = jax.block_until_ready(dnet_forward(kparams, x))
    assert out.shape == (2, 10)
    assert bool(jnp.all(jnp.isfinite(out)))

    ref = dnet_reference(params, x)
    err = float(jnp.max(jnp.abs(out - ref)))
    assert err < 0.15, f"mismatch vs reference: {err}"
    print("KERNEL_OK")
</pallas_src>

<mosaic_0001>
module attributes {stable_mosaic.version = 11 : i64} {
  func.func @_dnet_kernel(%arg0: i32, %arg1: memref<32x8x96xf32, #tpu.memory_space<vmem>>, %arg2: memref<3x96x512xbf16, #tpu.memory_space<vmem>>, %arg3: memref<1x512xf32, #tpu.memory_space<vmem>>, %arg4: memref<3x256x512xbf16, #tpu.memory_space<vmem>>, %arg5: memref<1x512xf32, #tpu.memory_space<vmem>>, %arg6: memref<3x256x256xbf16, #tpu.memory_space<vmem>>, %arg7: memref<1x256xf32, #tpu.memory_space<vmem>>, %arg8: memref<2x128x512xbf16, #tpu.memory_space<vmem>>, %arg9: memref<1x512xf32, #tpu.memory_space<vmem>>, %arg10: memref<512x128xbf16, #tpu.memory_space<vmem>>, %arg11: memref<8x128xf32, #tpu.memory_space<vmem>>) attributes {dimension_semantics = [#tpu.dimension_semantics<parallel>], iteration_bounds = array<i64: 1>, scalar_prefetch = 0 : i64, scratch_operands = 0 : i64, tpu.core_type = #tpu.core_type<tc>, window_params = [{transform_indices = @transform_0, window_bounds = array<i64: 32, 8, 96>}, {pipeline_mode = #tpu.pipeline_mode<synchronous>, transform_indices = @transform_1, window_bounds = array<i64: 3, 96, 512>}, {pipeline_mode = #tpu.pipeline_mode<synchronous>, transform_indices = @transform_2, window_bounds = array<i64: 1, 512>}, {pipeline_mode = #tpu.pipeline_mode<synchronous>, transform_indices = @transform_3, window_bounds = array<i64: 3, 256, 512>}, {pipeline_mode = #tpu.pipeline_mode<synchronous>, transform_indices = @transform_4, window_bounds = array<i64: 1, 512>}, {pipeline_mode = #tpu.pipeline_mode<synchronous>, transform_indices = @transform_5, window_bounds = array<i64: 3, 256, 256>}, {pipeline_mode = #tpu.pipeline_mode<synchronous>, transform_indices = @transform_6, window_bounds = array<i64: 1, 256>}, {pipeline_mode = #tpu.pipeline_mode<synchronous>, transform_indices = @transform_7, window_bounds = array<i64: 2, 128, 512>}, {pipeline_mode = #tpu.pipeline_mode<synchronous>, transform_indices = @transform_8, window_bounds = array<i64: 1, 512>}, {pipeline_mode = #tpu.pipeline_mode<synchronous>, transform_indices = @transform_9, window_bounds = array<i64: 512, 128>}, {transform_indices = @transform_10, window_bounds = array<i64: 8, 128>}]} {
    %c0 = arith.constant 0 : index
    %c0_0 = arith.constant 0 : index
    %c0_1 = arith.constant 0 : index
    %0 = vector.load %arg1[%c0, %c0_0, %c0_1] : memref<32x8x96xf32, #tpu.memory_space<vmem>>, vector<32x8x96xf32>
    %1 = vector.extract_strided_slice %0 {offsets = [0, 0, 0], sizes = [30, 8, 96], strides = [1, 1, 1]} : vector<32x8x96xf32> to vector<30x8x96xf32>
    %2 = vector.shape_cast %1 : vector<30x8x96xf32> to vector<240x96xf32>
    %3 = arith.truncf %2 : vector<240x96xf32> to vector<240x96xbf16>
    %c0_2 = arith.constant 0 : index
    %c0_3 = arith.constant 0 : index
    %c0_4 = arith.constant 0 : index
    %4 = vector.load %arg2[%c0_2, %c0_3, %c0_4] : memref<3x96x512xbf16, #tpu.memory_space<vmem>>, vector<1x96x512xbf16>
    %5 = vector.shape_cast %4 : vector<1x96x512xbf16> to vector<96x512xbf16>
    %cst = arith.constant dense<0.000000e+00> : vector<240x512xf32>
    %6 = tpu.matmul %3, %5, %cst {dimension_numbers = #tpu.dot_dimension_numbers<[1], [0], [0], [1], [0, 0, 1, 1], [], []>} : vector<240x96xbf16>, vector<96x512xbf16>, vector<240x512xf32> -> vector<240x512xf32>
    %7 = vector.extract_strided_slice %0 {offsets = [1, 0, 0], sizes = [30, 8, 96], strides = [1, 1, 1]} : vector<32x8x96xf32> to vector<30x8x96xf32>
    %8 = vector.shape_cast %7 : vector<30x8x96xf32> to vector<240x96xf32>
    %9 = arith.truncf %8 : vector<240x96xf32> to vector<240x96xbf16>
    %c1 = arith.constant 1 : index
    %c0_5 = arith.constant 0 : index
    %c0_6 = arith.constant 0 : index
    %10 = vector.load %arg2[%c1, %c0_5, %c0_6] : memref<3x96x512xbf16, #tpu.memory_space<vmem>>, vector<1x96x512xbf16>
    %11 = vector.shape_cast %10 : vector<1x96x512xbf16> to vector<96x512xbf16>
    %cst_7 = arith.constant dense<0.000000e+00> : vector<240x512xf32>
    %12 = tpu.matmul %9, %11, %cst_7 {dimension_numbers = #tpu.dot_dimension_numbers<[1], [0], [0], [1], [0, 0, 1, 1], [], []>} : vector<240x96xbf16>, vector<96x512xbf16>, vector<240x512xf32> -> vector<240x512xf32>
    %13 = arith.addf %6, %12 : vector<240x512xf32>
    %14 = vector.extract_strided_slice %0 {offsets = [2, 0, 0], sizes = [30, 8, 96], strides = [1, 1, 1]} : vector<32x8x96xf32> to vector<30x8x96xf32>
    %15 = vector.shape_cast %14 : vector<30x8x96xf32> to vector<240x96xf32>
    %16 = arith.truncf %15 : vector<240x96xf32> to vector<240x96xbf16>
    %c2 = arith.constant 2 : index
    %c0_8 = arith.constant 0 : index
    %c0_9 = arith.constant 0 : index
    %17 = vector.load %arg2[%c2, %c0_8, %c0_9] : memref<3x96x512xbf16, #tpu.memory_space<vmem>>, vector<1x96x512xbf16>
    %18 = vector.shape_cast %17 : vector<1x96x512xbf16> to vector<96x512xbf16>
    %cst_10 = arith.constant dense<0.000000e+00> : vector<240x512xf32>
    %19 = tpu.matmul %16, %18, %cst_10 {dimension_numbers = #tpu.dot_dimension_numbers<[1], [0], [0], [1], [0, 0, 1, 1], [], []>} : vector<240x96xbf16>, vector<96x512xbf16>, vector<240x512xf32> -> vector<240x512xf32>
    %20 = arith.addf %13, %19 : vector<240x512xf32>
    %c0_11 = arith.constant 0 : index
    %c0_12 = arith.constant 0 : index
    %21 = vector.load %arg3[%c0_11, %c0_12] : memref<1x512xf32, #tpu.memory_space<vmem>>, vector<1x512xf32>
    %22 = vector.broadcast %21 : vector<1x512xf32> to vector<240x512xf32>
    %23 = arith.addf %20, %22 : vector<240x512xf32>
    %cst_13 = arith.constant 0.000000e+00 : f32
    %24 = vector.broadcast %cst_13 : f32 to vector<240x512xf32>
    %25 = arith.maximumf %23, %24 : vector<240x512xf32>
    %26 = vector.shape_cast %25 : vector<240x512xf32> to vector<30x8x512xf32>
    %27 = vector.shape_cast %26 : vector<30x8x512xf32> to vector<15x2x8x512xf32>
    %28 = vector.extract_strided_slice %27 {offsets = [0, 0, 0, 0], sizes = [15, 1, 8, 512], strides = [1, 1, 1, 1]} : vector<15x2x8x512xf32> to vector<15x1x8x512xf32>
    %29 = vector.shape_cast %28 : vector<15x1x8x512xf32> to vector<15x8x512xf32>
    %30 = vector.extract_strided_slice %27 {offsets = [0, 1, 0, 0], sizes = [15, 1, 8, 512], strides = [1, 1, 1, 1]} : vector<15x2x8x512xf32> to vector<15x1x8x512xf32>
    %31 = vector.shape_cast %30 : vector<15x1x8x512xf32> to vector<15x8x512xf32>
    %32 = arith.maximumf %29, %31 : vector<15x8x512xf32>
    %33 = vector.extract_strided_slice %32 {offsets = [0, 0, 0], sizes = [15, 8, 256], strides = [1, 1, 1]} : vector<15x8x512xf32> to vector<15x8x256xf32>
    %34 = vector.extract_strided_slice %32 {offsets = [0, 0, 256], sizes = [15, 8, 256], strides = [1, 1, 1]} : vector<15x8x512xf32> to vector<15x8x256xf32>
    %35 = arith.maximumf %33, %34 : vector<15x8x256xf32>
    %36 = vector.extract_strided_slice %35 {offsets = [0, 0, 0], sizes = [13, 8, 256], strides = [1, 1, 1]} : vector<15x8x256xf32> to vector<13x8x256xf32>
    %37 = vector.shape_cast %36 : vector<13x8x256xf32> to vector<104x256xf32>
    %38 = arith.truncf %37 : vector<104x256xf32> to vector<104x256xbf16>
    %c0_14 = arith.constant 0 : index
    %c0_15 = arith.constant 0 : index
    %c0_16 = arith.constant 0 : index
    %39 = vector.load %arg4[%c0_14, %c0_15, %c0_16] : memref<3x256x512xbf16, #tpu.memory_space<vmem>>, vector<1x256x512xbf16>
    %40 = vector.shape_cast %39 : vector<1x256x512xbf16> to vector<256x512xbf16>
    %cst_17 = arith.constant dense<0.000000e+00> : vector<104x512xf32>
    %41 = tpu.matmul %38, %40, %cst_17 {dimension_numbers = #tpu.dot_dimension_numbers<[1], [0], [0], [1], [0, 0, 1, 1], [], []>} : vector<104x256xbf16>, vector<256x512xbf16>, vector<104x512xf32> -> vector<104x512xf32>
    %42 = vector.extract_strided_slice %35 {offsets = [1, 0, 0], sizes = [13, 8, 256], strides = [1, 1, 1]} : vector<15x8x256xf32> to vector<13x8x256xf32>
    %43 = vector.shape_cast %42 : vector<13x8x256xf32> to vector<104x256xf32>
    %44 = arith.truncf %43 : vector<104x256xf32> to vector<104x256xbf16>
    %c1_18 = arith.constant 1 : index
    %c0_19 = arith.constant 0 : index
    %c0_20 = arith.constant 0 : index
    %45 = vector.load %arg4[%c1_18, %c0_19, %c0_20] : memref<3x256x512xbf16, #tpu.memory_space<vmem>>, vector<1x256x512xbf16>
    %46 = vector.shape_cast %45 : vector<1x256x512xbf16> to vector<256x512xbf16>
    %cst_21 = arith.constant dense<0.000000e+00> : vector<104x512xf32>
    %47 = tpu.matmul %44, %46, %cst_21 {dimension_numbers = #tpu.dot_dimension_numbers<[1], [0], [0], [1], [0, 0, 1, 1], [], []>} : vector<104x256xbf16>, vector<256x512xbf16>, vector<104x512xf32> -> vector<104x512xf32>
    %48 = arith.addf %41, %47 : vector<104x512xf32>
    %49 = vector.extract_strided_slice %35 {offsets = [2, 0, 0], sizes = [13, 8, 256], strides = [1, 1, 1]} : vector<15x8x256xf32> to vector<13x8x256xf32>
    %50 = vector.shape_cast %49 : vector<13x8x256xf32> to vector<104x256xf32>
    %51 = arith.truncf %50 : vector<104x256xf32> to vector<104x256xbf16>
    %c2_22 = arith.constant 2 : index
    %c0_23 = arith.constant 0 : index
    %c0_24 = arith.constant 0 : index
    %52 = vector.load %arg4[%c2_22, %c0_23, %c0_24] : memref<3x256x512xbf16, #tpu.memory_space<vmem>>, vector<1x256x512xbf16>
    %53 = vector.shape_cast %52 : vector<1x256x512xbf16> to vector<256x512xbf16>
    %cst_25 = arith.constant dense<0.000000e+00> : vector<104x512xf32>
    %54 = tpu.matmul %51, %53, %cst_25 {dimension_numbers = #tpu.dot_dimension_numbers<[1], [0], [0], [1], [0, 0, 1, 1], [], []>} : vector<104x256xbf16>, vector<256x512xbf16>, vector<104x512xf32> -> vector<104x512xf32>
    %55 = arith.addf %48, %54 : vector<104x512xf32>
    %c0_26 = arith.constant 0 : index
    %c0_27 = arith.constant 0 : index
    %56 = vector.load %arg5[%c0_26, %c0_27] : memref<1x512xf32, #tpu.memory_space<vmem>>, vector<1x512xf32>
    %57 = vector.broadcast %56 : vector<1x512xf32> to vector<104x512xf32>
    %58 = arith.addf %55, %57 : vector<104x512xf32>
    %cst_28 = arith.constant 0.000000e+00 : f32
    %59 = vector.broadcast %cst_28 : f32 to vector<104x512xf32>
    %60 = arith.maximumf %58, %59 : vector<104x512xf32>
    %61 = vector.shape_cast %60 : vector<104x512xf32> to vector<13x8x512xf32>
    %62 = vector.extract_strided_slice %61 {offsets = [0, 0, 0], sizes = [12, 8, 512], strides = [1, 1, 1]} : vector<13x8x512xf32> to vector<12x8x512xf32>
    %63 = vector.shape_cast %62 : vector<12x8x512xf32> to vector<6x2x8x512xf32>
    %64 = vector.extract_strided_slice %63 {offsets = [0, 0, 0, 0], sizes = [6, 1, 8, 512], strides = [1, 1, 1, 1]} : vector<6x2x8x512xf32> to vector<6x1x8x512xf32>
    %65 = vector.shape_cast %64 : vector<6x1x8x512xf32> to vector<6x8x512xf32>
    %66 = vector.extract_strided_slice %63 {offsets = [0, 1, 0, 0], sizes = [6, 1, 8, 512], strides = [1, 1, 1, 1]} : vector<6x2x8x512xf32> to vector<6x1x8x512xf32>
    %67 = vector.shape_cast %66 : vector<6x1x8x512xf32> to vector<6x8x512xf32>
    %68 = arith.maximumf %65, %67 : vector<6x8x512xf32>
    %69 = vector.extract_strided_slice %68 {offsets = [0, 0, 0], sizes = [6, 8, 256], strides = [1, 1, 1]} : vector<6x8x512xf32> to vector<6x8x256xf32>
    %70 = vector.extract_strided_slice %68 {offsets = [0, 0, 256], sizes = [6, 8, 256], strides = [1, 1, 1]} : vector<6x8x512xf32> to vector<6x8x256xf32>
    %71 = arith.maximumf %69, %70 : vector<6x8x256xf32>
    %72 = vector.extract_strided_slice %71 {offsets = [0, 0, 0], sizes = [4, 8, 256], strides = [1, 1, 1]} : vector<6x8x256xf32> to vector<4x8x256xf32>
    %73 = vector.shape_cast %72 : vector<4x8x256xf32> to vector<32x256xf32>
    %74 = arith.truncf %73 : vector<32x256xf32> to vector<32x256xbf16>
    %c0_29 = arith.constant 0 : index
    %c0_30 = arith.constant 0 : index
    %c0_31 = arith.constant 0 : index
    %75 = vector.load %arg6[%c0_29, %c0_30, %c0_31] : memref<3x256x256xbf16, #tpu.memory_space<vmem>>, vector<1x256x256xbf16>
    %76 = vector.shape_cast %75 : vector<1x256x256xbf16> to vector<256x256xbf16>
    %cst_32 = arith.constant dense<0.000000e+00> : vector<32x256xf32>
    %77 = tpu.matmul %74, %76, %cst_32 {dimension_numbers = #tpu.dot_dimension_numbers<[1], [0], [0], [1], [0, 0, 1, 1], [], []>} : vector<32x256xbf16>, vector<256x256xbf16>, vector<32x256xf32> -> vector<32x256xf32>
    %78 = vector.extract_strided_slice %71 {offsets = [1, 0, 0], sizes = [4, 8, 256], strides = [1, 1, 1]} : vector<6x8x256xf32> to vector<4x8x256xf32>
    %79 = vector.shape_cast %78 : vector<4x8x256xf32> to vector<32x256xf32>
    %80 = arith.truncf %79 : vector<32x256xf32> to vector<32x256xbf16>
    %c1_33 = arith.constant 1 : index
    %c0_34 = arith.constant 0 : index
    %c0_35 = arith.constant 0 : index
    %81 = vector.load %arg6[%c1_33, %c0_34, %c0_35] : memref<3x256x256xbf16, #tpu.memory_space<vmem>>, vector<1x256x256xbf16>
    %82 = vector.shape_cast %81 : vector<1x256x256xbf16> to vector<256x256xbf16>
    %cst_36 = arith.constant dense<0.000000e+00> : vector<32x256xf32>
    %83 = tpu.matmul %80, %82, %cst_36 {dimension_numbers = #tpu.dot_dimension_numbers<[1], [0], [0], [1], [0, 0, 1, 1], [], []>} : vector<32x256xbf16>, vector<256x256xbf16>, vector<32x256xf32> -> vector<32x256xf32>
    %84 = arith.addf %77, %83 : vector<32x256xf32>
    %85 = vector.extract_strided_slice %71 {offsets = [2, 0, 0], sizes = [4, 8, 256], strides = [1, 1, 1]} : vector<6x8x256xf32> to vector<4x8x256xf32>
    %86 = vector.shape_cast %85 : vector<4x8x256xf32> to vector<32x256xf32>
    %87 = arith.truncf %86 : vector<32x256xf32> to vector<32x256xbf16>
    %c2_37 = arith.constant 2 : index
    %c0_38 = arith.constant 0 : index
    %c0_39 = arith.constant 0 : index
    %88 = vector.load %arg6[%c2_37, %c0_38, %c0_39] : memref<3x256x256xbf16, #tpu.memory_space<vmem>>, vector<1x256x256xbf16>
    %89 = vector.shape_cast %88 : vector<1x256x256xbf16> to vector<256x256xbf16>
    %cst_40 = arith.constant dense<0.000000e+00> : vector<32x256xf32>
    %90 = tpu.matmul %87, %89, %cst_40 {dimension_numbers = #tpu.dot_dimension_numbers<[1], [0], [0], [1], [0, 0, 1, 1], [], []>} : vector<32x256xbf16>, vector<256x256xbf16>, vector<32x256xf32> -> vector<32x256xf32>
    %91 = arith.addf %84, %90 : vector<32x256xf32>
    %c0_41 = arith.constant 0 : index
    %c0_42 = arith.constant 0 : index
    %92 = vector.load %arg7[%c0_41, %c0_42] : memref<1x256xf32, #tpu.memory_space<vmem>>, vector<1x256xf32>
    %93 = vector.broadcast %92 : vector<1x256xf32> to vector<32x256xf32>
    %94 = arith.addf %91, %93 : vector<32x256xf32>
    %cst_43 = arith.constant 0.000000e+00 : f32
    %95 = vector.broadcast %cst_43 : f32 to vector<32x256xf32>
    %96 = arith.maximumf %94, %95 : vector<32x256xf32>
    %97 = vector.shape_cast %96 : vector<32x256xf32> to vector<4x8x256xf32>
    %98 = vector.shape_cast %97 : vector<4x8x256xf32> to vector<2x2x8x256xf32>
    %99 = vector.extract_strided_slice %98 {offsets = [0, 0, 0, 0], sizes = [2, 1, 8, 256], strides = [1, 1, 1, 1]} : vector<2x2x8x256xf32> to vector<2x1x8x256xf32>
    %100 = vector.shape_cast %99 : vector<2x1x8x256xf32> to vector<2x8x256xf32>
    %101 = vector.extract_strided_slice %98 {offsets = [0, 1, 0, 0], sizes = [2, 1, 8, 256], strides = [1, 1, 1, 1]} : vector<2x2x8x256xf32> to vector<2x1x8x256xf32>
    %102 = vector.shape_cast %101 : vector<2x1x8x256xf32> to vector<2x8x256xf32>
    %103 = arith.maximumf %100, %102 : vector<2x8x256xf32>
    %104 = vector.extract_strided_slice %103 {offsets = [0, 0, 0], sizes = [2, 8, 128], strides = [1, 1, 1]} : vector<2x8x256xf32> to vector<2x8x128xf32>
    %105 = vector.extract_strided_slice %103 {offsets = [0, 0, 128], sizes = [2, 8, 128], strides = [1, 1, 1]} : vector<2x8x256xf32> to vector<2x8x128xf32>
    %106 = arith.maximumf %104, %105 : vector<2x8x128xf32>
    %107 = vector.extract_strided_slice %106 {offsets = [0, 0, 0], sizes = [1, 8, 128], strides = [1, 1, 1]} : vector<2x8x128xf32> to vector<1x8x128xf32>
    %108 = vector.shape_cast %107 : vector<1x8x128xf32> to vector<8x128xf32>
    %109 = arith.truncf %108 : vector<8x128xf32> to vector<8x128xbf16>
    %110 = vector.extract_strided_slice %106 {offsets = [1, 0, 0], sizes = [1, 8, 128], strides = [1, 1, 1]} : vector<2x8x128xf32> to vector<1x8x128xf32>
    %111 = vector.shape_cast %110 : vector<1x8x128xf32> to vector<8x128xf32>
    %112 = arith.truncf %111 : vector<8x128xf32> to vector<8x128xbf16>
    %c0_44 = arith.constant 0 : index
    %c0_45 = arith.constant 0 : index
    %c0_46 = arith.constant 0 : index
    %113 = vector.load %arg8[%c0_44, %c0_45, %c0_46] : memref<2x128x512xbf16, #tpu.memory_space<vmem>>, vector<1x128x512xbf16>
    %114 = vector.shape_cast %113 : vector<1x128x512xbf16> to vector<128x512xbf16>
    %cst_47 = arith.constant dense<0.000000e+00> : vector<8x512xf32>
    %115 = tpu.matmul %109, %114, %cst_47 {dimension_numbers = #tpu.dot_dimension_numbers<[1], [0], [0], [1], [0, 0, 1, 1], [], []>} : vector<8x128xbf16>, vector<128x512xbf16>, vector<8x512xf32> -> vector<8x512xf32>
    %c1_48 = arith.constant 1 : index
    %c0_49 = arith.constant 0 : index
    %c0_50 = arith.constant 0 : index
    %116 = vector.load %arg8[%c1_48, %c0_49, %c0_50] : memref<2x128x512xbf16, #tpu.memory_space<vmem>>, vector<1x128x512xbf16>
    %117 = vector.shape_cast %116 : vector<1x128x512xbf16> to vector<128x512xbf16>
    %cst_51 = arith.constant dense<0.000000e+00> : vector<8x512xf32>
    %118 = tpu.matmul %112, %117, %cst_51 {dimension_numbers = #tpu.dot_dimension_numbers<[1], [0], [0], [1], [0, 0, 1, 1], [], []>} : vector<8x128xbf16>, vector<128x512xbf16>, vector<8x512xf32> -> vector<8x512xf32>
    %119 = arith.addf %115, %118 : vector<8x512xf32>
    %c0_52 = arith.constant 0 : index
    %c0_53 = arith.constant 0 : index
    %120 = vector.load %arg9[%c0_52, %c0_53] : memref<1x512xf32, #tpu.memory_space<vmem>>, vector<1x512xf32>
    %121 = vector.broadcast %120 : vector<1x512xf32> to vector<8x512xf32>
    %122 = arith.addf %119, %121 : vector<8x512xf32>
    %cst_54 = arith.constant 0.000000e+00 : f32
    %123 = vector.broadcast %cst_54 : f32 to vector<8x512xf32>
    %124 = arith.maximumf %122, %123 : vector<8x512xf32>
    %125 = arith.truncf %124 : vector<8x512xf32> to vector<8x512xbf16>
    %c0_55 = arith.constant 0 : index
    %c0_56 = arith.constant 0 : index
    %126 = vector.load %arg10[%c0_55, %c0_56] : memref<512x128xbf16, #tpu.memory_space<vmem>>, vector<512x128xbf16>
    %cst_57 = arith.constant dense<0.000000e+00> : vector<8x128xf32>
    %127 = tpu.matmul %125, %126, %cst_57 {dimension_numbers = #tpu.dot_dimension_numbers<[1], [0], [0], [1], [0, 0, 1, 1], [], []>} : vector<8x512xbf16>, vector<512x128xbf16>, vector<8x128xf32> -> vector<8x128xf32>
    %c0_58 = arith.constant 0 : index
    %c0_59 = arith.constant 0 : index
    %128 = vector.load %arg11[%c0_58, %c0_59] : memref<8x128xf32, #tpu.memory_space<vmem>>, vector<8x128xf32>
    tpu.vector_store %arg11[%c0_58, %c0_59], %127 {strides = array<i32>} : memref<8x128xf32, #tpu.memory_space<vmem>>, vector<8x128xf32>,
    return
  }
  func.func @transform_0(%arg0: i32) -> (i32, i32, i32) {
    %c0_i32 = arith.constant 0 : i32
    %c0_i32_0 = arith.constant 0 : i32
    %c0_i32_1 = arith.constant 0 : i32
    return %c0_i32, %arg0, %c0_i32_0 : i32, i32, i32
  }
  func.func @transform_1(%arg0: i32) -> (i32, i32, i32) {
    %c0_i32 = arith.constant 0 : i32
    %c0_i32_0 = arith.constant 0 : i32
    %c0_i32_1 = arith.constant 0 : i32
    %c0_i32_2 = arith.constant 0 : i32
    return %c0_i32, %c0_i32_0, %c0_i32_1 : i32, i32, i32
  }
  func.func @transform_2(%arg0: i32) -> (i32, i32) {
    %c0_i32 = arith.constant 0 : i32
    %c0_i32_0 = arith.constant 0 : i32
    %c0_i32_1 = arith.constant 0 : i32
    return %c0_i32, %c0_i32_0 : i32, i32
  }
  func.func @transform_3(%arg0: i32) -> (i32, i32, i32) {
    %c0_i32 = arith.constant 0 : i32
    %c0_i32_0 = arith.constant 0 : i32
    %c0_i32_1 = arith.constant 0 : i32
    %c0_i32_2 = arith.constant 0 : i32
    return %c0_i32, %c0_i32_0, %c0_i32_1 : i32, i32, i32
  }
  func.func @transform_4(%arg0: i32) -> (i32, i32) {
    %c0_i32 = arith.constant 0 : i32
    %c0_i32_0 = arith.constant 0 : i32
    %c0_i32_1 = arith.constant 0 : i32
    return %c0_i32, %c0_i32_0 : i32, i32
  }
  func.func @transform_5(%arg0: i32) -> (i32, i32, i32) {
    %c0_i32 = arith.constant 0 : i32
    %c0_i32_0 = arith.constant 0 : i32
    %c0_i32_1 = arith.constant 0 : i32
    %c0_i32_2 = arith.constant 0 : i32
    return %c0_i32, %c0_i32_0, %c0_i32_1 : i32, i32, i32
  }
  func.func @transform_6(%arg0: i32) -> (i32, i32) {
    %c0_i32 = arith.constant 0 : i32
    %c0_i32_0 = arith.constant 0 : i32
    %c0_i32_1 = arith.constant 0 : i32
    return %c0_i32, %c0_i32_0 : i32, i32
  }
  func.func @transform_7(%arg0: i32) -> (i32, i32, i32) {
    %c0_i32 = arith.constant 0 : i32
    %c0_i32_0 = arith.constant 0 : i32
    %c0_i32_1 = arith.constant 0 : i32
    %c0_i32_2 = arith.constant 0 : i32
    return %c0_i32, %c0_i32_0, %c0_i32_1 : i32, i32, i32
  }
  func.func @transform_8(%arg0: i32) -> (i32, i32) {
    %c0_i32 = arith.constant 0 : i32
    %c0_i32_0 = arith.constant 0 : i32
    %c0_i32_1 = arith.constant 0 : i32
    return %c0_i32, %c0_i32_0 : i32, i32
  }
  func.func @transform_9(%arg0: i32) -> (i32, i32) {
    %c0_i32 = arith.constant 0 : i32
    %c0_i32_0 = arith.constant 0 : i32
    %c0_i32_1 = arith.constant 0 : i32
    return %c0_i32, %c0_i32_0 : i32, i32
  }
  func.func @transform_10(%arg0: i32) -> (i32, i32) {
    %c0_i32 = arith.constant 0 : i32
    %c0_i32_0 = arith.constant 0 : i32
    return %arg0, %c0_i32 : i32, i32
  }
}

</mosaic_0001>

<llo_original>
// kernel: dnet_forward.1
$region0: #{dnet_forward.1}
  #allocation0 [shape = 'u32[]', space=smem, size = 0x4, offset = 0x4, fixed_abs, tag = 'smem constant byte address 0x4 - core index']
  #allocation1 [shape = 'u32[144,128]{1,0:T(1,128)}', space=vmem, size = 0x12000, scoped, tag = 'internal scratch']
  %s0 = inlined_call_operand.vmem [shape: f32[32,8,96], index: 0, kind: input, shape index: {}]
  %s1 = inlined_call_operand.hbm [shape: bf16[3,96,512], index: 1, kind: input, shape index: {}]
  %s2 = inlined_call_operand.vmem [shape: f32[1,512], index: 2, kind: input, shape index: {}]
  %s3 = inlined_call_operand.hbm [shape: bf16[3,256,512], index: 3, kind: input, shape index: {}]
  %s4 = inlined_call_operand.vmem [shape: f32[1,512], index: 4, kind: input, shape index: {}]
  %s5 = inlined_call_operand.vmem [shape: bf16[3,256,256], index: 5, kind: input, shape index: {}]
  %s6 = inlined_call_operand.vmem [shape: f32[1,256], index: 6, kind: input, shape index: {}]
  %s7 = inlined_call_operand.hbm [shape: bf16[2,128,512], index: 7, kind: input, shape index: {}]
  %s8 = inlined_call_operand.vmem [shape: f32[1,512], index: 8, kind: input, shape index: {}]
  %s9 = inlined_call_operand.hbm [shape: bf16[512,128], index: 9, kind: input, shape index: {}]
  %s10 = inlined_call_operand.vmem [shape: f32[8,128], index: 10, kind: output, shape index: {}]
  %s11 = sld [smem:[#allocation0]]
  $region66: #{dnet_forward.1} parent=0
    _
  %s13 = ssub.s32 1, %s11
  %s14 = scalar_select 0, %s13, %s11
  $region1: #{dnet_forward.1} parent=0
    #allocation2 [shape = 'u8[294912]{0}', space=vmem, size = 0x48000, scoped, tag = 'input window, operand 1, single buffered']
    #allocation3 [shape = 's32[1]{0}', space=sflag, size = 0x4, scoped, tag = 'scoped memory for dnet_forward.1']
    #allocation4 [shape = 'u8[786432]{0}', space=vmem, size = 0xc0000, scoped, tag = 'input window, operand 3, single buffered']
    #allocation5 [shape = 's32[1]{0}', space=sflag, size = 0x4, scoped, tag = 'scoped memory for dnet_forward.1']
    #allocation6 [shape = 'u8[262144]{0}', space=vmem, size = 0x40000, scoped, tag = 'input window, operand 7, single buffered']
    #allocation7 [shape = 'u8[131072]{0}', space=vmem, size = 0x20000, scoped, tag = 'input window, operand 9, single buffered']
    #allocation8 [shape = 's32[1]{0}', space=sflag, size = 0x4, scoped, tag = 'scoped memory for dnet_forward.1']
    %15 = vsyncpa [#allocation3], 0
    %16 = vsyncpa [#allocation5], 0
    %17 = vsyncpa [#allocation8], 0
    // Predicated region
    $region2: #{dnet_forward.1} parent=1 // pred_check
      _
    $region3: #{dnet_forward.1} parent=1 // pred_check_branch
      %19 = sbr.rel (0) target = $region5
    $region4: #{dnet_forward.1} parent=1 // pred_region
      _
    $region5: #{dnet_forward.1} parent=1 // pred_fallthru
      _
    // Predicated region
    $region6: #{dnet_forward.1} parent=1 // pred_check
      _
    $region7: #{dnet_forward.1} parent=1 // pred_check_branch
      %21 = sbr.rel (0) target = $region9
    $region8: #{dnet_forward.1} parent=1 // pred_region
      %s23 = ssub.s32 9216, 9216
      %24 = vsyncadd [#allocation3], %s23
      %s25 = sshll.u32 [#allocation2], 4
      %s26 = int_to_ptr.vmem [resolvable:$true] %s25
      %31 = dma.hbm_to_vmem [thread:$0]  %s1, 9216, %s26, [#allocation3], 256, 256, 16
    $region9: #{dnet_forward.1} parent=1 // pred_fallthru
      _
    // Predicated region
    $region10: #{dnet_forward.1} parent=1 // pred_check
      _
    $region11: #{dnet_forward.1} parent=1 // pred_check_branch
      %33 = sbr.rel (0) target = $region13
    $region12: #{dnet_forward.1} parent=1 // pred_region
      _
    $region13: #{dnet_forward.1} parent=1 // pred_fallthru
      _
    // Predicated region
    $region14: #{dnet_forward.1} parent=1 // pred_check
      _
    $region15: #{dnet_forward.1} parent=1 // pred_check_branch
      %35 = sbr.rel (0) target = $region17
    $region16: #{dnet_forward.1} parent=1 // pred_region
      %s37 = ssub.s32 24576, 24576
      %38 = vsyncadd [#allocation5], %s37
      %s39 = sshll.u32 [#allocation4], 4
      %s40 = int_to_ptr.vmem [resolvable:$true] %s39
      %45 = dma.hbm_to_vmem [thread:$0]  %s3, 24576, %s40, [#allocation5], 256, 256, 16
    $region17: #{dnet_forward.1} parent=1 // pred_fallthru
      _
    // Predicated region
    $region18: #{dnet_forward.1} parent=1 // pred_check
      _
    $region19: #{dnet_forward.1} parent=1 // pred_check_branch
      %47 = sbr.rel (0) target = $region21
    $region20: #{dnet_forward.1} parent=1 // pred_region
      _
    $region21: #{dnet_forward.1} parent=1 // pred_fallthru
      _
    // Predicated region
    $region22: #{dnet_forward.1} parent=1 // pred_check
      _
    $region23: #{dnet_forward.1} parent=1 // pred_check_branch
      %49 = sbr.rel (0) target = $region25
    $region24: #{dnet_forward.1} parent=1 // pred_region
      _
    $region25: #{dnet_forward.1} parent=1 // pred_fallthru
      _
    // Predicated region
    $region26: #{dnet_forward.1} parent=1 // pred_check
      _
    $region27: #{dnet_forward.1} parent=1 // pred_check_branch
      %51 = sbr.rel (0) target = $region29
    $region28: #{dnet_forward.1} parent=1 // pred_region
      _
    $region29: #{dnet_forward.1} parent=1 // pred_fallthru
      _
    // Predicated region
    $region30: #{dnet_forward.1} parent=1 // pred_check
      _
    $region31: #{dnet_forward.1} parent=1 // pred_check_branch
      %53 = sbr.rel (0) target = $region33
    $region32: #{dnet_forward.1} parent=1 // pred_region
      %s55 = ssub.s32 8192, 8192
      %56 = vsyncadd [#allocation5], %s55
      %s57 = sshll.u32 [#allocation6], 4
      %s58 = int_to_ptr.vmem [resolvable:$true] %s57
      %63 = dma.hbm_to_vmem [thread:$0]  %s7, 8192, %s58, [#allocation5], 256, 256, 16
    $region33: #{dnet_forward.1} parent=1 // pred_fallthru
      _
    // Predicated region
    $region34: #{dnet_forward.1} parent=1 // pred_check
      _
    $region35: #{dnet_forward.1} parent=1 // pred_check_branch
      %65 = sbr.rel (0) target = $region37
    $region36: #{dnet_forward.1} parent=1 // pred_region
      _
    $region37: #{dnet_forward.1} parent=1 // pred_fallthru
      _
    // Predicated region
    $region38: #{dnet_forward.1} parent=1 // pred_check
      _
    $region39: #{dnet_forward.1} parent=1 // pred_check_branch
      %67 = sbr.rel (0) target = $region41
    $region40: #{dnet_forward.1} parent=1 // pred_region
      %s69 = ssub.s32 4096, 4096
      %70 = vsyncadd [#allocation8], %s69
      %s71 = sshll.u32 [#allocation7], 4
      %s72 = int_to_ptr.vmem [resolvable:$true] %s71
      %77 = dma.hbm_to_vmem [thread:$0]  %s9, 4096, %s72, [#allocation8], 64, 64, 4
    $region41: #{dnet_forward.1} parent=1 // pred_fallthru
      _
    // Predicated region
    $region42: #{dnet_forward.1} parent=1 // pred_check
      _
    $region43: #{dnet_forward.1} parent=1 // pred_check_branch
      %79 = sbr.rel (0) target = $region45
    $region44: #{dnet_forward.1} parent=1 // pred_region
      %80 = dma.done [#allocation3], 9216
    $region45: #{dnet_forward.1} parent=1 // pred_fallthru
      _
    // Predicated region
    $region46: #{dnet_forward.1} parent=1 // pred_check
      _
    $region47: #{dnet_forward.1} parent=1 // pred_check_branch
      %82 = sbr.rel (0) target = $region49
    $region48: #{dnet_forward.1} parent=1 // pred_region
      %83 = dma.done [#allocation5], 24576
    $region49: #{dnet_forward.1} parent=1 // pred_fallthru
      _
    // Predicated region
    $region50: #{dnet_forward.1} parent=1 // pred_check
      _
    $region51: #{dnet_forward.1} parent=1 // pred_check_branch
      %85 = sbr.rel (0) target = $region53
    $region52: #{dnet_forward.1} parent=1 // pred_region
      %86 = dma.done [#allocation5], 8192
    $region53: #{dnet_forward.1} parent=1 // pred_fallthru
      _
    // Predicated region
    $region54: #{dnet_forward.1} parent=1 // pred_check
      _
    $region55: #{dnet_forward.1} parent=1 // pred_check_branch
      %88 = sbr.rel (0) target = $region57
    $region56: #{dnet_forward.1} parent=1 // pred_region
      %89 = dma.done [#allocation8], 4096
    $region57: #{dnet_forward.1} parent=1 // pred_fallthru
      _
    %v91 = vld [vmem:[%s0] sm:$0xff]
    %v92 = vld [vmem:[%s0 + $0x8] sm:$0xff]
    %v93 = vld [vmem:[%s0 + $0x10] sm:$0xff]
    %v94 = vld [vmem:[%s0 + $0x18] sm:$0xff]
    %v95 = vld [vmem:[%s0 + $0x20] sm:$0xff]
    %v96 = vld [vmem:[%s0 + $0x28] sm:$0xff]
    %v97 = vld [vmem:[%s0 + $0x30] sm:$0xff]
    %v98 = vld [vmem:[%s0 + $0x38] sm:$0xff]
    %v99 = vld [vmem:[%s0 + $0x40] sm:$0xff]
    %v100 = vld [vmem:[%s0 + $0x48] sm:$0xff]
    %v101 = vld [vmem:[%s0 + $0x50] sm:$0xff]
    %v102 = vld [vmem:[%s0 + $0x58] sm:$0xff]
    %v103 = vld [vmem:[%s0 + $0x60] sm:$0xff]
    %v104 = vld [vmem:[%s0 + $0x68] sm:$0xff]
    %v105 = vld [vmem:[%s0 + $0x70] sm:$0xff]
    %v106 = vld [vmem:[%s0 + $0x78] sm:$0xff]
    %v107 = vld [vmem:[%s0 + $0x80] sm:$0xff]
    %v108 = vld [vmem:[%s0 + $0x88] sm:$0xff]
    %v109 = vld [vmem:[%s0 + $0x90] sm:$0xff]
    %v110 = vld [vmem:[%s0 + $0x98] sm:$0xff]
    %v111 = vld [vmem:[%s0 + $0xa0] sm:$0xff]
    %v112 = vld [vmem:[%s0 + $0xa8] sm:$0xff]
    %v113 = vld [vmem:[%s0 + $0xb0] sm:$0xff]
    %v114 = vld [vmem:[%s0 + $0xb8] sm:$0xff]
    %v115 = vld [vmem:[%s0 + $0xc0] sm:$0xff]
    %v116 = vld [vmem:[%s0 + $0xc8] sm:$0xff]
    %v117 = vld [vmem:[%s0 + $0xd0] sm:$0xff]
    %v118 = vld [vmem:[%s0 + $0xd8] sm:$0xff]
    %v119 = vld [vmem:[%s0 + $0xe0] sm:$0xff]
    %v120 = vld [vmem:[%s0 + $0xe8] sm:$0xff]
    %v121 = vld [vmem:[%s0 + $0xf0] sm:$0xff]
    %v122 = vld [vmem:[%s0 + $0xf8] sm:$0xff]
    %v123 = vpack.c.bf16 %v92, %v91
    %v124 = vpack.c.bf16 %v94, %v93
    %v125 = vpack.c.bf16 %v96, %v95
    %v126 = vpack.c.bf16 %v98, %v97
    %v127 = vpack.c.bf16 %v100, %v99
    %v128 = vpack.c.bf16 %v102, %v101
    %v129 = vpack.c.bf16 %v104, %v103
    %v130 = vpack.c.bf16 %v106, %v105
    %v131 = vpack.c.bf16 %v108, %v107
    %v132 = vpack.c.bf16 %v110, %v109
    %v133 = vpack.c.bf16 %v112, %v111
    %v134 = vpack.c.bf16 %v114, %v113
    %v135 = vpack.c.bf16 %v116, %v115
    %v136 = vpack.c.bf16 %v118, %v117
    %v137 = vpack.c.bf16 %v120, %v119
    %v138 = vld [vmem:[#allocation2] sm:$0xff]
    %v139 = vld [vmem:[#allocation2 + $0x8] sm:$0xff]
    %v140 = vld [vmem:[#allocation2 + $0x10] sm:$0xff]
    %v141 = vld [vmem:[#allocation2 + $0x18] sm:$0xff]
    %v142 = vld [vmem:[#allocation2 + $0x20] sm:$0xff]
    %v143 = vld [vmem:[#allocation2 + $0x28] sm:$0xff]
    %v144 = vld [vmem:[#allocation2 + $0x30] sm:$0xff]
    %v145 = vld [vmem:[#allocation2 + $0x38] sm:$0xff]
    %v146 = vld [vmem:[#allocation2 + $0x40] sm:$0xff]
    %v147 = vld [vmem:[#allocation2 + $0x48] sm:$0xff]
    %v148 = vld [vmem:[#allocation2 + $0x50] sm:$0xff]
    %v149 = vld [vmem:[#allocation2 + $0x58] sm:$0xff]
    %v150 = vld [vmem:[#allocation2 + $0x60] sm:$0xff]
    %v151 = vld [vmem:[#allocation2 + $0x68] sm:$0xff]
    %v152 = vld [vmem:[#allocation2 + $0x70] sm:$0xff]
    %v153 = vld [vmem:[#allocation2 + $0x78] sm:$0xff]
    %v154 = vld [vmem:[#allocation2 + $0x80] sm:$0xff]
    %v155 = vld [vmem:[#allocation2 + $0x88] sm:$0xff]
    %v156 = vld [vmem:[#allocation2 + $0x90] sm:$0xff]
    %v157 = vld [vmem:[#allocation2 + $0x98] sm:$0xff]
    %v158 = vld [vmem:[#allocation2 + $0xa0] sm:$0xff]
    %v159 = vld [vmem:[#allocation2 + $0xa8] sm:$0xff]
    %v160 = vld [vmem:[#allocation2 + $0xb0] sm:$0xff]
    %v161 = vld [vmem:[#allocation2 + $0xb8] sm:$0xff]
    %v162 = vpack.c.bf16 %v93, %v92
    %v163 = vpack.c.bf16 %v95, %v94
    %v164 = vpack.c.bf16 %v97, %v96
    %v165 = vpack.c.bf16 %v99, %v98
    %v166 = vpack.c.bf16 %v101, %v100
    %v167 = vpack.c.bf16 %v103, %v102
    %v168 = vpack.c.bf16 %v105, %v104
    %v169 = vpack.c.bf16 %v107, %v106
    %v170 = vpack.c.bf16 %v109, %v108
    %v171 = vpack.c.bf16 %v111, %v110
    %v172 = vpack.c.bf16 %v113, %v112
    %v173 = vpack.c.bf16 %v115, %v114
    %v174 = vpack.c.bf16 %v117, %v116
    %v175 = vpack.c.bf16 %v119, %v118
    %v176 = vpack.c.bf16 %v121, %v120
    %s177 = scalar_lea.vmem [#allocation2], 192
    %v178 = vld [vmem:[%s177] sm:$0xff]
    %v179 = vld [vmem:[%s177 + $0x8] sm:$0xff]
    %v180 = vld [vmem:[%s177 + $0x10] sm:$0xff]
    %v181 = vld [vmem:[%s177 + $0x18] sm:$0xff]
    %v182 = vld [vmem:[%s177 + $0x20] sm:$0xff]
    %v183 = vld [vmem:[%s177 + $0x28] sm:$0xff]
    %v184 = vld [vmem:[%s177 + $0x30] sm:$0xff]
    %v185 = vld [vmem:[%s177 + $0x38] sm:$0xff]
    %v186 = vld [vmem:[%s177 + $0x40] sm:$0xff]
    %v187 = vld [vmem:[%s177 + $0x48] sm:$0xff]
    %v188 = vld [vmem:[%s177 + $0x50] sm:$0xff]
    %v189 = vld [vmem:[%s177 + $0x58] sm:$0xff]
    %v190 = vld [vmem:[%s177 + $0x60] sm:$0xff]
    %v191 = vld [vmem:[%s177 + $0x68] sm:$0xff]
    %v192 = vld [vmem:[%s177 + $0x70] sm:$0xff]
    %v193 = vld [vmem:[%s177 + $0x78] sm:$0xff]
    %v194 = vld [vmem:[%s177 + $0x80] sm:$0xff]
    %v195 = vld [vmem:[%s177 + $0x88] sm:$0xff]
    %v196 = vld [vmem:[%s177 + $0x90] sm:$0xff]
    %v197 = vld [vmem:[%s177 + $0x98] sm:$0xff]
    %v198 = vld [vmem:[%s177 + $0xa0] sm:$0xff]
    %v199 = vld [vmem:[%s177 + $0xa8] sm:$0xff]
    %v200 = vld [vmem:[%s177 + $0xb0] sm:$0xff]
    %v201 = vld [vmem:[%s177 + $0xb8] sm:$0xff]
    %v226 = vunpack.c.l.b16 %v178
    %v227 = vunpack.c.h.b16 %v178
    %v228 = vunpack.c.l.b16 %v179
    %v229 = vunpack.c.h.b16 %v179
    %v230 = vunpack.c.l.b16 %v180
    %v231 = vunpack.c.h.b16 %v180
    %v232 = vunpack.c.l.b16 %v181
    %v233 = vunpack.c.h.b16 %v181
    %v234 = vunpack.c.l.b16 %v182
    %v235 = vunpack.c.h.b16 %v182
    %v236 = vunpack.c.l.b16 %v183
    %v237 = vunpack.c.h.b16 %v183
    %v238 = vunpack.c.l.b16 %v184
    %v239 = vunpack.c.h.b16 %v184
    %v240 = vunpack.c.l.b16 %v185
    %v241 = vunpack.c.h.b16 %v185
    %v242 = vunpack.c.l.b16 %v186
    %v243 = vunpack.c.h.b16 %v186
    %v244 = vunpack.c.l.b16 %v187
    %v245 = vunpack.c.h.b16 %v187
    %v246 = vunpack.c.l.b16 %v188
    %v247 = vunpack.c.h.b16 %v188
    %v248 = vunpack.c.l.b16 %v189
    %v249 = vunpack.c.h.b16 %v189
    %v250 = vunpack.c.l.b16 %v190
    %v251 = vunpack.c.h.b16 %v190
    %v252 = vunpack.c.l.b16 %v191
    %v253 = vunpack.c.h.b16 %v191
    %v254 = vunpack.c.l.b16 %v192
    %v255 = vunpack.c.h.b16 %v192
    %v256 = vunpack.c.l.b16 %v193
    %v257 = vunpack.c.h.b16 %v193
    %v258 = vunpack.c.l.b16 %v194
    %v259 = vunpack.c.h.b16 %v194
    %v260 = vunpack.c.l.b16 %v195
    %v261 = vunpack.c.h.b16 %v195
    %v262 = vunpack.c.l.b16 %v196
    %v263 = vunpack.c.h.b16 %v196
    %v264 = vunpack.c.l.b16 %v197
    %v265 = vunpack.c.h.b16 %v197
    %v266 = vunpack.c.l.b16 %v198
    %v267 = vunpack.c.h.b16 %v198
    %v268 = vunpack.c.l.b16 %v199
    %v269 = vunpack.c.h.b16 %v199
    %v270 = vunpack.c.l.b16 %v200
    %v271 = vunpack.c.h.b16 %v200
    %v272 = vunpack.c.l.b16 %v201
    %v273 = vunpack.c.h.b16 %v201
    %v274 = vpack.c.b16 %v230, %v226
    %v275 = vpack.c.b16 %v231, %v227
    %v276 = vpack.c.b16 %v232, %v228
    %v277 = vpack.c.b16 %v233, %v229
    %v278 = vpack.c.b16 %v238, %v234
    %v279 = vpack.c.b16 %v239, %v235
    %v280 = vpack.c.b16 %v240, %v236
    %v281 = vpack.c.b16 %v241, %v237
    %v282 = vpack.c.b16 %v246, %v242
    %v283 = vpack.c.b16 %v247, %v243
    %v284 = vpack.c.b16 %v248, %v244
    %v285 = vpack.c.b16 %v249, %v245
    %v286 = vpack.c.b16 %v254, %v250
    %v287 = vpack.c.b16 %v255, %v251
    %v288 = vpack.c.b16 %v256, %v252
    %v289 = vpack.c.b16 %v257, %v253
    %v290 = vpack.c.b16 %v262, %v258
    %v291 = vpack.c.b16 %v263, %v259
    %v292 = vpack.c.b16 %v264, %v260
    %v293 = vpack.c.b16 %v265, %v261
    %v294 = vpack.c.b16 %v270, %v266
    %v295 = vpack.c.b16 %v271, %v267
    %v296 = vpack.c.b16 %v272, %v268
    %v297 = vpack.c.b16 %v273, %v269
    %vm322 = vcmask 785408
    %v324 = vsel %vm322, %v162, 0
    %v327 = vsel %vm322, %v163, 0
    %v330 = vsel %vm322, %v164, 0
    %v333 = vsel %vm322, %v165, 0
    %v336 = vsel %vm322, %v166, 0
    %v339 = vsel %vm322, %v167, 0
    %v342 = vsel %vm322, %v168, 0
    %v345 = vsel %vm322, %v169, 0
    %v348 = vsel %vm322, %v170, 0
    %v351 = vsel %vm322, %v171, 0
    %v354 = vsel %vm322, %v172, 0
    %v357 = vsel %vm322, %v173, 0
    %v360 = vsel %vm322, %v174, 0
    %v363 = vsel %vm322, %v175, 0
    %v366 = vsel %vm322, %v176, 0
    %368 = vmatprep.subr.bf16.mxu0 0
    %369 = vmatpush1.bf16.msra.mxu0 0
    %370 = vmatprep.subr.bf16.mxu0 0
    %371 = vmatpush1.bf16.msra.mxu0 0
    %372 = vmatprep.subr.bf16.mxu0 %v295
    %373 = vmatpush1.bf16.msra.mxu0 %v294
    %374 = vmatprep.subr.bf16.mxu0 %v291
    %375 = vmatpush1.bf16.msra.mxu0 %v290
    %376 = vmatprep.subr.bf16.mxu0 %v287
    %377 = vmatpush1.bf16.msra.mxu0 %v286
    %378 = vmatprep.subr.bf16.mxu0 %v283
    %379 = vmatpush1.bf16.msra.mxu0 %v282
    %380 = vmatprep.subr.bf16.mxu0 %v279
    %381 = vmatpush1.bf16.msra.mxu0 %v278
    %382 = vmatprep.subr.bf16.mxu0 %v275
    %383 = vmatpush1.bf16.msra.mxu0 %v274
    %384 = vmatprep.subr.bf16.mxu0 0
    %385 = vmatpush2.bf16.msra.mxu0 0
    %386 = vmatprep.subr.bf16.mxu0 0
    %387 = vmatpush2.bf16.msra.mxu0 0
    %388 = vmatprep.subr.bf16.mxu0 0
    %389 = vmatpush2.bf16.msra.mxu0 0
    %390 = vmatprep.subr.bf16.mxu0 0
    %391 = vmatpush2.bf16.msra.mxu0 0
    %392 = vmatprep.subr.bf16.mxu0 0
    %393 = vmatpush2.bf16.msra.mxu0 0
    %394 = vmatprep.subr.bf16.mxu0 0
    %395 = vmatpush2.bf16.msra.mxu0 0
    %396 = vmatprep.subr.bf16.mxu0 0
    %397 = vmatpush2.bf16.msra.mxu0 0
    %398 = vmatprep.subr.bf16.mxu0 0
    %399 = vmatpush2.bf16.msra.mxu0 0
    %400 = vmatprep.mubr.bf16.mxu0 0
    %401 = vmatmul.mubr.bf16.gmra.mxu0 %v324
    %v402 = vpop.f32.mrf.mxu0
    %v403 = vadd.f32 0.0, %v402
    %v404 = vpop.f32.mrf.mxu0
    %v405 = vadd.f32 0.0, %v404
    %v406 = vpop.f32.mrf.mxu0
    %v407 = vadd.f32 0.0, %v406
    %v408 = vpop.f32.mrf.mxu0
    %v409 = vadd.f32 0.0, %v408
    %410 = vmatprep.mubr.bf16.mxu0 0
    %411 = vmatmul.mubr.bf16.gmra.mxu0 %v327
    %v412 = vpop.f32.mrf.mxu0
    %v413 = vadd.f32 0.0, %v412
    %v414 = vpop.f32.mrf.mxu0
    %v415 = vadd.f32 0.0, %v414
    %v416 = vpop.f32.mrf.mxu0
    %v417 = vadd.f32 0.0, %v416
    %v418 = vpop.f32.mrf.mxu0
    %v419 = vadd.f32 0.0, %v418
    %420 = vmatprep.mubr.bf16.mxu0 0
    %421 = vmatmul.mubr.bf16.gmra.mxu0 %v330
    %v422 = vpop.f32.mrf.mxu0
    %v423 = vadd.f32 0.0, %v422
    %v424 = vpop.f32.mrf.mxu0
    %v425 = vadd.f32 0.0, %v424
    %v426 = vpop.f32.mrf.mxu0
    %v427 = vadd.f32 0.0, %v426
    %v428 = vpop.f32.mrf.mxu0
    %v429 = vadd.f32 0.0, %v428
    %430 = vmatprep.mubr.bf16.mxu0 0
    %431 = vmatmul.mubr.bf16.gmra.mxu0 %v333
    %v432 = vpop.f32.mrf.mxu0
    %v433 = vadd.f32 0.0, %v432
    %v434 = vpop.f32.mrf.mxu0
    %v435 = vadd.f32 0.0, %v434
    %v436 = vpop.f32.mrf.mxu0
    %v437 = vadd.f32 0.0, %v436
    %v438 = vpop.f32.mrf.mxu0
    %v439 = vadd.f32 0.0, %v438
    %440 = vmatprep.mubr.bf16.mxu0 0
    %441 = vmatmul.mubr.bf16.gmra.mxu0 %v336
    %v442 = vpop.f32.mrf.mxu0
    %v443 = vadd.f32 0.0, %v442
    %v444 = vpop.f32.mrf.mxu0
    %v445 = vadd.f32 0.0, %v444
    %v446 = vpop.f32.mrf.mxu0
    %v447 = vadd.f32 0.0, %v446
    %v448 = vpop.f32.mrf.mxu0
    %v449 = vadd.f32 0.0, %v448
    %450 = vmatprep.mubr.bf16.mxu0 0
    %451 = vmatmul.mubr.bf16.gmra.mxu0 %v339
    %v452 = vpop.f32.mrf.mxu0
    %v453 = vadd.f32 0.0, %v452
    %v454 = vpop.f32.mrf.mxu0
    %v455 = vadd.f32 0.0, %v454
    %v456 = vpop.f32.mrf.mxu0
    %v457 = vadd.f32 0.0, %v456
    %v458 = vpop.f32.mrf.mxu0
    %v459 = vadd.f32 0.0, %v458
    %460 = vmatprep.mubr.bf16.mxu0 0
    %461 = vmatmul.mubr.bf16.gmra.mxu0 %v342
    %v462 = vpop.f32.mrf.mxu0
    %v463 = vadd.f32 0.0, %v462
    %v464 = vpop.f32.mrf.mxu0
    %v465 = vadd.f32 0.0, %v464
    %v466 = vpop.f32.mrf.mxu0
    %v467 = vadd.f32 0.0, %v466
    %v468 = vpop.f32.mrf.mxu0
    %v469 = vadd.f32 0.0, %v468
    %470 = vmatprep.mubr.bf16.mxu0 0
    %471 = vmatmul.mubr.bf16.gmra.mxu0 %v345
    %v472 = vpop.f32.mrf.mxu0
    %v473 = vadd.f32 0.0, %v472
    %v474 = vpop.f32.mrf.mxu0
    %v475 = vadd.f32 0.0, %v474
    %v476 = vpop.f32.mrf.mxu0
    %v477 = vadd.f32 0.0, %v476
    %v478 = vpop.f32.mrf.mxu0
    %v479 = vadd.f32 0.0, %v478
    %480 = vmatprep.mubr.bf16.mxu0 0
    %481 = vmatmul.mubr.bf16.gmra.mxu0 %v348
    %v482 = vpop.f32.mrf.mxu0
    %v483 = vadd.f32 0.0, %v482
    %v484 = vpop.f32.mrf.mxu0
    %v485 = vadd.f32 0.0, %v484
    %v486 = vpop.f32.mrf.mxu0
    %v487 = vadd.f32 0.0, %v486
    %v488 = vpop.f32.mrf.mxu0
    %v489 = vadd.f32 0.0, %v488
    %490 = vmatprep.mubr.bf16.mxu0 0
    %491 = vmatmul.mubr.bf16.gmra.mxu0 %v351
    %v492 = vpop.f32.mrf.mxu0
    %v493 = vadd.f32 0.0, %v492
    %v494 = vpop.f32.mrf.mxu0
    %v495 = vadd.f32 0.0, %v494
    %v496 = vpop.f32.mrf.mxu0
    %v497 = vadd.f32 0.0, %v496
    %v498 = vpop.f32.mrf.mxu0
    %v499 = vadd.f32 0.0, %v498
    %500 = vmatprep.mubr.bf16.mxu0 0
    %501 = vmatmul.mubr.bf16.gmra.mxu0 %v354
    %v502 = vpop.f32.mrf.mxu0
    %v503 = vadd.f32 0.0, %v502
    %v504 = vpop.f32.mrf.mxu0
    %v505 = vadd.f32 0.0, %v504
    %v506 = vpop.f32.mrf.mxu0
    %v507 = vadd.f32 0.0, %v506
    %v508 = vpop.f32.mrf.mxu0
    %v509 = vadd.f32 0.0, %v508
    %510 = vmatprep.mubr.bf16.mxu0 0
    %511 = vmatmul.mubr.bf16.gmra.mxu0 %v357
    %v512 = vpop.f32.mrf.mxu0
    %v513 = vadd.f32 0.0, %v512
    %v514 = vpop.f32.mrf.mxu0
    %v515 = vadd.f32 0.0, %v514
    %v516 = vpop.f32.mrf.mxu0
    %v517 = vadd.f32 0.0, %v516
    %v518 = vpop.f32.mrf.mxu0
    %v519 = vadd.f32 0.0, %v518
    %520 = vmatprep.mubr.bf16.mxu0 0
    %521 = vmatmul.mubr.bf16.gmra.mxu0 %v360
    %v522 = vpop.f32.mrf.mxu0
    %v523 = vadd.f32 0.0, %v522
    %v524 = vpop.f32.mrf.mxu0
    %v525 = vadd.f32 0.0, %v524
    %v526 = vpop.f32.mrf.mxu0
    %v527 = vadd.f32 0.0, %v526
    %v528 = vpop.f32.mrf.mxu0
    %v529 = vadd.f32 0.0, %v528
    %530 = vmatprep.mubr.bf16.mxu0 0
    %531 = vmatmul.mubr.bf16.gmra.mxu0 %v363
    %v532 = vpop.f32.mrf.mxu0
    %v533 = vadd.f32 0.0, %v532
    %v534 = vpop.f32.mrf.mxu0
    %v535 = vadd.f32 0.0, %v534
    %v536 = vpop.f32.mrf.mxu0
    %v537 = vadd.f32 0.0, %v536
    %v538 = vpop.f32.mrf.mxu0
    %v539 = vadd.f32 0.0, %v538
    %540 = vmatprep.mubr.bf16.mxu0 0
    %541 = vmatmul.mubr.bf16.gmra.mxu0 %v366
    %v542 = vpop.f32.mrf.mxu0
    %v543 = vadd.f32 0.0, %v542
    %v544 = vpop.f32.mrf.mxu0
    %v545 = vadd.f32 0.0, %v544
    %v546 = vpop.f32.mrf.mxu0
    %v547 = vadd.f32 0.0, %v546
    %v548 = vpop.f32.mrf.mxu0
    %v549 = vadd.f32 0.0, %v548
    %550 = vdwg.mxu0
    %551 = vmatprep.subr.bf16.mxu0 0
    %552 = vmatpush1.bf16.msra.mxu0 0
    %553 = vmatprep.subr.bf16.mxu0 0
    %554 = vmatpush1.bf16.msra.mxu0 0
    %555 = vmatprep.subr.bf16.mxu0 %v297
    %556 = vmatpush1.bf16.msra.mxu0 %v296
    %557 = vmatprep.subr.bf16.mxu0 %v293
    %558 = vmatpush1.bf16.msra.mxu0 %v292
    %559 = vmatprep.subr.bf16.mxu0 %v289
    %560 = vmatpush1.bf16.msra.mxu0 %v288
    %561 = vmatprep.subr.bf16.mxu0 %v285
    %562 = vmatpush1.bf16.msra.mxu0 %v284
    %563 = vmatprep.subr.bf16.mxu0 %v281
    %564 = vmatpush1.bf16.msra.mxu0 %v280
    %565 = vmatprep.subr.bf16.mxu0 %v277
    %566 = vmatpush1.bf16.msra.mxu0 %v276
    %567 = vmatprep.subr.bf16.mxu0 0
    %568 = vmatpush2.bf16.msra.mxu0 0
    %569 = vmatprep.subr.bf16.mxu0 0
    %570 = vmatpush2.bf16.msra.mxu0 0
    %571 = vmatprep.subr.bf16.mxu0 0
    %572 = vmatpush2.bf16.msra.mxu0 0
    %573 = vmatprep.subr.bf16.mxu0 0
    %574 = vmatpush2.bf16.msra.mxu0 0
    %575 = vmatprep.subr.bf16.mxu0 0
    %576 = vmatpush2.bf16.msra.mxu0 0
    %577 = vmatprep.subr.bf16.mxu0 0
    %578 = vmatpush2.bf16.msra.mxu0 0
    %579 = vmatprep.subr.bf16.mxu0 0
    %580 = vmatpush2.bf16.msra.mxu0 0
    %581 = vmatprep.subr.bf16.mxu0 0
    %582 = vmatpush2.bf16.msra.mxu0 0
    %583 = vmatprep.mubr.bf16.mxu0 0
    %584 = vmatmul.mubr.bf16.gmra.mxu0 %v324
    %v585 = vpop.f32.mrf.mxu0
    %v586 = vadd.f32 0.0, %v585
    %v587 = vpop.f32.mrf.mxu0
    %v588 = vadd.f32 0.0, %v587
    %v589 = vpop.f32.mrf.mxu0
    %v590 = vadd.f32 0.0, %v589
    %v591 = vpop.f32.mrf.mxu0
    %v592 = vadd.f32 0.0, %v591
    %593 = vmatprep.mubr.bf16.mxu0 0
    %594 = vmatmul.mubr.bf16.gmra.mxu0 %v327
    %v595 = vpop.f32.mrf.mxu0
    %v596 = vadd.f32 0.0, %v595
    %v597 = vpop.f32.mrf.mxu0
    %v598 = vadd.f32 0.0, %v597
    %v599 = vpop.f32.mrf.mxu0
    %v600 = vadd.f32 0.0, %v599
    %v601 = vpop.f32.mrf.mxu0
    %v602 = vadd.f32 0.0, %v601
    %603 = vmatprep.mubr.bf16.mxu0 0
    %604 = vmatmul.mubr.bf16.gmra.mxu0 %v330
    %v605 = vpop.f32.mrf.mxu0
    %v606 = vadd.f32 0.0, %v605
    %v607 = vpop.f32.mrf.mxu0
    %v608 = vadd.f32 0.0, %v607
    %v609 = vpop.f32.mrf.mxu0
    %v610 = vadd.f32 0.0, %v609
    %v611 = vpop.f32.mrf.mxu0
    %v612 = vadd.f32 0.0, %v611
    %613 = vmatprep.mubr.bf16.mxu0 0
    %614 = vmatmul.mubr.bf16.gmra.mxu0 %v333
    %v615 = vpop.f32.mrf.mxu0
    %v616 = vadd.f32 0.0, %v615
    %v617 = vpop.f32.mrf.mxu0
    %v618 = vadd.f32 0.0, %v617
    %v619 = vpop.f32.mrf.mxu0
    %v620 = vadd.f32 0.0, %v619
    %v621 = vpop.f32.mrf.mxu0
    %v622 = vadd.f32 0.0, %v621
    %623 = vmatprep.mubr.bf16.mxu0 0
    %624 = vmatmul.mubr.bf16.gmra.mxu0 %v336
    %v625 = vpop.f32.mrf.mxu0
    %v626 = vadd.f32 0.0, %v625
    %v627 = vpop.f32.mrf.mxu0
    %v628 = vadd.f32 0.0, %v627
    %v629 = vpop.f32.mrf.mxu0
    %v630 = vadd.f32 0.0, %v629
    %v631 = vpop.f32.mrf.mxu0
    %v632 = vadd.f32 0.0, %v631
    %633 = vmatprep.mubr.bf16.mxu0 0
    %634 = vmatmul.mubr.bf16.gmra.mxu0 %v339
    %v635 = vpop.f32.mrf.mxu0
    %v636 = vadd.f32 0.0, %v635
    %v637 = vpop.f32.mrf.mxu0
    %v638 = vadd.f32 0.0, %v637
    %v639 = vpop.f32.mrf.mxu0
    %v640 = vadd.f32 0.0, %v639
    %v641 = vpop.f32.mrf.mxu0
    %v642 = vadd.f32 0.0, %v641
    %643 = vmatprep.mubr.bf16.mxu0 0
    %644 = vmatmul.mubr.bf16.gmra.mxu0 %v342
    %v645 = vpop.f32.mrf.mxu0
    %v646 = vadd.f32 0.0, %v645
    %v647 = vpop.f32.mrf.mxu0
    %v648 = vadd.f32 0.0, %v647
    %v649 = vpop.f32.mrf.mxu0
    %v650 = vadd.f32 0.0, %v649
    %v651 = vpop.f32.mrf.mxu0
    %v652 = vadd.f32 0.0, %v651
    %653 = vmatprep.mubr.bf16.mxu0 0
    %654 = vmatmul.mubr.bf16.gmra.mxu0 %v345
    %v655 = vpop.f32.mrf.mxu0
    %v656 = vadd.f32 0.0, %v655
    %v657 = vpop.f32.mrf.mxu0
    %v658 = vadd.f32 0.0, %v657
    %v659 = vpop.f32.mrf.mxu0
    %v660 = vadd.f32 0.0, %v659
    %v661 = vpop.f32.mrf.mxu0
    %v662 = vadd.f32 0.0, %v661
    %663 = vmatprep.mubr.bf16.mxu0 0
    %664 = vmatmul.mubr.bf16.gmra.mxu0 %v348
    %v665 = vpop.f32.mrf.mxu0
    %v666 = vadd.f32 0.0, %v665
    %v667 = vpop.f32.mrf.mxu0
    %v668 = vadd.f32 0.0, %v667
    %v669 = vpop.f32.mrf.mxu0
    %v670 = vadd.f32 0.0, %v669
    %v671 = vpop.f32.mrf.mxu0
    %v672 = vadd.f32 0.0, %v671
    %673 = vmatprep.mubr.bf16.mxu0 0
    %674 = vmatmul.mubr.bf16.gmra.mxu0 %v351
    %v675 = vpop.f32.mrf.mxu0
    %v676 = vadd.f32 0.0, %v675
    %v677 = vpop.f32.mrf.mxu0
    %v678 = vadd.f32 0.0, %v677
    %v679 = vpop.f32.mrf.mxu0
    %v680 = vadd.f32 0.0, %v679
    %v681 = vpop.f32.mrf.mxu0
    %v682 = vadd.f32 0.0, %v681
    %683 = vmatprep.mubr.bf16.mxu0 0
    %684 = vmatmul.mubr.bf16.gmra.mxu0 %v354
    %v685 = vpop.f32.mrf.mxu0
    %v686 = vadd.f32 0.0, %v685
    %v687 = vpop.f32.mrf.mxu0
    %v688 = vadd.f32 0.0, %v687
    %v689 = vpop.f32.mrf.mxu0
    %v690 = vadd.f32 0.0, %v689
    %v691 = vpop.f32.mrf.mxu0
    %v692 = vadd.f32 0.0, %v691
    %693 = vmatprep.mubr.bf16.mxu0 0
    %694 = vmatmul.mubr.bf16.gmra.mxu0 %v357
    %v695 = vpop.f32.mrf.mxu0
    %v696 = vadd.f32 0.0, %v695
    %v697 = vpop.f32.mrf.mxu0
    %v698 = vadd.f32 0.0, %v697
    %v699 = vpop.f32.mrf.mxu0
    %v700 = vadd.f32 0.0, %v699
    %v701 = vpop.f32.mrf.mxu0
    %v702 = vadd.f32 0.0, %v701
    %703 = vmatprep.mubr.bf16.mxu0 0
    %704 = vmatmul.mubr.bf16.gmra.mxu0 %v360
    %v705 = vpop.f32.mrf.mxu0
    %v706 = vadd.f32 0.0, %v705
    %v707 = vpop.f32.mrf.mxu0
    %v708 = vadd.f32 0.0, %v707
    %v709 = vpop.f32.mrf.mxu0
    %v710 = vadd.f32 0.0, %v709
    %v711 = vpop.f32.mrf.mxu0
    %v712 = vadd.f32 0.0, %v711
    %713 = vmatprep.mubr.bf16.mxu0 0
    %714 = vmatmul.mubr.bf16.gmra.mxu0 %v363
    %v715 = vpop.f32.mrf.mxu0
    %v716 = vadd.f32 0.0, %v715
    %v717 = vpop.f32.mrf.mxu0
    %v718 = vadd.f32 0.0, %v717
    %v719 = vpop.f32.mrf.mxu0
    %v720 = vadd.f32 0.0, %v719
    %v721 = vpop.f32.mrf.mxu0
    %v722 = vadd.f32 0.0, %v721
    %723 = vmatprep.mubr.bf16.mxu0 0
    %724 = vmatmul.mubr.bf16.gmra.mxu0 %v366
    %v725 = vpop.f32.mrf.mxu0
    %v726 = vadd.f32 0.0, %v725
    %v727 = vpop.f32.mrf.mxu0
    %v728 = vadd.f32 0.0, %v727
    %v729 = vpop.f32.mrf.mxu0
    %v730 = vadd.f32 0.0, %v729
    %v731 = vpop.f32.mrf.mxu0
    %v732 = vadd.f32 0.0, %v731
    %733 = vdwg.mxu0
    %v758 = vunpack.c.l.b16 %v138
    %v759 = vunpack.c.h.b16 %v138
    %v760 = vunpack.c.l.b16 %v139
    %v761 = vunpack.c.h.b16 %v139
    %v762 = vunpack.c.l.b16 %v140
    %v763 = vunpack.c.h.b16 %v140
    %v764 = vunpack.c.l.b16 %v141
    %v765 = vunpack.c.h.b16 %v141
    %v766 = vunpack.c.l.b16 %v142
    %v767 = vunpack.c.h.b16 %v142
    %v768 = vunpack.c.l.b16 %v143
    %v769 = vunpack.c.h.b16 %v143
    %v770 = vunpack.c.l.b16 %v144
    %v771 = vunpack.c.h.b16 %v144
    %v772 = vunpack.c.l.b16 %v145
    %v773 = vunpack.c.h.b16 %v145
    %v774 = vunpack.c.l.b16 %v146
    %v775 = vunpack.c.h.b16 %v146
    %v776 = vunpack.c.l.b16 %v147
    %v777 = vunpack.c.h.b16 %v147
    %v778 = vunpack.c.l.b16 %v148
    %v779 = vunpack.c.h.b16 %v148
    %v780 = vunpack.c.l.b16 %v149
    %v781 = vunpack.c.h.b16 %v149
    %v782 = vunpack.c.l.b16 %v150
    %v783 = vunpack.c.h.b16 %v150
    %v784 = vunpack.c.l.b16 %v151
    %v785 = vunpack.c.h.b16 %v151
    %v786 = vunpack.c.l.b16 %v152
    %v787 = vunpack.c.h.b16 %v152
    %v788 = vunpack.c.l.b16 %v153
    %v789 = vunpack.c.h.b16 %v153
    %v790 = vunpack.c.l.b16 %v154
    %v791 = vunpack.c.h.b16 %v154
    %v792 = vunpack.c.l.b16 %v155
    %v793 = vunpack.c.h.b16 %v155
    %v794 = vunpack.c.l.b16 %v156
    %v795 = vunpack.c.h.b16 %v156
    %v796 = vunpack.c.l.b16 %v157
    %v797 = vunpack.c.h.b16 %v157
    %v798 = vunpack.c.l.b16 %v158
    %v799 = vunpack.c.h.b16 %v158
    %v800 = vunpack.c.l.b16 %v159
    %v801 = vunpack.c.h.b16 %v159
    %v802 = vunpack.c.l.b16 %v160
    %v803 = vunpack.c.h.b16 %v160
    %v804 = vunpack.c.l.b16 %v161
    %v805 = vunpack.c.h.b16 %v161
    %v806 = vpack.c.b16 %v762, %v758
    %v807 = vpack.c.b16 %v763, %v759
    %v808 = vpack.c.b16 %v764, %v760
    %v809 = vpack.c.b16 %v765, %v761
    %v810 = vpack.c.b16 %v770, %v766
    %v811 = vpack.c.b16 %v771, %v767
    %v812 = vpack.c.b16 %v772, %v768
    %v813 = vpack.c.b16 %v773, %v769
    %v814 = vpack.c.b16 %v778, %v774
    %v815 = vpack.c.b16 %v779, %v775
    %v816 = vpack.c.b16 %v780, %v776
    %v817 = vpack.c.b16 %v781, %v777
    %v818 = vpack.c.b16 %v786, %v782
    %v819 = vpack.c.b16 %v787, %v783
    %v820 = vpack.c.b16 %v788, %v784
    %v821 = vpack.c.b16 %v789, %v785
    %v822 = vpack.c.b16 %v794, %v790
    %v823 = vpack.c.b16 %v795, %v791
    %v824 = vpack.c.b16 %v796, %v792
    %v825 = vpack.c.b16 %v797, %v793
    %v826 = vpack.c.b16 %v802, %v798
    %v827 = vpack.c.b16 %v803, %v799
    %v828 = vpack.c.b16 %v804, %v800
    %v829 = vpack.c.b16 %v805, %v801
    %v855 = vsel %vm322, %v123, 0
    %v858 = vsel %vm322, %v124, 0
    %v861 = vsel %vm322, %v125, 0
    %v864 = vsel %vm322, %v126, 0
    %v867 = vsel %vm322, %v127, 0
    %v870 = vsel %vm322, %v128, 0
    %v873 = vsel %vm322, %v129, 0
    %v876 = vsel %vm322, %v130, 0
    %v879 = vsel %vm322, %v131, 0
    %v882 = vsel %vm322, %v132, 0
    %v885 = vsel %vm322, %v133, 0
    %v888 = vsel %vm322, %v134, 0
    %v891 = vsel %vm322, %v135, 0
    %v894 = vsel %vm322, %v136, 0
    %v897 = vsel %vm322, %v137, 0
    %899 = vmatprep.subr.bf16.mxu0 0
    %900 = vmatpush1.bf16.msra.mxu0 0
    %901 = vmatprep.subr.bf16.mxu0 0
    %902 = vmatpush1.bf16.msra.mxu0 0
    %903 = vmatprep.subr.bf16.mxu0 %v827
    %904 = vmatpush1.bf16.msra.mxu0 %v826
    %905 = vmatprep.subr.bf16.mxu0 %v823
    %906 = vmatpush1.bf16.msra.mxu0 %v822
    %907 = vmatprep.subr.bf16.mxu0 %v819
    %908 = vmatpush1.bf16.msra.mxu0 %v818
    %909 = vmatprep.subr.bf16.mxu0 %v815
    %910 = vmatpush1.bf16.msra.mxu0 %v814
    %911 = vmatprep.subr.bf16.mxu0 %v811
    %912 = vmatpush1.bf16.msra.mxu0 %v810
    %913 = vmatprep.subr.bf16.mxu0 %v807
    %914 = vmatpush1.bf16.msra.mxu0 %v806
    %915 = vmatprep.subr.bf16.mxu0 0
    %916 = vmatpush2.bf16.msra.mxu0 0
    %917 = vmatprep.subr.bf16.mxu0 0
    %918 = vmatpush2.bf16.msra.mxu0 0
    %919 = vmatprep.subr.bf16.mxu0 0
    %920 = vmatpush2.bf16.msra.mxu0 0
    %921 = vmatprep.subr.bf16.mxu0 0
    %922 = vmatpush2.bf16.msra.mxu0 0
    %923 = vmatprep.subr.bf16.mxu0 0
    %924 = vmatpush2.bf16.msra.mxu0 0
    %925 = vmatprep.subr.bf16.mxu0 0
    %926 = vmatpush2.bf16.msra.mxu0 0
    %927 = vmatprep.subr.bf16.mxu0 0
    %928 = vmatpush2.bf16.msra.mxu0 0
    %929 = vmatprep.subr.bf16.mxu0 0
    %930 = vmatpush2.bf16.msra.mxu0 0
    %931 = vmatprep.mubr.bf16.mxu0 0
    %932 = vmatmul.mubr.bf16.gmra.mxu0 %v855
    %v933 = vpop.f32.mrf.mxu0
    %v934 = vadd.f32 %v403, %v933
    %v935 = vpop.f32.mrf.mxu0
    %v936 = vadd.f32 %v405, %v935
    %v937 = vpop.f32.mrf.mxu0
    %v938 = vadd.f32 %v407, %v937
    %v939 = vpop.f32.mrf.mxu0
    %v940 = vadd.f32 %v409, %v939
    %941 = vmatprep.mubr.bf16.mxu0 0
    %942 = vmatmul.mubr.bf16.gmra.mxu0 %v858
    %v943 = vpop.f32.mrf.mxu0
    %v944 = vadd.f32 %v413, %v943
    %v945 = vpop.f32.mrf.mxu0
    %v946 = vadd.f32 %v415, %v945
    %v947 = vpop.f32.mrf.mxu0
    %v948 = vadd.f32 %v417, %v947
    %v949 = vpop.f32.mrf.mxu0
    %v950 = vadd.f32 %v419, %v949
    %951 = vmatprep.mubr.bf16.mxu0 0
    %952 = vmatmul.mubr.bf16.gmra.mxu0 %v861
    %v953 = vpop.f32.mrf.mxu0
    %v954 = vadd.f32 %v423, %v953
    %v955 = vpop.f32.mrf.mxu0
    %v956 = vadd.f32 %v425, %v955
    %v957 = vpop.f32.mrf.mxu0
    %v958 = vadd.f32 %v427, %v957
    %v959 = vpop.f32.mrf.mxu0
    %v960 = vadd.f32 %v429, %v959
    %961 = vmatprep.mubr.bf16.mxu0 0
    %962 = vmatmul.mubr.bf16.gmra.mxu0 %v864
    %v963 = vpop.f32.mrf.mxu0
    %v964 = vadd.f32 %v433, %v963
    %v965 = vpop.f32.mrf.mxu0
    %v966 = vadd.f32 %v435, %v965
    %v967 = vpop.f32.mrf.mxu0
    %v968 = vadd.f32 %v437, %v967
    %v969 = vpop.f32.mrf.mxu0
    %v970 = vadd.f32 %v439, %v969
    %971 = vmatprep.mubr.bf16.mxu0 0
    %972 = vmatmul.mubr.bf16.gmra.mxu0 %v867
    %v973 = vpop.f32.mrf.mxu0
    %v974 = vadd.f32 %v443, %v973
    %v975 = vpop.f32.mrf.mxu0
    %v976 = vadd.f32 %v445, %v975
    %v977 = vpop.f32.mrf.mxu0
    %v978 = vadd.f32 %v447, %v977
    %v979 = vpop.f32.mrf.mxu0
    %v980 = vadd.f32 %v449, %v979
    %981 = vmatprep.mubr.bf16.mxu0 0
    %982 = vmatmul.mubr.bf16.gmra.mxu0 %v870
    %v983 = vpop.f32.mrf.mxu0
    %v984 = vadd.f32 %v453, %v983
    %v985 = vpop.f32.mrf.mxu0
    %v986 = vadd.f32 %v455, %v985
    %v987 = vpop.f32.mrf.mxu0
    %v988 = vadd.f32 %v457, %v987
    %v989 = vpop.f32.mrf.mxu0
    %v990 = vadd.f32 %v459, %v989
    %991 = vmatprep.mubr.bf16.mxu0 0
    %992 = vmatmul.mubr.bf16.gmra.mxu0 %v873
    %v993 = vpop.f32.mrf.mxu0
    %v994 = vadd.f32 %v463, %v993
    %v995 = vpop.f32.mrf.mxu0
    %v996 = vadd.f32 %v465, %v995
    %v997 = vpop.f32.mrf.mxu0
    %v998 = vadd.f32 %v467, %v997
    %v999 = vpop.f32.mrf.mxu0
    %v1000 = vadd.f32 %v469, %v999
    %1001 = vmatprep.mubr.bf16.mxu0 0
    %1002 = vmatmul.mubr.bf16.gmra.mxu0 %v876
    %v1003 = vpop.f32.mrf.mxu0
    %v1004 = vadd.f32 %v473, %v1003
    %v1005 = vpop.f32.mrf.mxu0
    %v1006 = vadd.f32 %v475, %v1005
    %v1007 = vpop.f32.mrf.mxu0
    %v1008 = vadd.f32 %v477, %v1007
    %v1009 = vpop.f32.mrf.mxu0
    %v1010 = vadd.f32 %v479, %v1009
    %1011 = vmatprep.mubr.bf16.mxu0 0
    %1012 = vmatmul.mubr.bf16.gmra.mxu0 %v879
    %v1013 = vpop.f32.mrf.mxu0
    %v1014 = vadd.f32 %v483, %v1013
    %v1015 = vpop.f32.mrf.mxu0
    %v1016 = vadd.f32 %v485, %v1015
    %v1017 = vpop.f32.mrf.mxu0
    %v1018 = vadd.f32 %v487, %v1017
    %v1019 = vpop.f32.mrf.mxu0
    %v1020 = vadd.f32 %v489, %v1019
    %1021 = vmatprep.mubr.bf16.mxu0 0
    %1022 = vmatmul.mubr.bf16.gmra.mxu0 %v882
    %v1023 = vpop.f32.mrf.mxu0
    %v1024 = vadd.f32 %v493, %v1023
    %v1025 = vpop.f32.mrf.mxu0
    %v1026 = vadd.f32 %v495, %v1025
    %v1027 = vpop.f32.mrf.mxu0
    %v1028 = vadd.f32 %v497, %v1027
    %v1029 = vpop.f32.mrf.mxu0
    %v1030 = vadd.f32 %v499, %v1029
    %1031 = vmatprep.mubr.bf16.mxu0 0
    %1032 = vmatmul.mubr.bf16.gmra.mxu0 %v885
    %v1033 = vpop.f32.mrf.mxu0
    %v1034 = vadd.f32 %v503, %v1033
    %v1035 = vpop.f32.mrf.mxu0
    %v1036 = vadd.f32 %v505, %v1035
    %v1037 = vpop.f32.mrf.mxu0
    %v1038 = vadd.f32 %v507, %v1037
    %v1039 = vpop.f32.mrf.mxu0
    %v1040 = vadd.f32 %v509, %v1039
    %1041 = vmatprep.mubr.bf16.mxu0 0
    %1042 = vmatmul.mubr.bf16.gmra.mxu0 %v888
    %v1043 = vpop.f32.mrf.mxu0
    %v1044 = vadd.f32 %v513, %v1043
    %v1045 = vpop.f32.mrf.mxu0
    %v1046 = vadd.f32 %v515, %v1045
    %v1047 = vpop.f32.mrf.mxu0
    %v1048 = vadd.f32 %v517, %v1047
    %v1049 = vpop.f32.mrf.mxu0
    %v1050 = vadd.f32 %v519, %v1049
    %1051 = vmatprep.mubr.bf16.mxu0 0
    %1052 = vmatmul.mubr.bf16.gmra.mxu0 %v891
    %v1053 = vpop.f32.mrf.mxu0
    %v1054 = vadd.f32 %v523, %v1053
    %v1055 = vpop.f32.mrf.mxu0
    %v1056 = vadd.f32 %v525, %v1055
    %v1057 = vpop.f32.mrf.mxu0
    %v1058 = vadd.f32 %v527, %v1057
    %v1059 = vpop.f32.mrf.mxu0
    %v1060 = vadd.f32 %v529, %v1059
    %1061 = vmatprep.mubr.bf16.mxu0 0
    %1062 = vmatmul.mubr.bf16.gmra.mxu0 %v894
    %v1063 = vpop.f32.mrf.mxu0
    %v1064 = vadd.f32 %v533, %v1063
    %v1065 = vpop.f32.mrf.mxu0
    %v1066 = vadd.f32 %v535, %v1065
    %v1067 = vpop.f32.mrf.mxu0
    %v1068 = vadd.f32 %v537, %v1067
    %v1069 = vpop.f32.mrf.mxu0
    %v1070 = vadd.f32 %v539, %v1069
    %1071 = vmatprep.mubr.bf16.mxu0 0
    %1072 = vmatmul.mubr.bf16.gmra.mxu0 %v897
    %v1073 = vpop.f32.mrf.mxu0
    %v1074 = vadd.f32 %v543, %v1073
    %v1075 = vpop.f32.mrf.mxu0
    %v1076 = vadd.f32 %v545, %v1075
    %v1077 = vpop.f32.mrf.mxu0
    %v1078 = vadd.f32 %v547, %v1077
    %v1079 = vpop.f32.mrf.mxu0
    %v1080 = vadd.f32 %v549, %v1079
    %1081 = vdwg.mxu0
    %1082 = vmatprep.subr.bf16.mxu0 0
    %1083 = vmatpush1.bf16.msra.mxu0 0
    %1084 = vmatprep.subr.bf16.mxu0 0
    %1085 = vmatpush1.bf16.msra.mxu0 0
    %1086 = vmatprep.subr.bf16.mxu0 %v829
    %1087 = vmatpush1.bf16.msra.mxu0 %v828
    %1088 = vmatprep.subr.bf16.mxu0 %v825
    %1089 = vmatpush1.bf16.msra.mxu0 %v824
    %1090 = vmatprep.subr.bf16.mxu0 %v821
    %1091 = vmatpush1.bf16.msra.mxu0 %v820
    %1092 = vmatprep.subr.bf16.mxu0 %v817
    %1093 = vmatpush1.bf16.msra.mxu0 %v816
    %1094 = vmatprep.subr.bf16.mxu0 %v813
    %1095 = vmatpush1.bf16.msra.mxu0 %v812
    %1096 = vmatprep.subr.bf16.mxu0 %v809
    %1097 = vmatpush1.bf16.msra.mxu0 %v808
    %1098 = vmatprep.subr.bf16.mxu0 0
    %1099 = vmatpush2.bf16.msra.mxu0 0
    %1100 = vmatprep.subr.bf16.mxu0 0
    %1101 = vmatpush2.bf16.msra.mxu0 0
    %1102 = vmatprep.subr.bf16.mxu0 0
    %1103 = vmatpush2.bf16.msra.mxu0 0
    %1104 = vmatprep.subr.bf16.mxu0 0
    %1105 = vmatpush2.bf16.msra.mxu0 0
    %1106 = vmatprep.subr.bf16.mxu0 0
    %1107 = vmatpush2.bf16.msra.mxu0 0
    %1108 = vmatprep.subr.bf16.mxu0 0
    %1109 = vmatpush2.bf16.msra.mxu0 0
    %1110 = vmatprep.subr.bf16.mxu0 0
    %1111 = vmatpush2.bf16.msra.mxu0 0
    %1112 = vmatprep.subr.bf16.mxu0 0
    %1113 = vmatpush2.bf16.msra.mxu0 0
    %1114 = vmatprep.mubr.bf16.mxu0 0
    %1115 = vmatmul.mubr.bf16.gmra.mxu0 %v855
    %v1116 = vpop.f32.mrf.mxu0
    %v1117 = vadd.f32 %v586, %v1116
    %v1118 = vpop.f32.mrf.mxu0
    %v1119 = vadd.f32 %v588, %v1118
    %v1120 = vpop.f32.mrf.mxu0
    %v1121 = vadd.f32 %v590, %v1120
    %v1122 = vpop.f32.mrf.mxu0
    %v1123 = vadd.f32 %v592, %v1122
    %1124 = vmatprep.mubr.bf16.mxu0 0
    %1125 = vmatmul.mubr.bf16.gmra.mxu0 %v858
    %v1126 = vpop.f32.mrf.mxu0
    %v1127 = vadd.f32 %v596, %v1126
    %v1128 = vpop.f32.mrf.mxu0
    %v1129 = vadd.f32 %v598, %v1128
    %v1130 = vpop.f32.mrf.mxu0
    %v1131 = vadd.f32 %v600, %v1130
    %v1132 = vpop.f32.mrf.mxu0
    %v1133 = vadd.f32 %v602, %v1132
    %1134 = vmatprep.mubr.bf16.mxu0 0
    %1135 = vmatmul.mubr.bf16.gmra.mxu0 %v861
    %v1136 = vpop.f32.mrf.mxu0
    %v1137 = vadd.f32 %v606, %v1136
    %v1138 = vpop.f32.mrf.mxu0
    %v1139 = vadd.f32 %v608, %v1138
    %v1140 = vpop.f32.mrf.mxu0
    %v1141 = vadd.f32 %v610, %v1140
    %v1142 = vpop.f32.mrf.mxu0
    %v1143 = vadd.f32 %v612, %v1142
    %1144 = vmatprep.mubr.bf16.mxu0 0
    %1145 = vmatmul.mubr.bf16.gmra.mxu0 %v864
    %v1146 = vpop.f32.mrf.mxu0
    %v1147 = vadd.f32 %v616, %v1146
    %v1148 = vpop.f32.mrf.mxu0
    %v1149 = vadd.f32 %v618, %v1148
    %v1150 = vpop.f32.mrf.mxu0
    %v1151 = vadd.f32 %v620, %v1150
    %v1152 = vpop.f32.mrf.mxu0
    %v1153 = vadd.f32 %v622, %v1152
    %1154 = vmatprep.mubr.bf16.mxu0 0
    %1155 = vmatmul.mubr.bf16.gmra.mxu0 %v867
    %v1156 = vpop.f32.mrf.mxu0
    %v1157 = vadd.f32 %v626, %v1156
    %v1158 = vpop.f32.mrf.mxu0
    %v1159 = vadd.f32 %v628, %v1158
    %v1160 = vpop.f32.mrf.mxu0
    %v1161 = vadd.f32 %v630, %v1160
    %v1162 = vpop.f32.mrf.mxu0
    %v1163 = vadd.f32 %v632, %v1162
    %1164 = vmatprep.mubr.bf16.mxu0 0
    %1165 = vmatmul.mubr.bf16.gmra.mxu0 %v870
    %v1166 = vpop.f32.mrf.mxu0
    %v1167 = vadd.f32 %v636, %v1166
    %v1168 = vpop.f32.mrf.mxu0
    %v1169 = vadd.f32 %v638, %v1168
    %v1170 = vpop.f32.mrf.mxu0
    %v1171 = vadd.f32 %v640, %v1170
    %v1172 = vpop.f32.mrf.mxu0
    %v1173 = vadd.f32 %v642, %v1172
    %1174 = vmatprep.mubr.bf16.mxu0 0
    %1175 = vmatmul.mubr.bf16.gmra.mxu0 %v873
    %v1176 = vpop.f32.mrf.mxu0
    %v1177 = vadd.f32 %v646, %v1176
    %v1178 = vpop.f32.mrf.mxu0
    %v1179 = vadd.f32 %v648, %v1178
    %v1180 = vpop.f32.mrf.mxu0
    %v1181 = vadd.f32 %v650, %v1180
    %v1182 = vpop.f32.mrf.mxu0
    %v1183 = vadd.f32 %v652, %v1182
    %1184 = vmatprep.mubr.bf16.mxu0 0
    %1185 = vmatmul.mubr.bf16.gmra.mxu0 %v876
    %v1186 = vpop.f32.mrf.mxu0
    %v1187 = vadd.f32 %v656, %v1186
    %v1188 = vpop.f32.mrf.mxu0
    %v1189 = vadd.f32 %v658, %v1188
    %v1190 = vpop.f32.mrf.mxu0
    %v1191 = vadd.f32 %v660, %v1190
    %v1192 = vpop.f32.mrf.mxu0
    %v1193 = vadd.f32 %v662, %v1192
    %1194 = vmatprep.mubr.bf16.mxu0 0
    %1195 = vmatmul.mubr.bf16.gmra.mxu0 %v879
    %v1196 = vpop.f32.mrf.mxu0
    %v1197 = vadd.f32 %v666, %v1196
    %v1198 = vpop.f32.mrf.mxu0
    %v1199 = vadd.f32 %v668, %v1198
    %v1200 = vpop.f32.mrf.mxu0
    %v1201 = vadd.f32 %v670, %v1200
    %v1202 = vpop.f32.mrf.mxu0
    %v1203 = vadd.f32 %v672, %v1202
    %1204 = vmatprep.mubr.bf16.mxu0 0
    %1205 = vmatmul.mubr.bf16.gmra.mxu0 %v882
    %v1206 = vpop.f32.mrf.mxu0
    %v1207 = vadd.f32 %v676, %v1206
    %v1208 = vpop.f32.mrf.mxu0
    %v1209 = vadd.f32 %v678, %v1208
    %v1210 = vpop.f32.mrf.mxu0
    %v1211 = vadd.f32 %v680, %v1210
    %v1212 = vpop.f32.mrf.mxu0
    %v1213 = vadd.f32 %v682, %v1212
    %1214 = vmatprep.mubr.bf16.mxu0 0
    %1215 = vmatmul.mubr.bf16.gmra.mxu0 %v885
    %v1216 = vpop.f32.mrf.mxu0
    %v1217 = vadd.f32 %v686, %v1216
    %v1218 = vpop.f32.mrf.mxu0
    %v1219 = vadd.f32 %v688, %v1218
    %v1220 = vpop.f32.mrf.mxu0
    %v1221 = vadd.f32 %v690, %v1220
    %v1222 = vpop.f32.mrf.mxu0
    %v1223 = vadd.f32 %v692, %v1222
    %1224 = vmatprep.mubr.bf16.mxu0 0
    %1225 = vmatmul.mubr.bf16.gmra.mxu0 %v888
    %v1226 = vpop.f32.mrf.mxu0
    %v1227 = vadd.f32 %v696, %v1226
    %v1228 = vpop.f32.mrf.mxu0
    %v1229 = vadd.f32 %v698, %v1228
    %v1230 = vpop.f32.mrf.mxu0
    %v1231 = vadd.f32 %v700, %v1230
    %v1232 = vpop.f32.mrf.mxu0
    %v1233 = vadd.f32 %v702, %v1232
    %1234 = vmatprep.mubr.bf16.mxu0 0
    %1235 = vmatmul.mubr.bf16.gmra.mxu0 %v891
    %v1236 = vpop.f32.mrf.mxu0
    %v1237 = vadd.f32 %v706, %v1236
    %v1238 = vpop.f32.mrf.mxu0
    %v1239 = vadd.f32 %v708, %v1238
    %v1240 = vpop.f32.mrf.mxu0
    %v1241 = vadd.f32 %v710, %v1240
    %v1242 = vpop.f32.mrf.mxu0
    %v1243 = vadd.f32 %v712, %v1242
    %1244 = vmatprep.mubr.bf16.mxu0 0
    %1245 = vmatmul.mubr.bf16.gmra.mxu0 %v894
    %v1246 = vpop.f32.mrf.mxu0
    %v1247 = vadd.f32 %v716, %v1246
    %v1248 = vpop.f32.mrf.mxu0
    %v1249 = vadd.f32 %v718, %v1248
    %v1250 = vpop.f32.mrf.mxu0
    %v1251 = vadd.f32 %v720, %v1250
    %v1252 = vpop.f32.mrf.mxu0
    %v1253 = vadd.f32 %v722, %v1252
    %1254 = vmatprep.mubr.bf16.mxu0 0
    %1255 = vmatmul.mubr.bf16.gmra.mxu0 %v897
    %v1256 = vpop.f32.mrf.mxu0
    %v1257 = vadd.f32 %v726, %v1256
    %v1258 = vpop.f32.mrf.mxu0
    %v1259 = vadd.f32 %v728, %v1258
    %v1260 = vpop.f32.mrf.mxu0
    %v1261 = vadd.f32 %v730, %v1260
    %v1262 = vpop.f32.mrf.mxu0
    %v1263 = vadd.f32 %v732, %v1262
    %1264 = vdwg.mxu0
    %v1265 = vpack.c.bf16 %v122, %v121
    %s1266 = scalar_lea.vmem [#allocation2], 384
    %v1267 = vld [vmem:[%s1266] sm:$0xff]
    %v1268 = vld [vmem:[%s1266 + $0x8] sm:$0xff]
    %v1269 = vld [vmem:[%s1266 + $0x10] sm:$0xff]
    %v1270 = vld [vmem:[%s1266 + $0x18] sm:$0xff]
    %v1271 = vld [vmem:[%s1266 + $0x20] sm:$0xff]
    %v1272 = vld [vmem:[%s1266 + $0x28] sm:$0xff]
    %v1273 = vld [vmem:[%s1266 + $0x30] sm:$0xff]
    %v1274 = vld [vmem:[%s1266 + $0x38] sm:$0xff]
    %v1275 = vld [vmem:[%s1266 + $0x40] sm:$0xff]
    %v1276 = vld [vmem:[%s1266 + $0x48] sm:$0xff]
    %v1277 = vld [vmem:[%s1266 + $0x50] sm:$0xff]
    %v1278 = vld [vmem:[%s1266 + $0x58] sm:$0xff]
    %v1279 = vld [vmem:[%s1266 + $0x60] sm:$0xff]
    %v1280 = vld [vmem:[%s1266 + $0x68] sm:$0xff]
    %v1281 = vld [vmem:[%s1266 + $0x70] sm:$0xff]
    %v1282 = vld [vmem:[%s1266 + $0x78] sm:$0xff]
    %v1283 = vld [vmem:[%s1266 + $0x80] sm:$0xff]
    %v1284 = vld [vmem:[%s1266 + $0x88] sm:$0xff]
    %v1285 = vld [vmem:[%s1266 + $0x90] sm:$0xff]
    %v1286 = vld [vmem:[%s1266 + $0x98] sm:$0xff]
    %v1287 = vld [vmem:[%s1266 + $0xa0] sm:$0xff]
    %v1288 = vld [vmem:[%s1266 + $0xa8] sm:$0xff]
    %v1289 = vld [vmem:[%s1266 + $0xb0] sm:$0xff]
    %v1290 = vld [vmem:[%s1266 + $0xb8] sm:$0xff]
    %v1315 = vunpack.c.l.b16 %v1267
    %v1316 = vunpack.c.h.b16 %v1267
    %v1317 = vunpack.c.l.b16 %v1268
    %v1318 = vunpack.c.h.b16 %v1268
    %v1319 = vunpack.c.l.b16 %v1269
    %v1320 = vunpack.c.h.b16 %v1269
    %v1321 = vunpack.c.l.b16 %v1270
    %v1322 = vunpack.c.h.b16 %v1270
    %v1323 = vunpack.c.l.b16 %v1271
    %v1324 = vunpack.c.h.b16 %v1271
    %v1325 = vunpack.c.l.b16 %v1272
    %v1326 = vunpack.c.h.b16 %v1272
    %v1327 = vunpack.c.l.b16 %v1273
    %v1328 = vunpack.c.h.b16 %v1273
    %v1329 = vunpack.c.l.b16 %v1274
    %v1330 = vunpack.c.h.b16 %v1274
    %v1331 = vunpack.c.l.b16 %v1275
    %v1332 = vunpack.c.h.b16 %v1275
    %v1333 = vunpack.c.l.b16 %v1276
    %v1334 = vunpack.c.h.b16 %v1276
    %v1335 = vunpack.c.l.b16 %v1277
    %v1336 = vunpack.c.h.b16 %v1277
    %v1337 = vunpack.c.l.b16 %v1278
    %v1338 = vunpack.c.h.b16 %v1278
    %v1339 = vunpack.c.l.b16 %v1279
    %v1340 = vunpack.c.h.b16 %v1279
    %v1341 = vunpack.c.l.b16 %v1280
    %v1342 = vunpack.c.h.b16 %v1280
    %v1343 = vunpack.c.l.b16 %v1281
    %v1344 = vunpack.c.h.b16 %v1281
    %v1345 = vunpack.c.l.b16 %v1282
    %v1346 = vunpack.c.h.b16 %v1282
    %v1347 = vunpack.c.l.b16 %v1283
    %v1348 = vunpack.c.h.b16 %v1283
    %v1349 = vunpack.c.l.b16 %v1284
    %v1350 = vunpack.c.h.b16 %v1284
    %v1351 = vunpack.c.l.b16 %v1285
    %v1352 = vunpack.c.h.b16 %v1285
    %v1353 = vunpack.c.l.b16 %v1286
    %v1354 = vunpack.c.h.b16 %v1286
    %v1355 = vunpack.c.l.b16 %v1287
    %v1356 = vunpack.c.h.b16 %v1287
    %v1357 = vunpack.c.l.b16 %v1288
    %v1358 = vunpack.c.h.b16 %v1288
    %v1359 = vunpack.c.l.b16 %v1289
    %v1360 = vunpack.c.h.b16 %v1289
    %v1361 = vunpack.c.l.b16 %v1290
    %v1362 = vunpack.c.h.b16 %v1290
    %v1363 = vpack.c.b16 %v1319, %v1315
    %v1364 = vpack.c.b16 %v1320, %v1316
    %v1365 = vpack.c.b16 %v1321, %v1317
    %v1366 = vpack.c.b16 %v1322, %v1318
    %v1367 = vpack.c.b16 %v1327, %v1323
    %v1368 = vpack.c.b16 %v1328, %v1324
    %v1369 = vpack.c.b16 %v1329, %v1325
    %v1370 = vpack.c.b16 %v1330, %v1326
    %v1371 = vpack.c.b16 %v1335, %v1331
    %v1372 = vpack.c.b16 %v1336, %v1332
    %v1373 = vpack.c.b16 %v1337, %v1333
    %v1374 = vpack.c.b16 %v1338, %v1334
    %v1375 = vpack.c.b16 %v1343, %v1339
    %v1376 = vpack.c.b16 %v1344, %v1340
    %v1377 = vpack.c.b16 %v1345, %v1341
    %v1378 = vpack.c.b16 %v1346, %v1342
    %v1379 = vpack.c.b16 %v1351, %v1347
    %v1380 = vpack.c.b16 %v1352, %v1348
    %v1381 = vpack.c.b16 %v1353, %v1349
    %v1382 = vpack.c.b16 %v1354, %v1350
    %v1383 = vpack.c.b16 %v1359, %v1355
    %v1384 = vpack.c.b16 %v1360, %v1356
    %v1385 = vpack.c.b16 %v1361, %v1357
    %v1386 = vpack.c.b16 %v1362, %v1358
    %v1412 = vsel %vm322, %v1265, 0
    %1414 = vmatprep.subr.bf16.mxu0 0
    %1415 = vmatpush1.bf16.msra.mxu0 0
    %1416 = vmatprep.subr.bf16.mxu0 0
    %1417 = vmatpush1.bf16.msra.mxu0 0
    %1418 = vmatprep.subr.bf16.mxu0 %v1384
    %1419 = vmatpush1.bf16.msra.mxu0 %v1383
    %1420 = vmatprep.subr.bf16.mxu0 %v1380
    %1421 = vmatpush1.bf16.msra.mxu0 %v1379
    %1422 = vmatprep.subr.bf16.mxu0 %v1376
    %1423 = vmatpush1.bf16.msra.mxu0 %v1375
    %1424 = vmatprep.subr.bf16.mxu0 %v1372
    %1425 = vmatpush1.bf16.msra.mxu0 %v1371
    %1426 = vmatprep.subr.bf16.mxu0 %v1368
    %1427 = vmatpush1.bf16.msra.mxu0 %v1367
    %1428 = vmatprep.subr.bf16.mxu0 %v1364
    %1429 = vmatpush1.bf16.msra.mxu0 %v1363
    %1430 = vmatprep.subr.bf16.mxu0 0
    %1431 = vmatpush2.bf16.msra.mxu0 0
    %1432 = vmatprep.subr.bf16.mxu0 0
    %1433 = vmatpush2.bf16.msra.mxu0 0
    %1434 = vmatprep.subr.bf16.mxu0 0
    %1435 = vmatpush2.bf16.msra.mxu0 0
    %1436 = vmatprep.subr.bf16.mxu0 0
    %1437 = vmatpush2.bf16.msra.mxu0 0
    %1438 = vmatprep.subr.bf16.mxu0 0
    %1439 = vmatpush2.bf16.msra.mxu0 0
    %1440 = vmatprep.subr.bf16.mxu0 0
    %1441 = vmatpush2.bf16.msra.mxu0 0
    %1442 = vmatprep.subr.bf16.mxu0 0
    %1443 = vmatpush2.bf16.msra.mxu0 0
    %1444 = vmatprep.subr.bf16.mxu0 0
    %1445 = vmatpush2.bf16.msra.mxu0 0
    %1446 = vmatprep.mubr.bf16.mxu0 0
    %1447 = vmatmul.mubr.bf16.gmra.mxu0 %v858
    %v1448 = vpop.f32.mrf.mxu0
    %v1449 = vadd.f32 0.0, %v1448
    %v1450 = vpop.f32.mrf.mxu0
    %v1451 = vadd.f32 0.0, %v1450
    %v1452 = vpop.f32.mrf.mxu0
    %v1453 = vadd.f32 0.0, %v1452
    %v1454 = vpop.f32.mrf.mxu0
    %v1455 = vadd.f32 0.0, %v1454
    %1456 = vmatprep.mubr.bf16.mxu0 0
    %1457 = vmatmul.mubr.bf16.gmra.mxu0 %v861
    %v1458 = vpop.f32.mrf.mxu0
    %v1459 = vadd.f32 0.0, %v1458
    %v1460 = vpop.f32.mrf.mxu0
    %v1461 = vadd.f32 0.0, %v1460
    %v1462 = vpop.f32.mrf.mxu0
    %v1463 = vadd.f32 0.0, %v1462
    %v1464 = vpop.f32.mrf.mxu0
    %v1465 = vadd.f32 0.0, %v1464
    %1466 = vmatprep.mubr.bf16.mxu0 0
    %1467 = vmatmul.mubr.bf16.gmra.mxu0 %v864
    %v1468 = vpop.f32.mrf.mxu0
    %v1469 = vadd.f32 0.0, %v1468
    %v1470 = vpop.f32.mrf.mxu0
    %v1471 = vadd.f32 0.0, %v1470
    %v1472 = vpop.f32.mrf.mxu0
    %v1473 = vadd.f32 0.0, %v1472
    %v1474 = vpop.f32.mrf.mxu0
    %v1475 = vadd.f32 0.0, %v1474
    %1476 = vmatprep.mubr.bf16.mxu0 0
    %1477 = vmatmul.mubr.bf16.gmra.mxu0 %v867
    %v1478 = vpop.f32.mrf.mxu0
    %v1479 = vadd.f32 0.0, %v1478
    %v1480 = vpop.f32.mrf.mxu0
    %v1481 = vadd.f32 0.0, %v1480
    %v1482 = vpop.f32.mrf.mxu0
    %v1483 = vadd.f32 0.0, %v1482
    %v1484 = vpop.f32.mrf.mxu0
    %v1485 = vadd.f32 0.0, %v1484
    %1486 = vmatprep.mubr.bf16.mxu0 0
    %1487 = vmatmul.mubr.bf16.gmra.mxu0 %v870
    %v1488 = vpop.f32.mrf.mxu0
    %v1489 = vadd.f32 0.0, %v1488
    %v1490 = vpop.f32.mrf.mxu0
    %v1491 = vadd.f32 0.0, %v1490
    %v1492 = vpop.f32.mrf.mxu0
    %v1493 = vadd.f32 0.0, %v1492
    %v1494 = vpop.f32.mrf.mxu0
    %v1495 = vadd.f32 0.0, %v1494
    %1496 = vmatprep.mubr.bf16.mxu0 0
    %1497 = vmatmul.mubr.bf16.gmra.mxu0 %v873
    %v1498 = vpop.f32.mrf.mxu0
    %v1499 = vadd.f32 0.0, %v1498
    %v1500 = vpop.f32.mrf.mxu0
    %v1501 = vadd.f32 0.0, %v1500
    %v1502 = vpop.f32.mrf.mxu0
    %v1503 = vadd.f32 0.0, %v1502
    %v1504 = vpop.f32.mrf.mxu0
    %v1505 = vadd.f32 0.0, %v1504
    %1506 = vmatprep.mubr.bf16.mxu0 0
    %1507 = vmatmul.mubr.bf16.gmra.mxu0 %v876
    %v1508 = vpop.f32.mrf.mxu0
    %v1509 = vadd.f32 0.0, %v1508
    %v1510 = vpop.f32.mrf.mxu0
    %v1511 = vadd.f32 0.0, %v1510
    %v1512 = vpop.f32.mrf.mxu0
    %v1513 = vadd.f32 0.0, %v1512
    %v1514 = vpop.f32.mrf.mxu0
    %v1515 = vadd.f32 0.0, %v1514
    %1516 = vmatprep.mubr.bf16.mxu0 0
    %1517 = vmatmul.mubr.bf16.gmra.mxu0 %v879
    %v1518 = vpop.f32.mrf.mxu0
    %v1519 = vadd.f32 0.0, %v1518
    %v1520 = vpop.f32.mrf.mxu0
    %v1521 = vadd.f32 0.0, %v1520
    %v1522 = vpop.f32.mrf.mxu0
    %v1523 = vadd.f32 0.0, %v1522
    %v1524 = vpop.f32.mrf.mxu0
    %v1525 = vadd.f32 0.0, %v1524
    %1526 = vmatprep.mubr.bf16.mxu0 0
    %1527 = vmatmul.mubr.bf16.gmra.mxu0 %v882
    %v1528 = vpop.f32.mrf.mxu0
    %v1529 = vadd.f32 0.0, %v1528
    %v1530 = vpop.f32.mrf.mxu0
    %v1531 = vadd.f32 0.0, %v1530
    %v1532 = vpop.f32.mrf.mxu0
    %v1533 = vadd.f32 0.0, %v1532
    %v1534 = vpop.f32.mrf.mxu0
    %v1535 = vadd.f32 0.0, %v1534
    %1536 = vmatprep.mubr.bf16.mxu0 0
    %1537 = vmatmul.mubr.bf16.gmra.mxu0 %v885
    %v1538 = vpop.f32.mrf.mxu0
    %v1539 = vadd.f32 0.0, %v1538
    %v1540 = vpop.f32.mrf.mxu0
    %v1541 = vadd.f32 0.0, %v1540
    %v1542 = vpop.f32.mrf.mxu0
    %v1543 = vadd.f32 0.0, %v1542
    %v1544 = vpop.f32.mrf.mxu0
    %v1545 = vadd.f32 0.0, %v1544
    %1546 = vmatprep.mubr.bf16.mxu0 0
    %1547 = vmatmul.mubr.bf16.gmra.mxu0 %v888
    %v1548 = vpop.f32.mrf.mxu0
    %v1549 = vadd.f32 0.0, %v1548
    %v1550 = vpop.f32.mrf.mxu0
    %v1551 = vadd.f32 0.0, %v1550
    %v1552 = vpop.f32.mrf.mxu0
    %v1553 = vadd.f32 0.0, %v1552
    %v1554 = vpop.f32.mrf.mxu0
    %v1555 = vadd.f32 0.0, %v1554
    %1556 = vmatprep.mubr.bf16.mxu0 0
    %1557 = vmatmul.mubr.bf16.gmra.mxu0 %v891
    %v1558 = vpop.f32.mrf.mxu0
    %v1559 = vadd.f32 0.0, %v1558
    %v1560 = vpop.f32.mrf.mxu0
    %v1561 = vadd.f32 0.0, %v1560
    %v1562 = vpop.f32.mrf.mxu0
    %v1563 = vadd.f32 0.0, %v1562
    %v1564 = vpop.f32.mrf.mxu0
    %v1565 = vadd.f32 0.0, %v1564
    %1566 = vmatprep.mubr.bf16.mxu0 0
    %1567 = vmatmul.mubr.bf16.gmra.mxu0 %v894
    %v1568 = vpop.f32.mrf.mxu0
    %v1569 = vadd.f32 0.0, %v1568
    %v1570 = vpop.f32.mrf.mxu0
    %v1571 = vadd.f32 0.0, %v1570
    %v1572 = vpop.f32.mrf.mxu0
    %v1573 = vadd.f32 0.0, %v1572
    %v1574 = vpop.f32.mrf.mxu0
    %v1575 = vadd.f32 0.0, %v1574
    %1576 = vmatprep.mubr.bf16.mxu0 0
    %1577 = vmatmul.mubr.bf16.gmra.mxu0 %v897
    %v1578 = vpop.f32.mrf.mxu0
    %v1579 = vadd.f32 0.0, %v1578
    %v1580 = vpop.f32.mrf.mxu0
    %v1581 = vadd.f32 0.0, %v1580
    %v1582 = vpop.f32.mrf.mxu0
    %v1583 = vadd.f32 0.0, %v1582
    %v1584 = vpop.f32.mrf.mxu0
    %v1585 = vadd.f32 0.0, %v1584
    %1586 = vmatprep.mubr.bf16.mxu0 0
    %1587 = vmatmul.mubr.bf16.gmra.mxu0 %v1412
    %v1588 = vpop.f32.mrf.mxu0
    %v1589 = vadd.f32 0.0, %v1588
    %v1590 = vpop.f32.mrf.mxu0
    %v1591 = vadd.f32 0.0, %v1590
    %v1592 = vpop.f32.mrf.mxu0
    %v1593 = vadd.f32 0.0, %v1592
    %v1594 = vpop.f32.mrf.mxu0
    %v1595 = vadd.f32 0.0, %v1594
    %1596 = vdwg.mxu0
    %1597 = vmatprep.subr.bf16.mxu0 0
    %1598 = vmatpush1.bf16.msra.mxu0 0
    %1599 = vmatprep.subr.bf16.mxu0 0
    %1600 = vmatpush1.bf16.msra.mxu0 0
    %1601 = vmatprep.subr.bf16.mxu0 %v1386
    %1602 = vmatpush1.bf16.msra.mxu0 %v1385
    %1603 = vmatprep.subr.bf16.mxu0 %v1382
    %1604 = vmatpush1.bf16.msra.mxu0 %v1381
    %1605 = vmatprep.subr.bf16.mxu0 %v1378
    %1606 = vmatpush1.bf16.msra.mxu0 %v1377
    %1607 = vmatprep.subr.bf16.mxu0 %v1374
    %1608 = vmatpush1.bf16.msra.mxu0 %v1373
    %1609 = vmatprep.subr.bf16.mxu0 %v1370
    %1610 = vmatpush1.bf16.msra.mxu0 %v1369
    %1611 = vmatprep.subr.bf16.mxu0 %v1366
    %1612 = vmatpush1.bf16.msra.mxu0 %v1365
    %1613 = vmatprep.subr.bf16.mxu0 0
    %1614 = vmatpush2.bf16.msra.mxu0 0
    %1615 = vmatprep.subr.bf16.mxu0 0
    %1616 = vmatpush2.bf16.msra.mxu0 0
    %1617 = vmatprep.subr.bf16.mxu0 0
    %1618 = vmatpush2.bf16.msra.mxu0 0
    %1619 = vmatprep.subr.bf16.mxu0 0
    %1620 = vmatpush2.bf16.msra.mxu0 0
    %1621 = vmatprep.subr.bf16.mxu0 0
    %1622 = vmatpush2.bf16.msra.mxu0 0
    %1623 = vmatprep.subr.bf16.mxu0 0
    %1624 = vmatpush2.bf16.msra.mxu0 0
    %1625 = vmatprep.subr.bf16.mxu0 0
    %1626 = vmatpush2.bf16.msra.mxu0 0
    %1627 = vmatprep.subr.bf16.mxu0 0
    %1628 = vmatpush2.bf16.msra.mxu0 0
    %1629 = vmatprep.mubr.bf16.mxu0 0
    %1630 = vmatmul.mubr.bf16.gmra.mxu0 %v858
    %v1631 = vpop.f32.mrf.mxu0
    %v1632 = vadd.f32 0.0, %v1631
    %v1633 = vpop.f32.mrf.mxu0
    %v1634 = vadd.f32 0.0, %v1633
    %v1635 = vpop.f32.mrf.mxu0
    %v1636 = vadd.f32 0.0, %v1635
    %v1637 = vpop.f32.mrf.mxu0
    %v1638 = vadd.f32 0.0, %v1637
    %1639 = vmatprep.mubr.bf16.mxu0 0
    %1640 = vmatmul.mubr.bf16.gmra.mxu0 %v861
    %v1641 = vpop.f32.mrf.mxu0
    %v1642 = vadd.f32 0.0, %v1641
    %v1643 = vpop.f32.mrf.mxu0
    %v1644 = vadd.f32 0.0, %v1643
    %v1645 = vpop.f32.mrf.mxu0
    %v1646 = vadd.f32 0.0, %v1645
    %v1647 = vpop.f32.mrf.mxu0
    %v1648 = vadd.f32 0.0, %v1647
    %1649 = vmatprep.mubr.bf16.mxu0 0
    %1650 = vmatmul.mubr.bf16.gmra.mxu0 %v864
    %v1651 = vpop.f32.mrf.mxu0
    %v1652 = vadd.f32 0.0, %v1651
    %v1653 = vpop.f32.mrf.mxu0
    %v1654 = vadd.f32 0.0, %v1653
    %v1655 = vpop.f32.mrf.mxu0
    %v1656 = vadd.f32 0.0, %v1655
    %v1657 = vpop.f32.mrf.mxu0
    %v1658 = vadd.f32 0.0, %v1657
    %1659 = vmatprep.mubr.bf16.mxu0 0
    %1660 = vmatmul.mubr.bf16.gmra.mxu0 %v867
    %v1661 = vpop.f32.mrf.mxu0
    %v1662 = vadd.f32 0.0, %v1661
    %v1663 = vpop.f32.mrf.mxu0
    %v1664 = vadd.f32 0.0, %v1663
    %v1665 = vpop.f32.mrf.mxu0
    %v1666 = vadd.f32 0.0, %v1665
    %v1667 = vpop.f32.mrf.mxu0
    %v1668 = vadd.f32 0.0, %v1667
    %1669 = vmatprep.mubr.bf16.mxu0 0
    %1670 = vmatmul.mubr.bf16.gmra.mxu0 %v870
    %v1671 = vpop.f32.mrf.mxu0
    %v1672 = vadd.f32 0.0, %v1671
    %v1673 = vpop.f32.mrf.mxu0
    %v1674 = vadd.f32 0.0, %v1673
    %v1675 = vpop.f32.mrf.mxu0
    %v1676 = vadd.f32 0.0, %v1675
    %v1677 = vpop.f32.mrf.mxu0
    %v1678 = vadd.f32 0.0, %v1677
    %1679 = vmatprep.mubr.bf16.mxu0 0
    %1680 = vmatmul.mubr.bf16.gmra.mxu0 %v873
    %v1681 = vpop.f32.mrf.mxu0
    %v1682 = vadd.f32 0.0, %v1681
    %v1683 = vpop.f32.mrf.mxu0
    %v1684 = vadd.f32 0.0, %v1683
    %v1685 = vpop.f32.mrf.mxu0
    %v1686 = vadd.f32 0.0, %v1685
    %v1687 = vpop.f32.mrf.mxu0
    %v1688 = vadd.f32 0.0, %v1687
    %1689 = vmatprep.mubr.bf16.mxu0 0
    %1690 = vmatmul.mubr.bf16.gmra.mxu0 %v876
    %v1691 = vpop.f32.mrf.mxu0
    %v1692 = vadd.f32 0.0, %v1691
    %v1693 = vpop.f32.mrf.mxu0
    %v1694 = vadd.f32 0.0, %v1693
    %v1695 = vpop.f32.mrf.mxu0
    %v1696 = vadd.f32 0.0, %v1695
    %v1697 = vpop.f32.mrf.mxu0
    %v1698 = vadd.f32 0.0, %v1697
    %1699 = vmatprep.mubr.bf16.mxu0 0
    %1700 = vmatmul.mubr.bf16.gmra.mxu0 %v879
    %v1701 = vpop.f32.mrf.mxu0
    %v1702 = vadd.f32 0.0, %v1701
    %v1703 = vpop.f32.mrf.mxu0
    %v1704 = vadd.f32 0.0, %v1703
    %v1705 = vpop.f32.mrf.mxu0
    %v1706 = vadd.f32 0.0, %v1705
    %v1707 = vpop.f32.mrf.mxu0
    %v1708 = vadd.f32 0.0, %v1707
    %1709 = vmatprep.mubr.bf16.mxu0 0
    %1710 = vmatmul.mubr.bf16.gmra.mxu0 %v882
    %v1711 = vpop.f32.mrf.mxu0
    %v1712 = vadd.f32 0.0, %v1711
    %v1713 = vpop.f32.mrf.mxu0
    %v1714 = vadd.f32 0.0, %v1713
    %v1715 = vpop.f32.mrf.mxu0
    %v1716 = vadd.f32 0.0, %v1715
    %v1717 = vpop.f32.mrf.mxu0
    %v1718 = vadd.f32 0.0, %v1717
    %1719 = vmatprep.mubr.bf16.mxu0 0
    %1720 = vmatmul.mubr.bf16.gmra.mxu0 %v885
    %v1721 = vpop.f32.mrf.mxu0
    %v1722 = vadd.f32 0.0, %v1721
    %v1723 = vpop.f32.mrf.mxu0
    %v1724 = vadd.f32 0.0, %v1723
    %v1725 = vpop.f32.mrf.mxu0
    %v1726 = vadd.f32 0.0, %v1725
    %v1727 = vpop.f32.mrf.mxu0
    %v1728 = vadd.f32 0.0, %v1727
    %1729 = vmatprep.mubr.bf16.mxu0 0
    %1730 = vmatmul.mubr.bf16.gmra.mxu0 %v888
    %v1731 = vpop.f32.mrf.mxu0
    %v1732 = vadd.f32 0.0, %v1731
    %v1733 = vpop.f32.mrf.mxu0
    %v1734 = vadd.f32 0.0, %v1733
    %v1735 = vpop.f32.mrf.mxu0
    %v1736 = vadd.f32 0.0, %v1735
    %v1737 = vpop.f32.mrf.mxu0
    %v1738 = vadd.f32 0.0, %v1737
    %1739 = vmatprep.mubr.bf16.mxu0 0
    %1740 = vmatmul.mubr.bf16.gmra.mxu0 %v891
    %v1741 = vpop.f32.mrf.mxu0
    %v1742 = vadd.f32 0.0, %v1741
    %v1743 = vpop.f32.mrf.mxu0
    %v1744 = vadd.f32 0.0, %v1743
    %v1745 = vpop.f32.mrf.mxu0
    %v1746 = vadd.f32 0.0, %v1745
    %v1747 = vpop.f32.mrf.mxu0
    %v1748 = vadd.f32 0.0, %v1747
    %1749 = vmatprep.mubr.bf16.mxu0 0
    %1750 = vmatmul.mubr.bf16.gmra.mxu0 %v894
    %v1751 = vpop.f32.mrf.mxu0
    %v1752 = vadd.f32 0.0, %v1751
    %v1753 = vpop.f32.mrf.mxu0
    %v1754 = vadd.f32 0.0, %v1753
    %v1755 = vpop.f32.mrf.mxu0
    %v1756 = vadd.f32 0.0, %v1755
    %v1757 = vpop.f32.mrf.mxu0
    %v1758 = vadd.f32 0.0, %v1757
    %1759 = vmatprep.mubr.bf16.mxu0 0
    %1760 = vmatmul.mubr.bf16.gmra.mxu0 %v897
    %v1761 = vpop.f32.mrf.mxu0
    %v1762 = vadd.f32 0.0, %v1761
    %v1763 = vpop.f32.mrf.mxu0
    %v1764 = vadd.f32 0.0, %v1763
    %v1765 = vpop.f32.mrf.mxu0
    %v1766 = vadd.f32 0.0, %v1765
    %v1767 = vpop.f32.mrf.mxu0
    %v1768 = vadd.f32 0.0, %v1767
    %1769 = vmatprep.mubr.bf16.mxu0 0
    %1770 = vmatmul.mubr.bf16.gmra.mxu0 %v1412
    %v1771 = vpop.f32.mrf.mxu0
    %v1772 = vadd.f32 0.0, %v1771
    %v1773 = vpop.f32.mrf.mxu0
    %v1774 = vadd.f32 0.0, %v1773
    %v1775 = vpop.f32.mrf.mxu0
    %v1776 = vadd.f32 0.0, %v1775
    %v1777 = vpop.f32.mrf.mxu0
    %v1778 = vadd.f32 0.0, %v1777
    %1779 = vdwg.mxu0
    %v1780 = vadd.f32 %v934, %v1449
    %v1781 = vadd.f32 %v936, %v1451
    %v1782 = vadd.f32 %v1117, %v1632
    %v1783 = vadd.f32 %v1119, %v1634
    %v1784 = vadd.f32 %v938, %v1453
    %v1785 = vadd.f32 %v940, %v1455
    %v1786 = vadd.f32 %v1121, %v1636
    %v1787 = vadd.f32 %v1123, %v1638
    %v1788 = vadd.f32 %v944, %v1459
    %v1789 = vadd.f32 %v946, %v1461
    %v1790 = vadd.f32 %v1127, %v1642
    %v1791 = vadd.f32 %v1129, %v1644
    %v1792 = vadd.f32 %v948, %v1463
    %v1793 = vadd.f32 %v950, %v1465
    %v1794 = vadd.f32 %v1131, %v1646
    %v1795 = vadd.f32 %v1133, %v1648
    %v1796 = vadd.f32 %v954, %v1469
    %v1797 = vadd.f32 %v956, %v1471
    %v1798 = vadd.f32 %v1137, %v1652
    %v1799 = vadd.f32 %v1139, %v1654
    %v1800 = vadd.f32 %v958, %v1473
    %v1801 = vadd.f32 %v960, %v1475
    %v1802 = vadd.f32 %v1141, %v1656
    %v1803 = vadd.f32 %v1143, %v1658
    %v1804 = vadd.f32 %v964, %v1479
    %v1805 = vadd.f32 %v966, %v1481
    %v1806 = vadd.f32 %v1147, %v1662
    %v1807 = vadd.f32 %v1149, %v1664
    %v1808 = vadd.f32 %v968, %v1483
    %v1809 = vadd.f32 %v970, %v1485
    %v1810 = vadd.f32 %v1151, %v1666
    %v1811 = vadd.f32 %v1153, %v1668
    %v1812 = vadd.f32 %v974, %v1489
    %v1813 = vadd.f32 %v976, %v1491
    %v1814 = vadd.f32 %v1157, %v1672
    %v1815 = vadd.f32 %v1159, %v1674
    %v1816 = vadd.f32 %v978, %v1493
    %v1817 = vadd.f32 %v980, %v1495
    %v1818 = vadd.f32 %v1161, %v1676
    %v1819 = vadd.f32 %v1163, %v1678
    %v1820 = vadd.f32 %v984, %v1499
    %v1821 = vadd.f32 %v986, %v1501
    %v1822 = vadd.f32 %v1167, %v1682
    %v1823 = vadd.f32 %v1169, %v1684
    %v1824 = vadd.f32 %v988, %v1503
    %v1825 = vadd.f32 %v990, %v1505
    %v1826 = vadd.f32 %v1171, %v1686
    %v1827 = vadd.f32 %v1173, %v1688
    %v1828 = vadd.f32 %v994, %v1509
    %v1829 = vadd.f32 %v996, %v1511
    %v1830 = vadd.f32 %v1177, %v1692
    %v1831 = vadd.f32 %v1179, %v1694
    %v1832 = vadd.f32 %v998, %v1513
    %v1833 = vadd.f32 %v1000, %v1515
    %v1834 = vadd.f32 %v1181, %v1696
    %v1835 = vadd.f32 %v1183, %v1698
    %v1836 = vadd.f32 %v1004, %v1519
    %v1837 = vadd.f32 %v1006, %v1521
    %v1838 = vadd.f32 %v1187, %v1702
    %v1839 = vadd.f32 %v1189, %v1704
    %v1840 = vadd.f32 %v1008, %v1523
    %v1841 = vadd.f32 %v1010, %v1525
    %v1842 = vadd.f32 %v1191, %v1706
    %v1843 = vadd.f32 %v1193, %v1708
    %v1844 = vadd.f32 %v1014, %v1529
    %v1845 = vadd.f32 %v1016, %v1531
    %v1846 = vadd.f32 %v1197, %v1712
    %v1847 = vadd.f32 %v1199, %v1714
    %v1848 = vadd.f32 %v1018, %v1533
    %v1849 = vadd.f32 %v1020, %v1535
    %v1850 = vadd.f32 %v1201, %v1716
    %v1851 = vadd.f32 %v1203, %v1718
    %v1852 = vadd.f32 %v1024, %v1539
    %v1853 = vadd.f32 %v1026, %v1541
    %v1854 = vadd.f32 %v1207, %v1722
    %v1855 = vadd.f32 %v1209, %v1724
    %v1856 = vadd.f32 %v1028, %v1543
    %v1857 = vadd.f32 %v1030, %v1545
    %v1858 = vadd.f32 %v1211, %v1726
    %v1859 = vadd.f32 %v1213, %v1728
    %v1860 = vadd.f32 %v1034, %v1549
    %v1861 = vadd.f32 %v1036, %v1551
    %v1862 = vadd.f32 %v1217, %v1732
    %v1863 = vadd.f32 %v1219, %v1734
    %v1864 = vadd.f32 %v1038, %v1553
    %v1865 = vadd.f32 %v1040, %v1555
    %v1866 = vadd.f32 %v1221, %v1736
    %v1867 = vadd.f32 %v1223, %v1738
    %v1868 = vadd.f32 %v1044, %v1559
    %v1869 = vadd.f32 %v1046, %v1561
    %v1870 = vadd.f32 %v1227, %v1742
    %v1871 = vadd.f32 %v1229, %v1744
    %v1872 = vadd.f32 %v1048, %v1563
    %v1873 = vadd.f32 %v1050, %v1565
    %v1874 = vadd.f32 %v1231, %v1746
    %v1875 = vadd.f32 %v1233, %v1748
    %v1876 = vadd.f32 %v1054, %v1569
    %v1877 = vadd.f32 %v1056, %v1571
    %v1878 = vadd.f32 %v1237, %v1752
    %v1879 = vadd.f32 %v1239, %v1754
    %v1880 = vadd.f32 %v1058, %v1573
    %v1881 = vadd.f32 %v1060, %v1575
    %v1882 = vadd.f32 %v1241, %v1756
    %v1883 = vadd.f32 %v1243, %v1758
    %v1884 = vadd.f32 %v1064, %v1579
    %v1885 = vadd.f32 %v1066, %v1581
    %v1886 = vadd.f32 %v1247, %v1762
    %v1887 = vadd.f32 %v1249, %v1764
    %v1888 = vadd.f32 %v1068, %v1583
    %v1889 = vadd.f32 %v1070, %v1585
    %v1890 = vadd.f32 %v1251, %v1766
    %v1891 = vadd.f32 %v1253, %v1768
    %v1892 = vadd.f32 %v1074, %v1589
    %v1893 = vadd.f32 %v1076, %v1591
    %v1894 = vadd.f32 %v1257, %v1772
    %v1895 = vadd.f32 %v1259, %v1774
    %v1896 = vadd.f32 %v1078, %v1593
    %v1897 = vadd.f32 %v1080, %v1595
    %v1898 = vadd.f32 %v1261, %v1776
    %v1899 = vadd.f32 %v1263, %v1778
    %v1900 = vld [vmem:[%s2] sm:$0xf]
    %v1902 = vlaneseq
    %v1903 = vshrl.u32 %v1902, 7
    %v1904 = vsub.s32 0, %v1903
    %v1905 = vrot.slane %v1900, %v1904
    %v1906 = vlaneseq
    %v1907 = vshrl.u32 %v1906, 7
    %v1908 = vsub.s32 1, %v1907
    %v1909 = vrot.slane %v1900, %v1908
    %v1910 = vlaneseq
    %v1911 = vshrl.u32 %v1910, 7
    %v1912 = vsub.s32 2, %v1911
    %v1913 = vrot.slane %v1900, %v1912
    %v1914 = vlaneseq
    %v1915 = vshrl.u32 %v1914, 7
    %v1916 = vsub.s32 3, %v1915
    %v1917 = vrot.slane %v1900, %v1916
    %v1922 = vadd.f32 %v1780, %v1905
    %v1923 = vadd.f32 %v1781, %v1909
    %v1924 = vadd.f32 %v1782, %v1913
    %v1925 = vadd.f32 %v1783, %v1917
    %v1926 = vadd.f32 %v1784, %v1905
    %v1927 = vadd.f32 %v1785, %v1909
    %v1928 = vadd.f32 %v1786, %v1913
    %v1929 = vadd.f32 %v1787, %v1917
    %v1930 = vadd.f32 %v1788, %v1905
    %v1931 = vadd.f32 %v1789, %v1909
    %v1932 = vadd.f32 %v1790, %v1913
    %v1933 = vadd.f32 %v1791, %v1917
    %v1934 = vadd.f32 %v1792, %v1905
    %v1935 = vadd.f32 %v1793, %v1909
    %v1936 = vadd.f32 %v1794, %v1913
    %v1937 = vadd.f32 %v1795, %v1917
    %v1938 = vadd.f32 %v1796, %v1905
    %v1939 = vadd.f32 %v1797, %v1909
    %v1940 = vadd.f32 %v1798, %v1913
    %v1941 = vadd.f32 %v1799, %v1917
    %v1942 = vadd.f32 %v1800, %v1905
    %v1943 = vadd.f32 %v1801, %v1909
    %v1944 = vadd.f32 %v1802, %v1913
    %v1945 = vadd.f32 %v1803, %v1917
    %v1946 = vadd.f32 %v1804, %v1905
    %v1947 = vadd.f32 %v1805, %v1909
    %v1948 = vadd.f32 %v1806, %v1913
    %v1949 = vadd.f32 %v1807, %v1917
    %v1950 = vadd.f32 %v1808, %v1905
    %v1951 = vadd.f32 %v1809, %v1909
    %v1952 = vadd.f32 %v1810, %v1913
    %v1953 = vadd.f32 %v1811, %v1917
    %v1954 = vadd.f32 %v1812, %v1905
    %v1955 = vadd.f32 %v1813, %v1909
    %v1956 = vadd.f32 %v1814, %v1913
    %v1957 = vadd.f32 %v1815, %v1917
    %v1958 = vadd.f32 %v1816, %v1905
    %v1959 = vadd.f32 %v1817, %v1909
    %v1960 = vadd.f32 %v1818, %v1913
    %v1961 = vadd.f32 %v1819, %v1917
    %v1962 = vadd.f32 %v1820, %v1905
    %v1963 = vadd.f32 %v1821, %v1909
    %v1964 = vadd.f32 %v1822, %v1913
    %v1965 = vadd.f32 %v1823, %v1917
    %v1966 = vadd.f32 %v1824, %v1905
    %v1967 = vadd.f32 %v1825, %v1909
    %v1968 = vadd.f32 %v1826, %v1913
    %v1969 = vadd.f32 %v1827, %v1917
    %v1970 = vadd.f32 %v1828, %v1905
    %v1971 = vadd.f32 %v1829, %v1909
    %v1972 = vadd.f32 %v1830, %v1913
    %v1973 = vadd.f32 %v1831, %v1917
    %v1974 = vadd.f32 %v1832, %v1905
    %v1975 = vadd.f32 %v1833, %v1909
    %v1976 = vadd.f32 %v1834, %v1913
    %v1977 = vadd.f32 %v1835, %v1917
    %v1978 = vadd.f32 %v1836, %v1905
    %v1979 = vadd.f32 %v1837, %v1909
    %v1980 = vadd.f32 %v1838, %v1913
    %v1981 = vadd.f32 %v1839, %v1917
    %v1982 = vadd.f32 %v1840, %v1905
    %v1983 = vadd.f32 %v1841, %v1909
    %v1984 = vadd.f32 %v1842, %v1913
    %v1985 = vadd.f32 %v1843, %v1917
    %v1986 = vadd.f32 %v1844, %v1905
    %v1987 = vadd.f32 %v1845, %v1909
    %v1988 = vadd.f32 %v1846, %v1913
    %v1989 = vadd.f32 %v1847, %v1917
    %v1990 = vadd.f32 %v1848, %v1905
    %v1991 = vadd.f32 %v1849, %v1909
    %v1992 = vadd.f32 %v1850, %v1913
    %v1993 = vadd.f32 %v1851, %v1917
    %v1994 = vadd.f32 %v1852, %v1905
    %v1995 = vadd.f32 %v1853, %v1909
    %v1996 = vadd.f32 %v1854, %v1913
    %v1997 = vadd.f32 %v1855, %v1917
    %v1998 = vadd.f32 %v1856, %v1905
    %v1999 = vadd.f32 %v1857, %v1909
    %v2000 = vadd.f32 %v1858, %v1913
    %v2001 = vadd.f32 %v1859, %v1917
    %v2002 = vadd.f32 %v1860, %v1905
    %v2003 = vadd.f32 %v1861, %v1909
    %v2004 = vadd.f32 %v1862, %v1913
    %v2005 = vadd.f32 %v1863, %v1917
    %v2006 = vadd.f32 %v1864, %v1905
    %v2007 = vadd.f32 %v1865, %v1909
    %v2008 = vadd.f32 %v1866, %v1913
    %v2009 = vadd.f32 %v1867, %v1917
    %v2010 = vadd.f32 %v1868, %v1905
    %v2011 = vadd.f32 %v1869, %v1909
    %v2012 = vadd.f32 %v1870, %v1913
    %v2013 = vadd.f32 %v1871, %v1917
    %v2014 = vadd.f32 %v1872, %v1905
    %v2015 = vadd.f32 %v1873, %v1909
    %v2016 = vadd.f32 %v1874, %v1913
    %v2017 = vadd.f32 %v1875, %v1917
    %v2018 = vadd.f32 %v1876, %v1905
    %v2019 = vadd.f32 %v1877, %v1909
    %v2020 = vadd.f32 %v1878, %v1913
    %v2021 = vadd.f32 %v1879, %v1917
    %v2022 = vadd.f32 %v1880, %v1905
    %v2023 = vadd.f32 %v1881, %v1909
    %v2024 = vadd.f32 %v1882, %v1913
    %v2025 = vadd.f32 %v1883, %v1917
    %v2026 = vadd.f32 %v1884, %v1905
    %v2027 = vadd.f32 %v1885, %v1909
    %v2028 = vadd.f32 %v1886, %v1913
    %v2029 = vadd.f32 %v1887, %v1917
    %v2030 = vadd.f32 %v1888, %v1905
    %v2031 = vadd.f32 %v1889, %v1909
    %v2032 = vadd.f32 %v1890, %v1913
    %v2033 = vadd.f32 %v1891, %v1917
    %v2034 = vadd.f32 %v1892, %v1905
    %v2035 = vadd.f32 %v1893, %v1909
    %v2036 = vadd.f32 %v1894, %v1913
    %v2037 = vadd.f32 %v1895, %v1917
    %v2038 = vadd.f32 %v1896, %v1905
    %v2039 = vadd.f32 %v1897, %v1909
    %v2040 = vadd.f32 %v1898, %v1913
    %v2041 = vadd.f32 %v1899, %v1917
    %v2042 = vmax.f32 %v1922, 0.0
    %v2043 = vmax.f32 %v1923, 0.0
    %v2044 = vmax.f32 %v1924, 0.0
    %v2045 = vmax.f32 %v1925, 0.0
    %v2046 = vmax.f32 %v1926, 0.0
    %v2047 = vmax.f32 %v1927, 0.0
    %v2048 = vmax.f32 %v1928, 0.0
    %v2049 = vmax.f32 %v1929, 0.0
    %v2050 = vmax.f32 %v1930, 0.0
    %v2051 = vmax.f32 %v1931, 0.0
    %v2052 = vmax.f32 %v1932, 0.0
    %v2053 = vmax.f32 %v1933, 0.0
    %v2054 = vmax.f32 %v1934, 0.0
    %v2055 = vmax.f32 %v1935, 0.0
    %v2056 = vmax.f32 %v1936, 0.0
    %v2057 = vmax.f32 %v1937, 0.0
    %v2058 = vmax.f32 %v1938, 0.0
    %v2059 = vmax.f32 %v1939, 0.0
    %v2060 = vmax.f32 %v1940, 0.0
    %v2061 = vmax.f32 %v1941, 0.0
    %v2062 = vmax.f32 %v1942, 0.0
    %v2063 = vmax.f32 %v1943, 0.0
    %v2064 = vmax.f32 %v1944, 0.0
    %v2065 = vmax.f32 %v1945, 0.0
    %v2066 = vmax.f32 %v1946, 0.0
    %v2067 = vmax.f32 %v1947, 0.0
    %v2068 = vmax.f32 %v1948, 0.0
    %v2069 = vmax.f32 %v1949, 0.0
    %v2070 = vmax.f32 %v1950, 0.0
    %v2071 = vmax.f32 %v1951, 0.0
    %v2072 = vmax.f32 %v1952, 0.0
    %v2073 = vmax.f32 %v1953, 0.0
    %v2074 = vmax.f32 %v1954, 0.0
    %v2075 = vmax.f32 %v1955, 0.0
    %v2076 = vmax.f32 %v1956, 0.0
    %v2077 = vmax.f32 %v1957, 0.0
    %v2078 = vmax.f32 %v1958, 0.0
    %v2079 = vmax.f32 %v1959, 0.0
    %v2080 = vmax.f32 %v1960, 0.0
    %v2081 = vmax.f32 %v1961, 0.0
    %v2082 = vmax.f32 %v1962, 0.0
    %v2083 = vmax.f32 %v1963, 0.0
    %v2084 = vmax.f32 %v1964, 0.0
    %v2085 = vmax.f32 %v1965, 0.0
    %v2086 = vmax.f32 %v1966, 0.0
    %v2087 = vmax.f32 %v1967, 0.0
    %v2088 = vmax.f32 %v1968, 0.0
    %v2089 = vmax.f32 %v1969, 0.0
    %v2090 = vmax.f32 %v1970, 0.0
    %v2091 = vmax.f32 %v1971, 0.0
    %v2092 = vmax.f32 %v1972, 0.0
    %v2093 = vmax.f32 %v1973, 0.0
    %v2094 = vmax.f32 %v1974, 0.0
    %v2095 = vmax.f32 %v1975, 0.0
    %v2096 = vmax.f32 %v1976, 0.0
    %v2097 = vmax.f32 %v1977, 0.0
    %v2098 = vmax.f32 %v1978, 0.0
    %v2099 = vmax.f32 %v1979, 0.0
    %v2100 = vmax.f32 %v1980, 0.0
    %v2101 = vmax.f32 %v1981, 0.0
    %v2102 = vmax.f32 %v1982, 0.0
    %v2103 = vmax.f32 %v1983, 0.0
    %v2104 = vmax.f32 %v1984, 0.0
    %v2105 = vmax.f32 %v1985, 0.0
    %v2106 = vmax.f32 %v1986, 0.0
    %v2107 = vmax.f32 %v1987, 0.0
    %v2108 = vmax.f32 %v1988, 0.0
    %v2109 = vmax.f32 %v1989, 0.0
    %v2110 = vmax.f32 %v1990, 0.0
    %v2111 = vmax.f32 %v1991, 0.0
    %v2112 = vmax.f32 %v1992, 0.0
    %v2113 = vmax.f32 %v1993, 0.0
    %v2114 = vmax.f32 %v1994, 0.0
    %v2115 = vmax.f32 %v1995, 0.0
    %v2116 = vmax.f32 %v1996, 0.0
    %v2117 = vmax.f32 %v1997, 0.0
    %v2118 = vmax.f32 %v1998, 0.0
    %v2119 = vmax.f32 %v1999, 0.0
    %v2120 = vmax.f32 %v2000, 0.0
    %v2121 = vmax.f32 %v2001, 0.0
    %v2122 = vmax.f32 %v2002, 0.0
    %v2123 = vmax.f32 %v2003, 0.0
    %v2124 = vmax.f32 %v2004, 0.0
    %v2125 = vmax.f32 %v2005, 0.0
    %v2126 = vmax.f32 %v2006, 0.0
    %v2127 = vmax.f32 %v2007, 0.0
    %v2128 = vmax.f32 %v2008, 0.0
    %v2129 = vmax.f32 %v2009, 0.0
    %v2130 = vmax.f32 %v2010, 0.0
    %v2131 = vmax.f32 %v2011, 0.0
    %v2132 = vmax.f32 %v2012, 0.0
    %v2133 = vmax.f32 %v2013, 0.0
    %v2134 = vmax.f32 %v2014, 0.0
    %v2135 = vmax.f32 %v2015, 0.0
    %v2136 = vmax.f32 %v2016, 0.0
    %v2137 = vmax.f32 %v2017, 0.0
    %v2138 = vmax.f32 %v2018, 0.0
    %v2139 = vmax.f32 %v2019, 0.0
    %v2140 = vmax.f32 %v2020, 0.0
    %v2141 = vmax.f32 %v2021, 0.0
    %v2142 = vmax.f32 %v2022, 0.0
    %v2143 = vmax.f32 %v2023, 0.0
    %v2144 = vmax.f32 %v2024, 0.0
    %v2145 = vmax.f32 %v2025, 0.0
    %v2146 = vmax.f32 %v2026, 0.0
    %v2147 = vmax.f32 %v2027, 0.0
    %v2148 = vmax.f32 %v2028, 0.0
    %v2149 = vmax.f32 %v2029, 0.0
    %v2150 = vmax.f32 %v2030, 0.0
    %v2151 = vmax.f32 %v2031, 0.0
    %v2152 = vmax.f32 %v2032, 0.0
    %v2153 = vmax.f32 %v2033, 0.0
    %v2154 = vmax.f32 %v2034, 0.0
    %v2155 = vmax.f32 %v2035, 0.0
    %v2156 = vmax.f32 %v2036, 0.0
    %v2157 = vmax.f32 %v2037, 0.0
    %v2158 = vmax.f32 %v2038, 0.0
    %v2159 = vmax.f32 %v2039, 0.0
    %v2160 = vmax.f32 %v2040, 0.0
    %v2161 = vmax.f32 %v2041, 0.0
    %v2162 = vmax.f32 %v2042, %v2046
    %v2163 = vmax.f32 %v2043, %v2047
    %v2164 = vmax.f32 %v2044, %v2048
    %v2165 = vmax.f32 %v2045, %v2049
    %v2166 = vmax.f32 %v2050, %v2054
    %v2167 = vmax.f32 %v2051, %v2055
    %v2168 = vmax.f32 %v2052, %v2056
    %v2169 = vmax.f32 %v2053, %v2057
    %v2170 = vmax.f32 %v2058, %v2062
    %v2171 = vmax.f32 %v2059, %v2063
    %v2172 = vmax.f32 %v2060, %v2064
    %v2173 = vmax.f32 %v2061, %v2065
    %v2174 = vmax.f32 %v2066, %v2070
    %v2175 = vmax.f32 %v2067, %v2071
    %v2176 = vmax.f32 %v2068, %v2072
    %v2177 = vmax.f32 %v2069, %v2073
    %v2178 = vmax.f32 %v2074, %v2078
    %v2179 = vmax.f32 %v2075, %v2079
    %v2180 = vmax.f32 %v2076, %v2080
    %v2181 = vmax.f32 %v2077, %v2081
    %v2182 = vmax.f32 %v2082, %v2086
    %v2183 = vmax.f32 %v2083, %v2087
    %v2184 = vmax.f32 %v2084, %v2088
    %v2185 = vmax.f32 %v2085, %v2089
    %v2186 = vmax.f32 %v2090, %v2094
    %v2187 = vmax.f32 %v2091, %v2095
    %v2188 = vmax.f32 %v2092, %v2096
    %v2189 = vmax.f32 %v2093, %v2097
    %v2190 = vmax.f32 %v2098, %v2102
    %v2191 = vmax.f32 %v2099, %v2103
    %v2192 = vmax.f32 %v2100, %v2104
    %v2193 = vmax.f32 %v2101, %v2105
    %v2194 = vmax.f32 %v2106, %v2110
    %v2195 = vmax.f32 %v2107, %v2111
    %v2196 = vmax.f32 %v2108, %v2112
    %v2197 = vmax.f32 %v2109, %v2113
    %v2198 = vmax.f32 %v2114, %v2118
    %v2199 = vmax.f32 %v2115, %v2119
    %v2200 = vmax.f32 %v2116, %v2120
    %v2201 = vmax.f32 %v2117, %v2121
    %v2202 = vmax.f32 %v2122, %v2126
    %v2203 = vmax.f32 %v2123, %v2127
    %v2204 = vmax.f32 %v2124, %v2128
    %v2205 = vmax.f32 %v2125, %v2129
    %v2206 = vmax.f32 %v2130, %v2134
    %v2207 = vmax.f32 %v2131, %v2135
    %v2208 = vmax.f32 %v2132, %v2136
    %v2209 = vmax.f32 %v2133, %v2137
    %v2210 = vmax.f32 %v2138, %v2142
    %v2211 = vmax.f32 %v2139, %v2143
    %v2212 = vmax.f32 %v2140, %v2144
    %v2213 = vmax.f32 %v2141, %v2145
    %v2214 = vmax.f32 %v2146, %v2150
    %v2215 = vmax.f32 %v2147, %v2151
    %v2216 = vmax.f32 %v2148, %v2152
    %v2217 = vmax.f32 %v2149, %v2153
    %v2218 = vmax.f32 %v2154, %v2158
    %v2219 = vmax.f32 %v2155, %v2159
    %v2220 = vmax.f32 %v2156, %v2160
    %v2221 = vmax.f32 %v2157, %v2161
    %v2222 = vmax.f32 %v2162, %v2164
    %v2223 = vmax.f32 %v2163, %v2165
    %v2224 = vmax.f32 %v2166, %v2168
    %v2225 = vmax.f32 %v2167, %v2169
    %v2226 = vmax.f32 %v2170, %v2172
    %v2227 = vmax.f32 %v2171, %v2173
    %v2228 = vmax.f32 %v2174, %v2176
    %v2229 = vmax.f32 %v2175, %v2177
    %v2230 = vmax.f32 %v2178, %v2180
    %v2231 = vmax.f32 %v2179, %v2181
    %v2232 = vmax.f32 %v2182, %v2184
    %v2233 = vmax.f32 %v2183, %v2185
    %v2234 = vmax.f32 %v2186, %v2188
    %v2235 = vmax.f32 %v2187, %v2189
    %v2236 = vmax.f32 %v2190, %v2192
    %v2237 = vmax.f32 %v2191, %v2193
    %v2238 = vmax.f32 %v2194, %v2196
    %v2239 = vmax.f32 %v2195, %v2197
    %v2240 = vmax.f32 %v2198, %v2200
    %v2241 = vmax.f32 %v2199, %v2201
    %v2242 = vmax.f32 %v2202, %v2204
    %v2243 = vmax.f32 %v2203, %v2205
    %v2244 = vmax.f32 %v2206, %v2208
    %v2245 = vmax.f32 %v2207, %v2209
    %v2246 = vmax.f32 %v2210, %v2212
    %v2247 = vmax.f32 %v2211, %v2213
    %v2248 = vmax.f32 %v2214, %v2216
    %v2249 = vmax.f32 %v2215, %v2217
    %v2250 = vmax.f32 %v2218, %v2220
    %v2251 = vmax.f32 %v2219, %v2221
    %v2252 = vpack.c.bf16 %v2224, %v2222
    %v2253 = vpack.c.bf16 %v2225, %v2223
    %v2254 = vpack.c.bf16 %v2228, %v2226
    %v2255 = vpack.c.bf16 %v2229, %v2227
    %v2256 = vpack.c.bf16 %v2232, %v2230
    %v2257 = vpack.c.bf16 %v2233, %v2231
    %v2258 = vpack.c.bf16 %v2236, %v2234
    %v2259 = vpack.c.bf16 %v2237, %v2235
    %v2260 = vpack.c.bf16 %v2240, %v2238
    %v2261 = vpack.c.bf16 %v2241, %v2239
    %v2262 = vpack.c.bf16 %v2244, %v2242
    %v2263 = vpack.c.bf16 %v2245, %v2243
    %v2264 = vpack.c.bf16 %v2246, %v2246
    %v2265 = vpack.c.bf16 %v2247, %v2247
    %v2266 = vld [vmem:[#allocation4] sm:$0xff]
    %v2267 = vld [vmem:[#allocation4 + $0x8] sm:$0xff]
    %v2268 = vld [vmem:[#allocation4 + $0x10] sm:$0xff]
    %v2269 = vld [vmem:[#allocation4 + $0x18] sm:$0xff]
    %v2270 = vld [vmem:[#allocation4 + $0x20] sm:$0xff]
    %v2271 = vld [vmem:[#allocation4 + $0x28] sm:$0xff]
    %v2272 = vld [vmem:[#allocation4 + $0x30] sm:$0xff]
    %v2273 = vld [vmem:[#allocation4 + $0x38] sm:$0xff]
    %v2274 = vld [vmem:[#allocation4 + $0x40] sm:$0xff]
    %v2275 = vld [vmem:[#allocation4 + $0x48] sm:$0xff]
    %v2276 = vld [vmem:[#allocation4 + $0x50] sm:$0xff]
    %v2277 = vld [vmem:[#allocation4 + $0x58] sm:$0xff]
    %v2278 = vld [vmem:[#allocation4 + $0x60] sm:$0xff]
    %v2279 = vld [vmem:[#allocation4 + $0x68] sm:$0xff]
    %v2280 = vld [vmem:[#allocation4 + $0x70] sm:$0xff]
    %v2281 = vld [vmem:[#allocation4 + $0x78] sm:$0xff]
    %v2282 = vld [vmem:[#allocation4 + $0x80] sm:$0xff]
    %v2283 = vld [vmem:[#allocation4 + $0x88] sm:$0xff]
    %v2284 = vld [vmem:[#allocation4 + $0x90] sm:$0xff]
    %v2285 = vld [vmem:[#allocation4 + $0x98] sm:$0xff]
    %v2286 = vld [vmem:[#allocation4 + $0xa0] sm:$0xff]
    %v2287 = vld [vmem:[#allocation4 + $0xa8] sm:$0xff]
    %v2288 = vld [vmem:[#allocation4 + $0xb0] sm:$0xff]
    %v2289 = vld [vmem:[#allocation4 + $0xb8] sm:$0xff]
    %v2290 = vld [vmem:[#allocation4 + $0xc0] sm:$0xff]
    %v2291 = vld [vmem:[#allocation4 + $0xc8] sm:$0xff]
    %v2292 = vld [vmem:[#allocation4 + $0xd0] sm:$0xff]
    %v2293 = vld [vmem:[#allocation4 + $0xd8] sm:$0xff]
    %v2294 = vld [vmem:[#allocation4 + $0xe0] sm:$0xff]
    %v2295 = vld [vmem:[#allocation4 + $0xe8] sm:$0xff]
    %v2296 = vld [vmem:[#allocation4 + $0xf0] sm:$0xff]
    %v2297 = vld [vmem:[#allocation4 + $0xf8] sm:$0xff]
    %v2298 = vld [vmem:[#allocation4 + $0x100] sm:$0xff]
    %v2299 = vld [vmem:[#allocation4 + $0x108] sm:$0xff]
    %v2300 = vld [vmem:[#allocation4 + $0x110] sm:$0xff]
    %v2301 = vld [vmem:[#allocation4 + $0x118] sm:$0xff]
    %v2302 = vld [vmem:[#allocation4 + $0x120] sm:$0xff]
    %v2303 = vld [vmem:[#allocation4 + $0x128] sm:$0xff]
    %v2304 = vld [vmem:[#allocation4 + $0x130] sm:$0xff]
    %v2305 = vld [vmem:[#allocation4 + $0x138] sm:$0xff]
    %v2306 = vld [vmem:[#allocation4 + $0x140] sm:$0xff]
    %v2307 = vld [vmem:[#allocation4 + $0x148] sm:$0xff]
    %v2308 = vld [vmem:[#allocation4 + $0x150] sm:$0xff]
    %v2309 = vld [vmem:[#allocation4 + $0x158] sm:$0xff]
    %v2310 = vld [vmem:[#allocation4 + $0x160] sm:$0xff]
    %v2311 = vld [vmem:[#allocation4 + $0x168] sm:$0xff]
    %v2312 = vld [vmem:[#allocation4 + $0x170] sm:$0xff]
    %v2313 = vld [vmem:[#allocation4 + $0x178] sm:$0xff]
    %v2314 = vld [vmem:[#allocation4 + $0x180] sm:$0xff]
    %v2315 = vld [vmem:[#allocation4 + $0x188] sm:$0xff]
    %v2316 = vld [vmem:[#allocation4 + $0x190] sm:$0xff]
    %v2317 = vld [vmem:[#allocation4 + $0x198] sm:$0xff]
    %v2318 = vld [vmem:[#allocation4 + $0x1a0] sm:$0xff]
    %v2319 = vld [vmem:[#allocation4 + $0x1a8] sm:$0xff]
    %v2320 = vld [vmem:[#allocation4 + $0x1b0] sm:$0xff]
    %v2321 = vld [vmem:[#allocation4 + $0x1b8] sm:$0xff]
    %v2322 = vld [vmem:[#allocation4 + $0x1c0] sm:$0xff]
    %v2323 = vld [vmem:[#allocation4 + $0x1c8] sm:$0xff]
    %v2324 = vld [vmem:[#allocation4 + $0x1d0] sm:$0xff]
    %v2325 = vld [vmem:[#allocation4 + $0x1d8] sm:$0xff]
    %v2326 = vld [vmem:[#allocation4 + $0x1e0] sm:$0xff]
    %v2327 = vld [vmem:[#allocation4 + $0x1e8] sm:$0xff]
    %v2328 = vld [vmem:[#allocation4 + $0x1f0] sm:$0xff]
    %v2329 = vld [vmem:[#allocation4 + $0x1f8] sm:$0xff]
    %v2330 = vpack.c.bf16 %v2226, %v2224
    %v2331 = vpack.c.bf16 %v2227, %v2225
    %v2332 = vpack.c.bf16 %v2230, %v2228
    %v2333 = vpack.c.bf16 %v2231, %v2229
    %v2334 = vpack.c.bf16 %v2234, %v2232
    %v2335 = vpack.c.bf16 %v2235, %v2233
    %v2336 = vpack.c.bf16 %v2238, %v2236
    %v2337 = vpack.c.bf16 %v2239, %v2237
    %v2338 = vpack.c.bf16 %v2242, %v2240
    %v2339 = vpack.c.bf16 %v2243, %v2241
    %v2340 = vpack.c.bf16 %v2246, %v2244
    %v2341 = vpack.c.bf16 %v2247, %v2245
    %v2342 = vpack.c.bf16 %v2248, %v2248
    %v2343 = vpack.c.bf16 %v2249, %v2249
    %s2344 = scalar_lea.vmem [#allocation4], 512
    %v2345 = vld [vmem:[%s2344] sm:$0xff]
    %v2346 = vld [vmem:[%s2344 + $0x8] sm:$0xff]
    %v2347 = vld [vmem:[%s2344 + $0x10] sm:$0xff]
    %v2348 = vld [vmem:[%s2344 + $0x18] sm:$0xff]
    %v2349 = vld [vmem:[%s2344 + $0x20] sm:$0xff]
    %v2350 = vld [vmem:[%s2344 + $0x28] sm:$0xff]
    %v2351 = vld [vmem:[%s2344 + $0x30] sm:$0xff]
    %v2352 = vld [vmem:[%s2344 + $0x38] sm:$0xff]
    %v2353 = vld [vmem:[%s2344 + $0x40] sm:$0xff]
    %v2354 = vld [vmem:[%s2344 + $0x48] sm:$0xff]
    %v2355 = vld [vmem:[%s2344 + $0x50] sm:$0xff]
    %v2356 = vld [vmem:[%s2344 + $0x58] sm:$0xff]
    %v2357 = vld [vmem:[%s2344 + $0x60] sm:$0xff]
    %v2358 = vld [vmem:[%s2344 + $0x68] sm:$0xff]
    %v2359 = vld [vmem:[%s2344 + $0x70] sm:$0xff]
    %v2360 = vld [vmem:[%s2344 + $0x78] sm:$0xff]
    %v2361 = vld [vmem:[%s2344 + $0x80] sm:$0xff]
    %v2362 = vld [vmem:[%s2344 + $0x88] sm:$0xff]
    %v2363 = vld [vmem:[%s2344 + $0x90] sm:$0xff]
    %v2364 = vld [vmem:[%s2344 + $0x98] sm:$0xff]
    %v2365 = vld [vmem:[%s2344 + $0xa0] sm:$0xff]
    %v2366 = vld [vmem:[%s2344 + $0xa8] sm:$0xff]
    %v2367 = vld [vmem:[%s2344 + $0xb0] sm:$0xff]
    %v2368 = vld [vmem:[%s2344 + $0xb8] sm:$0xff]
    %v2369 = vld [vmem:[%s2344 + $0xc0] sm:$0xff]
    %v2370 = vld [vmem:[%s2344 + $0xc8] sm:$0xff]
    %v2371 = vld [vmem:[%s2344 + $0xd0] sm:$0xff]
    %v2372 = vld [vmem:[%s2344 + $0xd8] sm:$0xff]
    %v2373 = vld [vmem:[%s2344 + $0xe0] sm:$0xff]
    %v2374 = vld [vmem:[%s2344 + $0xe8] sm:$0xff]
    %v2375 = vld [vmem:[%s2344 + $0xf0] sm:$0xff]
    %v2376 = vld [vmem:[%s2344 + $0xf8] sm:$0xff]
    %v2377 = vld [vmem:[%s2344 + $0x100] sm:$0xff]
    %v2378 = vld [vmem:[%s2344 + $0x108] sm:$0xff]
    %v2379 = vld [vmem:[%s2344 + $0x110] sm:$0xff]
    %v2380 = vld [vmem:[%s2344 + $0x118] sm:$0xff]
    %v2381 = vld [vmem:[%s2344 + $0x120] sm:$0xff]
    %v2382 = vld [vmem:[%s2344 + $0x128] sm:$0xff]
    %v2383 = vld [vmem:[%s2344 + $0x130] sm:$0xff]
    %v2384 = vld [vmem:[%s2344 + $0x138] sm:$0xff]
    %v2385 = vld [vmem:[%s2344 + $0x140] sm:$0xff]
    %v2386 = vld [vmem:[%s2344 + $0x148] sm:$0xff]
    %v2387 = vld [vmem:[%s2344 + $0x150] sm:$0xff]
    %v2388 = vld [vmem:[%s2344 + $0x158] sm:$0xff]
    %v2389 = vld [vmem:[%s2344 + $0x160] sm:$0xff]
    %v2390 = vld [vmem:[%s2344 + $0x168] sm:$0xff]
    %v2391 = vld [vmem:[%s2344 + $0x170] sm:$0xff]
    %v2392 = vld [vmem:[%s2344 + $0x178] sm:$0xff]
    %v2393 = vld [vmem:[%s2344 + $0x180] sm:$0xff]
    %v2394 = vld [vmem:[%s2344 + $0x188] sm:$0xff]
    %v2395 = vld [vmem:[%s2344 + $0x190] sm:$0xff]
    %v2396 = vld [vmem:[%s2344 + $0x198] sm:$0xff]
    %v2397 = vld [vmem:[%s2344 + $0x1a0] sm:$0xff]
    %v2398 = vld [vmem:[%s2344 + $0x1a8] sm:$0xff]
    %v2399 = vld [vmem:[%s2344 + $0x1b0] sm:$0xff]
    %v2400 = vld [vmem:[%s2344 + $0x1b8] sm:$0xff]
    %v2401 = vld [vmem:[%s2344 + $0x1c0] sm:$0xff]
    %v2402 = vld [vmem:[%s2344 + $0x1c8] sm:$0xff]
    %v2403 = vld [vmem:[%s2344 + $0x1d0] sm:$0xff]
    %v2404 = vld [vmem:[%s2344 + $0x1d8] sm:$0xff]
    %v2405 = vld [vmem:[%s2344 + $0x1e0] sm:$0xff]
    %v2406 = vld [vmem:[%s2344 + $0x1e8] sm:$0xff]
    %v2407 = vld [vmem:[%s2344 + $0x1f0] sm:$0xff]
    %v2408 = vld [vmem:[%s2344 + $0x1f8] sm:$0xff]
    %v2473 = vunpack.c.l.b16 %v2345
    %v2474 = vunpack.c.h.b16 %v2345
    %v2475 = vunpack.c.l.b16 %v2346
    %v2476 = vunpack.c.h.b16 %v2346
    %v2477 = vunpack.c.l.b16 %v2347
    %v2478 = vunpack.c.h.b16 %v2347
    %v2479 = vunpack.c.l.b16 %v2348
    %v2480 = vunpack.c.h.b16 %v2348
    %v2481 = vunpack.c.l.b16 %v2349
    %v2482 = vunpack.c.h.b16 %v2349
    %v2483 = vunpack.c.l.b16 %v2350
    %v2484 = vunpack.c.h.b16 %v2350
    %v2485 = vunpack.c.l.b16 %v2351
    %v2486 = vunpack.c.h.b16 %v2351
    %v2487 = vunpack.c.l.b16 %v2352
    %v2488 = vunpack.c.h.b16 %v2352
    %v2489 = vunpack.c.l.b16 %v2353
    %v2490 = vunpack.c.h.b16 %v2353
    %v2491 = vunpack.c.l.b16 %v2354
    %v2492 = vunpack.c.h.b16 %v2354
    %v2493 = vunpack.c.l.b16 %v2355
    %v2494 = vunpack.c.h.b16 %v2355
    %v2495 = vunpack.c.l.b16 %v2356
    %v2496 = vunpack.c.h.b16 %v2356
    %v2497 = vunpack.c.l.b16 %v2357
    %v2498 = vunpack.c.h.b16 %v2357
    %v2499 = vunpack.c.l.b16 %v2358
    %v2500 = vunpack.c.h.b16 %v2358
    %v2501 = vunpack.c.l.b16 %v2359
    %v2502 = vunpack.c.h.b16 %v2359
    %v2503 = vunpack.c.l.b16 %v2360
    %v2504 = vunpack.c.h.b16 %v2360
    %v2505 = vunpack.c.l.b16 %v2361
    %v2506 = vunpack.c.h.b16 %v2361
    %v2507 = vunpack.c.l.b16 %v2362
    %v2508 = vunpack.c.h.b16 %v2362
    %v2509 = vunpack.c.l.b16 %v2363
    %v2510 = vunpack.c.h.b16 %v2363
    %v2511 = vunpack.c.l.b16 %v2364
    %v2512 = vunpack.c.h.b16 %v2364
    %v2513 = vunpack.c.l.b16 %v2365
    %v2514 = vunpack.c.h.b16 %v2365
    %v2515 = vunpack.c.l.b16 %v2366
    %v2516 = vunpack.c.h.b16 %v2366
    %v2517 = vunpack.c.l.b16 %v2367
    %v2518 = vunpack.c.h.b16 %v2367
    %v2519 = vunpack.c.l.b16 %v2368
    %v2520 = vunpack.c.h.b16 %v2368
    %v2521 = vunpack.c.l.b16 %v2369
    %v2522 = vunpack.c.h.b16 %v2369
    %v2523 = vunpack.c.l.b16 %v2370
    %v2524 = vunpack.c.h.b16 %v2370
    %v2525 = vunpack.c.l.b16 %v2371
    %v2526 = vunpack.c.h.b16 %v2371
    %v2527 = vunpack.c.l.b16 %v2372
    %v2528 = vunpack.c.h.b16 %v2372
    %v2529 = vunpack.c.l.b16 %v2373
    %v2530 = vunpack.c.h.b16 %v2373
    %v2531 = vunpack.c.l.b16 %v2374
    %v2532 = vunpack.c.h.b16 %v2374
    %v2533 = vunpack.c.l.b16 %v2375
    %v2534 = vunpack.c.h.b16 %v2375
    %v2535 = vunpack.c.l.b16 %v2376
    %v2536 = vunpack.c.h.b16 %v2376
    %v2537 = vunpack.c.l.b16 %v2377
    %v2538 = vunpack.c.h.b16 %v2377
    %v2539 = vunpack.c.l.b16 %v2378
    %v2540 = vunpack.c.h.b16 %v2378
    %v2541 = vunpack.c.l.b16 %v2379
    %v2542 = vunpack.c.h.b16 %v2379
    %v2543 = vunpack.c.l.b16 %v2380
    %v2544 = vunpack.c.h.b16 %v2380
    %v2545 = vunpack.c.l.b16 %v2381
    %v2546 = vunpack.c.h.b16 %v2381
    %v2547 = vunpack.c.l.b16 %v2382
    %v2548 = vunpack.c.h.b16 %v2382
    %v2549 = vunpack.c.l.b16 %v2383
    %v2550 = vunpack.c.h.b16 %v2383
    %v2551 = vunpack.c.l.b16 %v2384
    %v2552 = vunpack.c.h.b16 %v2384
    %v2553 = vunpack.c.l.b16 %v2385
    %v2554 = vunpack.c.h.b16 %v2385
    %v2555 = vunpack.c.l.b16 %v2386
    %v2556 = vunpack.c.h.b16 %v2386
    %v2557 = vunpack.c.l.b16 %v2387
    %v2558 = vunpack.c.h.b16 %v2387
    %v2559 = vunpack.c.l.b16 %v2388
    %v2560 = vunpack.c.h.b16 %v2388
    %v2561 = vunpack.c.l.b16 %v2389
    %v2562 = vunpack.c.h.b16 %v2389
    %v2563 = vunpack.c.l.b16 %v2390
    %v2564 = vunpack.c.h.b16 %v2390
    %v2565 = vunpack.c.l.b16 %v2391
    %v2566 = vunpack.c.h.b16 %v2391
    %v2567 = vunpack.c.l.b16 %v2392
    %v2568 = vunpack.c.h.b16 %v2392
    %v2569 = vunpack.c.l.b16 %v2393
    %v2570 = vunpack.c.h.b16 %v2393
    %v2571 = vunpack.c.l.b16 %v2394
    %v2572 = vunpack.c.h.b16 %v2394
    %v2573 = vunpack.c.l.b16 %v2395
    %v2574 = vunpack.c.h.b16 %v2395
    %v2575 = vunpack.c.l.b16 %v2396
    %v2576 = vunpack.c.h.b16 %v2396
    %v2577 = vunpack.c.l.b16 %v2397
    %v2578 = vunpack.c.h.b16 %v2397
    %v2579 = vunpack.c.l.b16 %v2398
    %v2580 = vunpack.c.h.b16 %v2398
    %v2581 = vunpack.c.l.b16 %v2399
    %v2582 = vunpack.c.h.b16 %v2399
    %v2583 = vunpack.c.l.b16 %v2400
    %v2584 = vunpack.c.h.b16 %v2400
    %v2585 = vunpack.c.l.b16 %v2401
    %v2586 = vunpack.c.h.b16 %v2401
    %v2587 = vunpack.c.l.b16 %v2402
    %v2588 = vunpack.c.h.b16 %v2402
    %v2589 = vunpack.c.l.b16 %v2403
    %v2590 = vunpack.c.h.b16 %v2403
    %v2591 = vunpack.c.l.b16 %v2404
    %v2592 = vunpack.c.h.b16 %v2404
    %v2593 = vunpack.c.l.b16 %v2405
    %v2594 = vunpack.c.h.b16 %v2405
    %v2595 = vunpack.c.l.b16 %v2406
    %v2596 = vunpack.c.h.b16 %v2406
    %v2597 = vunpack.c.l.b16 %v2407
    %v2598 = vunpack.c.h.b16 %v2407
    %v2599 = vunpack.c.l.b16 %v2408
    %v2600 = vunpack.c.h.b16 %v2408
    %v2601 = vpack.c.b16 %v2477, %v2473
    %v2602 = vpack.c.b16 %v2478, %v2474
    %v2603 = vpack.c.b16 %v2479, %v2475
    %v2604 = vpack.c.b16 %v2480, %v2476
    %v2605 = vpack.c.b16 %v2485, %v2481
    %v2606 = vpack.c.b16 %v2486, %v2482
    %v2607 = vpack.c.b16 %v2487, %v2483
    %v2608 = vpack.c.b16 %v2488, %v2484
    %v2609 = vpack.c.b16 %v2493, %v2489
    %v2610 = vpack.c.b16 %v2494, %v2490
    %v2611 = vpack.c.b16 %v2495, %v2491
    %v2612 = vpack.c.b16 %v2496, %v2492
    %v2613 = vpack.c.b16 %v2501, %v2497
    %v2614 = vpack.c.b16 %v2502, %v2498
    %v2615 = vpack.c.b16 %v2503, %v2499
    %v2616 = vpack.c.b16 %v2504, %v2500
    %v2617 = vpack.c.b16 %v2509, %v2505
    %v2618 = vpack.c.b16 %v2510, %v2506
    %v2619 = vpack.c.b16 %v2511, %v2507
    %v2620 = vpack.c.b16 %v2512, %v2508
    %v2621 = vpack.c.b16 %v2517, %v2513
    %v2622 = vpack.c.b16 %v2518, %v2514
    %v2623 = vpack.c.b16 %v2519, %v2515
    %v2624 = vpack.c.b16 %v2520, %v2516
    %v2625 = vpack.c.b16 %v2525, %v2521
    %v2626 = vpack.c.b16 %v2526, %v2522
    %v2627 = vpack.c.b16 %v2527, %v2523
    %v2628 = vpack.c.b16 %v2528, %v2524
    %v2629 = vpack.c.b16 %v2533, %v2529
    %v2630 = vpack.c.b16 %v2534, %v2530
    %v2631 = vpack.c.b16 %v2535, %v2531
    %v2632 = vpack.c.b16 %v2536, %v2532
    %v2633 = vpack.c.b16 %v2541, %v2537
    %v2634 = vpack.c.b16 %v2542, %v2538
    %v2635 = vpack.c.b16 %v2543, %v2539
    %v2636 = vpack.c.b16 %v2544, %v2540
    %v2637 = vpack.c.b16 %v2549, %v2545
    %v2638 = vpack.c.b16 %v2550, %v2546
    %v2639 = vpack.c.b16 %v2551, %v2547
    %v2640 = vpack.c.b16 %v2552, %v2548
    %v2641 = vpack.c.b16 %v2557, %v2553
    %v2642 = vpack.c.b16 %v2558, %v2554
    %v2643 = vpack.c.b16 %v2559, %v2555
    %v2644 = vpack.c.b16 %v2560, %v2556
    %v2645 = vpack.c.b16 %v2565, %v2561
    %v2646 = vpack.c.b16 %v2566, %v2562
    %v2647 = vpack.c.b16 %v2567, %v2563
    %v2648 = vpack.c.b16 %v2568, %v2564
    %v2649 = vpack.c.b16 %v2573, %v2569
    %v2650 = vpack.c.b16 %v2574, %v2570
    %v2651 = vpack.c.b16 %v2575, %v2571
    %v2652 = vpack.c.b16 %v2576, %v2572
    %v2653 = vpack.c.b16 %v2581, %v2577
    %v2654 = vpack.c.b16 %v2582, %v2578
    %v2655 = vpack.c.b16 %v2583, %v2579
    %v2656 = vpack.c.b16 %v2584, %v2580
    %v2657 = vpack.c.b16 %v2589, %v2585
    %v2658 = vpack.c.b16 %v2590, %v2586
    %v2659 = vpack.c.b16 %v2591, %v2587
    %v2660 = vpack.c.b16 %v2592, %v2588
    %v2661 = vpack.c.b16 %v2597, %v2593
    %v2662 = vpack.c.b16 %v2598, %v2594
    %v2663 = vpack.c.b16 %v2599, %v2595
    %v2664 = vpack.c.b16 %v2600, %v2596
    %2729 = vmatprep.subr.bf16.mxu0 %v2630
    %2730 = vmatpush1.bf16.msra.mxu0 %v2629
    %2731 = vmatprep.subr.bf16.mxu0 %v2626
    %2732 = vmatpush1.bf16.msra.mxu0 %v2625
    %2733 = vmatprep.subr.bf16.mxu0 %v2622
    %2734 = vmatpush1.bf16.msra.mxu0 %v2621
    %2735 = vmatprep.subr.bf16.mxu0 %v2618
    %2736 = vmatpush1.bf16.msra.mxu0 %v2617
    %2737 = vmatprep.subr.bf16.mxu0 %v2614
    %2738 = vmatpush1.bf16.msra.mxu0 %v2613
    %2739 = vmatprep.subr.bf16.mxu0 %v2610
    %2740 = vmatpush1.bf16.msra.mxu0 %v2609
    %2741 = vmatprep.subr.bf16.mxu0 %v2606
    %2742 = vmatpush1.bf16.msra.mxu0 %v2605
    %2743 = vmatprep.subr.bf16.mxu0 %v2602
    %2744 = vmatpush1.bf16.msra.mxu0 %v2601
    %2745 = vmatprep.subr.bf16.mxu0 %v2662
    %2746 = vmatpush2.bf16.msra.mxu0 %v2661
    %2747 = vmatprep.subr.bf16.mxu0 %v2658
    %2748 = vmatpush2.bf16.msra.mxu0 %v2657
    %2749 = vmatprep.subr.bf16.mxu0 %v2654
    %2750 = vmatpush2.bf16.msra.mxu0 %v2653
    %2751 = vmatprep.subr.bf16.mxu0 %v2650
    %2752 = vmatpush2.bf16.msra.mxu0 %v2649
    %2753 = vmatprep.subr.bf16.mxu0 %v2646
    %2754 = vmatpush2.bf16.msra.mxu0 %v2645
    %2755 = vmatprep.subr.bf16.mxu0 %v2642
    %2756 = vmatpush2.bf16.msra.mxu0 %v2641
    %2757 = vmatprep.subr.bf16.mxu0 %v2638
    %2758 = vmatpush2.bf16.msra.mxu0 %v2637
    %2759 = vmatprep.subr.bf16.mxu0 %v2634
    %2760 = vmatpush2.bf16.msra.mxu0 %v2633
    %2761 = vmatprep.mubr.bf16.mxu0 %v2331
    %2762 = vmatmul.mubr.bf16.gmra.mxu0 %v2330
    %v2763 = vpop.f32.mrf.mxu0
    %v2764 = vadd.f32 0.0, %v2763
    %v2765 = vpop.f32.mrf.mxu0
    %v2766 = vadd.f32 0.0, %v2765
    %v2767 = vpop.f32.mrf.mxu0
    %v2768 = vadd.f32 0.0, %v2767
    %v2769 = vpop.f32.mrf.mxu0
    %v2770 = vadd.f32 0.0, %v2769
    %2771 = vmatprep.mubr.bf16.mxu0 %v2333
    %2772 = vmatmul.mubr.bf16.gmra.mxu0 %v2332
    %v2773 = vpop.f32.mrf.mxu0
    %v2774 = vadd.f32 0.0, %v2773
    %v2775 = vpop.f32.mrf.mxu0
    %v2776 = vadd.f32 0.0, %v2775
    %v2777 = vpop.f32.mrf.mxu0
    %v2778 = vadd.f32 0.0, %v2777
    %v2779 = vpop.f32.mrf.mxu0
    %v2780 = vadd.f32 0.0, %v2779
    %2781 = vmatprep.mubr.bf16.mxu0 %v2335
    %2782 = vmatmul.mubr.bf16.gmra.mxu0 %v2334
    %v2783 = vpop.f32.mrf.mxu0
    %v2784 = vadd.f32 0.0, %v2783
    %v2785 = vpop.f32.mrf.mxu0
    %v2786 = vadd.f32 0.0, %v2785
    %v2787 = vpop.f32.mrf.mxu0
    %v2788 = vadd.f32 0.0, %v2787
    %v2789 = vpop.f32.mrf.mxu0
    %v2790 = vadd.f32 0.0, %v2789
    %2791 = vmatprep.mubr.bf16.mxu0 %v2337
    %2792 = vmatmul.mubr.bf16.gmra.mxu0 %v2336
    %v2793 = vpop.f32.mrf.mxu0
    %v2794 = vadd.f32 0.0, %v2793
    %v2795 = vpop.f32.mrf.mxu0
    %v2796 = vadd.f32 0.0, %v2795
    %v2797 = vpop.f32.mrf.mxu0
    %v2798 = vadd.f32 0.0, %v2797
    %v2799 = vpop.f32.mrf.mxu0
    %v2800 = vadd.f32 0.0, %v2799
    %2801 = vmatprep.mubr.bf16.mxu0 %v2339
    %2802 = vmatmul.mubr.bf16.gmra.mxu0 %v2338
    %v2803 = vpop.f32.mrf.mxu0
    %v2804 = vadd.f32 0.0, %v2803
    %v2805 = vpop.f32.mrf.mxu0
    %v2806 = vadd.f32 0.0, %v2805
    %v2807 = vpop.f32.mrf.mxu0
    %v2808 = vadd.f32 0.0, %v2807
    %v2809 = vpop.f32.mrf.mxu0
    %v2810 = vadd.f32 0.0, %v2809
    %2811 = vmatprep.mubr.bf16.mxu0 %v2341
    %2812 = vmatmul.mubr.bf16.gmra.mxu0 %v2340
    %v2813 = vpop.f32.mrf.mxu0
    %v2814 = vadd.f32 0.0, %v2813
    %v2815 = vpop.f32.mrf.mxu0
    %v2816 = vadd.f32 0.0, %v2815
    %v2817 = vpop.f32.mrf.mxu0
    %v2818 = vadd.f32 0.0, %v2817
    %v2819 = vpop.f32.mrf.mxu0
    %v2820 = vadd.f32 0.0, %v2819
    %2821 = vmatprep.mubr.bf16.mxu0 %v2343
    %2822 = vmatmul.mubr.bf16.gmra.mxu0 %v2342
    %v2823 = vpop.f32.mrf.mxu0
    %v2824 = vpop.f32.mrf.mxu0
    %v2825 = vpop.f32.mrf.mxu0
    %v2826 = vpop.f32.mrf.mxu0
    %2827 = vdwg.mxu0
    %2828 = vmatprep.subr.bf16.mxu0 %v2632
    %2829 = vmatpush1.bf16.msra.mxu0 %v2631
    %2830 = vmatprep.subr.bf16.mxu0 %v2628
    %2831 = vmatpush1.bf16.msra.mxu0 %v2627
    %2832 = vmatprep.subr.bf16.mxu0 %v2624
    %2833 = vmatpush1.bf16.msra.mxu0 %v2623
    %2834 = vmatprep.subr.bf16.mxu0 %v2620
    %2835 = vmatpush1.bf16.msra.mxu0 %v2619
    %2836 = vmatprep.subr.bf16.mxu0 %v2616
    %2837 = vmatpush1.bf16.msra.mxu0 %v2615
    %2838 = vmatprep.subr.bf16.mxu0 %v2612
    %2839 = vmatpush1.bf16.msra.mxu0 %v2611
    %2840 = vmatprep.subr.bf16.mxu0 %v2608
    %2841 = vmatpush1.bf16.msra.mxu0 %v2607
    %2842 = vmatprep.subr.bf16.mxu0 %v2604
    %2843 = vmatpush1.bf16.msra.mxu0 %v2603
    %2844 = vmatprep.subr.bf16.mxu0 %v2664
    %2845 = vmatpush2.bf16.msra.mxu0 %v2663
    %2846 = vmatprep.subr.bf16.mxu0 %v2660
    %2847 = vmatpush2.bf16.msra.mxu0 %v2659
    %2848 = vmatprep.subr.bf16.mxu0 %v2656
    %2849 = vmatpush2.bf16.msra.mxu0 %v2655
    %2850 = vmatprep.subr.bf16.mxu0 %v2652
    %2851 = vmatpush2.bf16.msra.mxu0 %v2651
    %2852 = vmatprep.subr.bf16.mxu0 %v2648
    %2853 = vmatpush2.bf16.msra.mxu0 %v2647
    %2854 = vmatprep.subr.bf16.mxu0 %v2644
    %2855 = vmatpush2.bf16.msra.mxu0 %v2643
    %2856 = vmatprep.subr.bf16.mxu0 %v2640
    %2857 = vmatpush2.bf16.msra.mxu0 %v2639
    %2858 = vmatprep.subr.bf16.mxu0 %v2636
    %2859 = vmatpush2.bf16.msra.mxu0 %v2635
    %2860 = vmatprep.mubr.bf16.mxu0 %v2331
    %2861 = vmatmul.mubr.bf16.gmra.mxu0 %v2330
    %v2862 = vpop.f32.mrf.mxu0
    %v2863 = vadd.f32 0.0, %v2862
    %v2864 = vpop.f32.mrf.mxu0
    %v2865 = vadd.f32 0.0, %v2864
    %v2866 = vpop.f32.mrf.mxu0
    %v2867 = vadd.f32 0.0, %v2866
    %v2868 = vpop.f32.mrf.mxu0
    %v2869 = vadd.f32 0.0, %v2868
    %2870 = vmatprep.mubr.bf16.mxu0 %v2333
    %2871 = vmatmul.mubr.bf16.gmra.mxu0 %v2332
    %v2872 = vpop.f32.mrf.mxu0
    %v2873 = vadd.f32 0.0, %v2872
    %v2874 = vpop.f32.mrf.mxu0
    %v2875 = vadd.f32 0.0, %v2874
    %v2876 = vpop.f32.mrf.mxu0
    %v2877 = vadd.f32 0.0, %v2876
    %v2878 = vpop.f32.mrf.mxu0
    %v2879 = vadd.f32 0.0, %v2878
    %2880 = vmatprep.mubr.bf16.mxu0 %v2335
    %2881 = vmatmul.mubr.bf16.gmra.mxu0 %v2334
    %v2882 = vpop.f32.mrf.mxu0
    %v2883 = vadd.f32 0.0, %v2882
    %v2884 = vpop.f32.mrf.mxu0
    %v2885 = vadd.f32 0.0, %v2884
    %v2886 = vpop.f32.mrf.mxu0
    %v2887 = vadd.f32 0.0, %v2886
    %v2888 = vpop.f32.mrf.mxu0
    %v2889 = vadd.f32 0.0, %v2888
    %2890 = vmatprep.mubr.bf16.mxu0 %v2337
    %2891 = vmatmul.mubr.bf16.gmra.mxu0 %v2336
    %v2892 = vpop.f32.mrf.mxu0
    %v2893 = vadd.f32 0.0, %v2892
    %v2894 = vpop.f32.mrf.mxu0
    %v2895 = vadd.f32 0.0, %v2894
    %v2896 = vpop.f32.mrf.mxu0
    %v2897 = vadd.f32 0.0, %v2896
    %v2898 = vpop.f32.mrf.mxu0
    %v2899 = vadd.f32 0.0, %v2898
    %2900 = vmatprep.mubr.bf16.mxu0 %v2339
    %2901 = vmatmul.mubr.bf16.gmra.mxu0 %v2338
    %v2902 = vpop.f32.mrf.mxu0
    %v2903 = vadd.f32 0.0, %v2902
    %v2904 = vpop.f32.mrf.mxu0
    %v2905 = vadd.f32 0.0, %v2904
    %v2906 = vpop.f32.mrf.mxu0
    %v2907 = vadd.f32 0.0, %v2906
    %v2908 = vpop.f32.mrf.mxu0
    %v2909 = vadd.f32 0.0, %v2908
    %2910 = vmatprep.mubr.bf16.mxu0 %v2341
    %2911 = vmatmul.mubr.bf16.gmra.mxu0 %v2340
    %v2912 = vpop.f32.mrf.mxu0
    %v2913 = vadd.f32 0.0, %v2912
    %v2914 = vpop.f32.mrf.mxu0
    %v2915 = vadd.f32 0.0, %v2914
    %v2916 = vpop.f32.mrf.mxu0
    %v2917 = vadd.f32 0.0, %v2916
    %v2918 = vpop.f32.mrf.mxu0
    %v2919 = vadd.f32 0.0, %v2918
    %2920 = vmatprep.mubr.bf16.mxu0 %v2343
    %2921 = vmatmul.mubr.bf16.gmra.mxu0 %v2342
    %v2922 = vpop.f32.mrf.mxu0
    %v2923 = vpop.f32.mrf.mxu0
    %v2924 = vpop.f32.mrf.mxu0
    %v2925 = vpop.f32.mrf.mxu0
    %2926 = vdwg.mxu0
    %v2991 = vunpack.c.l.b16 %v2266
    %v2992 = vunpack.c.h.b16 %v2266
    %v2993 = vunpack.c.l.b16 %v2267
    %v2994 = vunpack.c.h.b16 %v2267
    %v2995 = vunpack.c.l.b16 %v2268
    %v2996 = vunpack.c.h.b16 %v2268
    %v2997 = vunpack.c.l.b16 %v2269
    %v2998 = vunpack.c.h.b16 %v2269
    %v2999 = vunpack.c.l.b16 %v2270
    %v3000 = vunpack.c.h.b16 %v2270
    %v3001 = vunpack.c.l.b16 %v2271
    %v3002 = vunpack.c.h.b16 %v2271
    %v3003 = vunpack.c.l.b16 %v2272
    %v3004 = vunpack.c.h.b16 %v2272
    %v3005 = vunpack.c.l.b16 %v2273
    %v3006 = vunpack.c.h.b16 %v2273
    %v3007 = vunpack.c.l.b16 %v2274
    %v3008 = vunpack.c.h.b16 %v2274
    %v3009 = vunpack.c.l.b16 %v2275
    %v3010 = vunpack.c.h.b16 %v2275
    %v3011 = vunpack.c.l.b16 %v2276
    %v3012 = vunpack.c.h.b16 %v2276
    %v3013 = vunpack.c.l.b16 %v2277
    %v3014 = vunpack.c.h.b16 %v2277
    %v3015 = vunpack.c.l.b16 %v2278
    %v3016 = vunpack.c.h.b16 %v2278
    %v3017 = vunpack.c.l.b16 %v2279
    %v3018 = vunpack.c.h.b16 %v2279
    %v3019 = vunpack.c.l.b16 %v2280
    %v3020 = vunpack.c.h.b16 %v2280
    %v3021 = vunpack.c.l.b16 %v2281
    %v3022 = vunpack.c.h.b16 %v2281
    %v3023 = vunpack.c.l.b16 %v2282
    %v3024 = vunpack.c.h.b16 %v2282
    %v3025 = vunpack.c.l.b16 %v2283
    %v3026 = vunpack.c.h.b16 %v2283
    %v3027 = vunpack.c.l.b16 %v2284
    %v3028 = vunpack.c.h.b16 %v2284
    %v3029 = vunpack.c.l.b16 %v2285
    %v3030 = vunpack.c.h.b16 %v2285
    %v3031 = vunpack.c.l.b16 %v2286
    %v3032 = vunpack.c.h.b16 %v2286
    %v3033 = vunpack.c.l.b16 %v2287
    %v3034 = vunpack.c.h.b16 %v2287
    %v3035 = vunpack.c.l.b16 %v2288
    %v3036 = vunpack.c.h.b16 %v2288
    %v3037 = vunpack.c.l.b16 %v2289
    %v3038 = vunpack.c.h.b16 %v2289
    %v3039 = vunpack.c.l.b16 %v2290
    %v3040 = vunpack.c.h.b16 %v2290
    %v3041 = vunpack.c.l.b16 %v2291
    %v3042 = vunpack.c.h.b16 %v2291
    %v3043 = vunpack.c.l.b16 %v2292
    %v3044 = vunpack.c.h.b16 %v2292
    %v3045 = vunpack.c.l.b16 %v2293
    %v3046 = vunpack.c.h.b16 %v2293
    %v3047 = vunpack.c.l.b16 %v2294
    %v3048 = vunpack.c.h.b16 %v2294
    %v3049 = vunpack.c.l.b16 %v2295
    %v3050 = vunpack.c.h.b16 %v2295
    %v3051 = vunpack.c.l.b16 %v2296
    %v3052 = vunpack.c.h.b16 %v2296
    %v3053 = vunpack.c.l.b16 %v2297
    %v3054 = vunpack.c.h.b16 %v2297
    %v3055 = vunpack.c.l.b16 %v2298
    %v3056 = vunpack.c.h.b16 %v2298
    %v3057 = vunpack.c.l.b16 %v2299
    %v3058 = vunpack.c.h.b16 %v2299
    %v3059 = vunpack.c.l.b16 %v2300
    %v3060 = vunpack.c.h.b16 %v2300
    %v3061 = vunpack.c.l.b16 %v2301
    %v3062 = vunpack.c.h.b16 %v2301
    %v3063 = vunpack.c.l.b16 %v2302
    %v3064 = vunpack.c.h.b16 %v2302
    %v3065 = vunpack.c.l.b16 %v2303
    %v3066 = vunpack.c.h.b16 %v2303
    %v3067 = vunpack.c.l.b16 %v2304
    %v3068 = vunpack.c.h.b16 %v2304
    %v3069 = vunpack.c.l.b16 %v2305
    %v3070 = vunpack.c.h.b16 %v2305
    %v3071 = vunpack.c.l.b16 %v2306
    %v3072 = vunpack.c.h.b16 %v2306
    %v3073 = vunpack.c.l.b16 %v2307
    %v3074 = vunpack.c.h.b16 %v2307
    %v3075 = vunpack.c.l.b16 %v2308
    %v3076 = vunpack.c.h.b16 %v2308
    %v3077 = vunpack.c.l.b16 %v2309
    %v3078 = vunpack.c.h.b16 %v2309
    %v3079 = vunpack.c.l.b16 %v2310
    %v3080 = vunpack.c.h.b16 %v2310
    %v3081 = vunpack.c.l.b16 %v2311
    %v3082 = vunpack.c.h.b16 %v2311
    %v3083 = vunpack.c.l.b16 %v2312
    %v3084 = vunpack.c.h.b16 %v2312
    %v3085 = vunpack.c.l.b16 %v2313
    %v3086 = vunpack.c.h.b16 %v2313
    %v3087 = vunpack.c.l.b16 %v2314
    %v3088 = vunpack.c.h.b16 %v2314
    %v3089 = vunpack.c.l.b16 %v2315
    %v3090 = vunpack.c.h.b16 %v2315
    %v3091 = vunpack.c.l.b16 %v2316
    %v3092 = vunpack.c.h.b16 %v2316
    %v3093 = vunpack.c.l.b16 %v2317
    %v3094 = vunpack.c.h.b16 %v2317
    %v3095 = vunpack.c.l.b16 %v2318
    %v3096 = vunpack.c.h.b16 %v2318
    %v3097 = vunpack.c.l.b16 %v2319
    %v3098 = vunpack.c.h.b16 %v2319
    %v3099 = vunpack.c.l.b16 %v2320
    %v3100 = vunpack.c.h.b16 %v2320
    %v3101 = vunpack.c.l.b16 %v2321
    %v3102 = vunpack.c.h.b16 %v2321
    %v3103 = vunpack.c.l.b16 %v2322
    %v3104 = vunpack.c.h.b16 %v2322
    %v3105 = vunpack.c.l.b16 %v2323
    %v3106 = vunpack.c.h.b16 %v2323
    %v3107 = vunpack.c.l.b16 %v2324
    %v3108 = vunpack.c.h.b16 %v2324
    %v3109 = vunpack.c.l.b16 %v2325
    %v3110 = vunpack.c.h.b16 %v2325
    %v3111 = vunpack.c.l.b16 %v2326
    %v3112 = vunpack.c.h.b16 %v2326
    %v3113 = vunpack.c.l.b16 %v2327
    %v3114 = vunpack.c.h.b16 %v2327
    %v3115 = vunpack.c.l.b16 %v2328
    %v3116 = vunpack.c.h.b16 %v2328
    %v3117 = vunpack.c.l.b16 %v2329
    %v3118 = vunpack.c.h.b16 %v2329
    %v3119 = vpack.c.b16 %v2995, %v2991
    %v3120 = vpack.c.b16 %v2996, %v2992
    %v3121 = vpack.c.b16 %v2997, %v2993
    %v3122 = vpack.c.b16 %v2998, %v2994
    %v3123 = vpack.c.b16 %v3003, %v2999
    %v3124 = vpack.c.b16 %v3004, %v3000
    %v3125 = vpack.c.b16 %v3005, %v3001
    %v3126 = vpack.c.b16 %v3006, %v3002
    %v3127 = vpack.c.b16 %v3011, %v3007
    %v3128 = vpack.c.b16 %v3012, %v3008
    %v3129 = vpack.c.b16 %v3013, %v3009
    %v3130 = vpack.c.b16 %v3014, %v3010
    %v3131 = vpack.c.b16 %v3019, %v3015
    %v3132 = vpack.c.b16 %v3020, %v3016
    %v3133 = vpack.c.b16 %v3021, %v3017
    %v3134 = vpack.c.b16 %v3022, %v3018
    %v3135 = vpack.c.b16 %v3027, %v3023
    %v3136 = vpack.c.b16 %v3028, %v3024
    %v3137 = vpack.c.b16 %v3029, %v3025
    %v3138 = vpack.c.b16 %v3030, %v3026
    %v3139 = vpack.c.b16 %v3035, %v3031
    %v3140 = vpack.c.b16 %v3036, %v3032
    %v3141 = vpack.c.b16 %v3037, %v3033
    %v3142 = vpack.c.b16 %v3038, %v3034
    %v3143 = vpack.c.b16 %v3043, %v3039
    %v3144 = vpack.c.b16 %v3044, %v3040
    %v3145 = vpack.c.b16 %v3045, %v3041
    %v3146 = vpack.c.b16 %v3046, %v3042
    %v3147 = vpack.c.b16 %v3051, %v3047
    %v3148 = vpack.c.b16 %v3052, %v3048
    %v3149 = vpack.c.b16 %v3053, %v3049
    %v3150 = vpack.c.b16 %v3054, %v3050
    %v3151 = vpack.c.b16 %v3059, %v3055
    %v3152 = vpack.c.b16 %v3060, %v3056
    %v3153 = vpack.c.b16 %v3061, %v3057
    %v3154 = vpack.c.b16 %v3062, %v3058
    %v3155 = vpack.c.b16 %v3067, %v3063
    %v3156 = vpack.c.b16 %v3068, %v3064
    %v3157 = vpack.c.b16 %v3069, %v3065
    %v3158 = vpack.c.b16 %v3070, %v3066
    %v3159 = vpack.c.b16 %v3075, %v3071
    %v3160 = vpack.c.b16 %v3076, %v3072
    %v3161 = vpack.c.b16 %v3077, %v3073
    %v3162 = vpack.c.b16 %v3078, %v3074
    %v3163 = vpack.c.b16 %v3083, %v3079
    %v3164 = vpack.c.b16 %v3084, %v3080
    %v3165 = vpack.c.b16 %v3085, %v3081
    %v3166 = vpack.c.b16 %v3086, %v3082
    %v3167 = vpack.c.b16 %v3091, %v3087
    %v3168 = vpack.c.b16 %v3092, %v3088
    %v3169 = vpack.c.b16 %v3093, %v3089
    %v3170 = vpack.c.b16 %v3094, %v3090
    %v3171 = vpack.c.b16 %v3099, %v3095
    %v3172 = vpack.c.b16 %v3100, %v3096
    %v3173 = vpack.c.b16 %v3101, %v3097
    %v3174 = vpack.c.b16 %v3102, %v3098
    %v3175 = vpack.c.b16 %v3107, %v3103
    %v3176 = vpack.c.b16 %v3108, %v3104
    %v3177 = vpack.c.b16 %v3109, %v3105
    %v3178 = vpack.c.b16 %v3110, %v3106
    %v3179 = vpack.c.b16 %v3115, %v3111
    %v3180 = vpack.c.b16 %v3116, %v3112
    %v3181 = vpack.c.b16 %v3117, %v3113
    %v3182 = vpack.c.b16 %v3118, %v3114
    %3247 = vmatprep.subr.bf16.mxu0 %v3148
    %3248 = vmatpush1.bf16.msra.mxu0 %v3147
    %3249 = vmatprep.subr.bf16.mxu0 %v3144
    %3250 = vmatpush1.bf16.msra.mxu0 %v3143
    %3251 = vmatprep.subr.bf16.mxu0 %v3140
    %3252 = vmatpush1.bf16.msra.mxu0 %v3139
    %3253 = vmatprep.subr.bf16.mxu0 %v3136
    %3254 = vmatpush1.bf16.msra.mxu0 %v3135
    %3255 = vmatprep.subr.bf16.mxu0 %v3132
    %3256 = vmatpush1.bf16.msra.mxu0 %v3131
    %3257 = vmatprep.subr.bf16.mxu0 %v3128
    %3258 = vmatpush1.bf16.msra.mxu0 %v3127
    %3259 = vmatprep.subr.bf16.mxu0 %v3124
    %3260 = vmatpush1.bf16.msra.mxu0 %v3123
    %3261 = vmatprep.subr.bf16.mxu0 %v3120
    %3262 = vmatpush1.bf16.msra.mxu0 %v3119
    %3263 = vmatprep.subr.bf16.mxu0 %v3180
    %3264 = vmatpush2.bf16.msra.mxu0 %v3179
    %3265 = vmatprep.subr.bf16.mxu0 %v3176
    %3266 = vmatpush2.bf16.msra.mxu0 %v3175
    %3267 = vmatprep.subr.bf16.mxu0 %v3172
    %3268 = vmatpush2.bf16.msra.mxu0 %v3171
    %3269 = vmatprep.subr.bf16.mxu0 %v3168
    %3270 = vmatpush2.bf16.msra.mxu0 %v3167
    %3271 = vmatprep.subr.bf16.mxu0 %v3164
    %3272 = vmatpush2.bf16.msra.mxu0 %v3163
    %3273 = vmatprep.subr.bf16.mxu0 %v3160
    %3274 = vmatpush2.bf16.msra.mxu0 %v3159
    %3275 = vmatprep.subr.bf16.mxu0 %v3156
    %3276 = vmatpush2.bf16.msra.mxu0 %v3155
    %3277 = vmatprep.subr.bf16.mxu0 %v3152
    %3278 = vmatpush2.bf16.msra.mxu0 %v3151
    %3279 = vmatprep.mubr.bf16.mxu0 %v2253
    %3280 = vmatmul.mubr.bf16.gmra.mxu0 %v2252
    %v3281 = vpop.f32.mrf.mxu0
    %v3282 = vadd.f32 %v2764, %v3281
    %v3283 = vpop.f32.mrf.mxu0
    %v3284 = vadd.f32 %v2766, %v3283
    %v3285 = vpop.f32.mrf.mxu0
    %v3286 = vadd.f32 %v2768, %v3285
    %v3287 = vpop.f32.mrf.mxu0
    %v3288 = vadd.f32 %v2770, %v3287
    %3289 = vmatprep.mubr.bf16.mxu0 %v2255
    %3290 = vmatmul.mubr.bf16.gmra.mxu0 %v2254
    %v3291 = vpop.f32.mrf.mxu0
    %v3292 = vadd.f32 %v2774, %v3291
    %v3293 = vpop.f32.mrf.mxu0
    %v3294 = vadd.f32 %v2776, %v3293
    %v3295 = vpop.f32.mrf.mxu0
    %v3296 = vadd.f32 %v2778, %v3295
    %v3297 = vpop.f32.mrf.mxu0
    %v3298 = vadd.f32 %v2780, %v3297
    %3299 = vmatprep.mubr.bf16.mxu0 %v2257
    %3300 = vmatmul.mubr.bf16.gmra.mxu0 %v2256
    %v3301 = vpop.f32.mrf.mxu0
    %v3302 = vadd.f32 %v2784, %v3301
    %v3303 = vpop.f32.mrf.mxu0
    %v3304 = vadd.f32 %v2786, %v3303
    %v3305 = vpop.f32.mrf.mxu0
    %v3306 = vadd.f32 %v2788, %v3305
    %v3307 = vpop.f32.mrf.mxu0
    %v3308 = vadd.f32 %v2790, %v3307
    %3309 = vmatprep.mubr.bf16.mxu0 %v2259
    %3310 = vmatmul.mubr.bf16.gmra.mxu0 %v2258
    %v3311 = vpop.f32.mrf.mxu0
    %v3312 = vadd.f32 %v2794, %v3311
    %v3313 = vpop.f32.mrf.mxu0
    %v3314 = vadd.f32 %v2796, %v3313
    %v3315 = vpop.f32.mrf.mxu0
    %v3316 = vadd.f32 %v2798, %v3315
    %v3317 = vpop.f32.mrf.mxu0
    %v3318 = vadd.f32 %v2800, %v3317
    %3319 = vmatprep.mubr.bf16.mxu0 %v2261
    %3320 = vmatmul.mubr.bf16.gmra.mxu0 %v2260
    %v3321 = vpop.f32.mrf.mxu0
    %v3322 = vadd.f32 %v2804, %v3321
    %v3323 = vpop.f32.mrf.mxu0
    %v3324 = vadd.f32 %v2806, %v3323
    %v3325 = vpop.f32.mrf.mxu0
    %v3326 = vadd.f32 %v2808, %v3325
    %v3327 = vpop.f32.mrf.mxu0
    %v3328 = vadd.f32 %v2810, %v3327
    %3329 = vmatprep.mubr.bf16.mxu0 %v2263
    %3330 = vmatmul.mubr.bf16.gmra.mxu0 %v2262
    %v3331 = vpop.f32.mrf.mxu0
    %v3332 = vadd.f32 %v2814, %v3331
    %v3333 = vpop.f32.mrf.mxu0
    %v3334 = vadd.f32 %v2816, %v3333
    %v3335 = vpop.f32.mrf.mxu0
    %v3336 = vadd.f32 %v2818, %v3335
    %v3337 = vpop.f32.mrf.mxu0
    %v3338 = vadd.f32 %v2820, %v3337
    %3339 = vmatprep.mubr.bf16.mxu0 %v2265
    %3340 = vmatmul.mubr.bf16.gmra.mxu0 %v2264
    %v3341 = vpop.f32.mrf.mxu0
    %v3342 = vpop.f32.mrf.mxu0
    %v3343 = vpop.f32.mrf.mxu0
    %v3344 = vpop.f32.mrf.mxu0
    %3345 = vdwg.mxu0
    %3346 = vmatprep.subr.bf16.mxu0 %v3150
    %3347 = vmatpush1.bf16.msra.mxu0 %v3149
    %3348 = vmatprep.subr.bf16.mxu0 %v3146
    %3349 = vmatpush1.bf16.msra.mxu0 %v3145
    %3350 = vmatprep.subr.bf16.mxu0 %v3142
    %3351 = vmatpush1.bf16.msra.mxu0 %v3141
    %3352 = vmatprep.subr.bf16.mxu0 %v3138
    %3353 = vmatpush1.bf16.msra.mxu0 %v3137
    %3354 = vmatprep.subr.bf16.mxu0 %v3134
    %3355 = vmatpush1.bf16.msra.mxu0 %v3133
    %3356 = vmatprep.subr.bf16.mxu0 %v3130
    %3357 = vmatpush1.bf16.msra.mxu0 %v3129
    %3358 = vmatprep.subr.bf16.mxu0 %v3126
    %3359 = vmatpush1.bf16.msra.mxu0 %v3125
    %3360 = vmatprep.subr.bf16.mxu0 %v3122
    %3361 = vmatpush1.bf16.msra.mxu0 %v3121
    %3362 = vmatprep.subr.bf16.mxu0 %v3182
    %3363 = vmatpush2.bf16.msra.mxu0 %v3181
    %3364 = vmatprep.subr.bf16.mxu0 %v3178
    %3365 = vmatpush2.bf16.msra.mxu0 %v3177
    %3366 = vmatprep.subr.bf16.mxu0 %v3174
    %3367 = vmatpush2.bf16.msra.mxu0 %v3173
    %3368 = vmatprep.subr.bf16.mxu0 %v3170
    %3369 = vmatpush2.bf16.msra.mxu0 %v3169
    %3370 = vmatprep.subr.bf16.mxu0 %v3166
    %3371 = vmatpush2.bf16.msra.mxu0 %v3165
    %3372 = vmatprep.subr.bf16.mxu0 %v3162
    %3373 = vmatpush2.bf16.msra.mxu0 %v3161
    %3374 = vmatprep.subr.bf16.mxu0 %v3158
    %3375 = vmatpush2.bf16.msra.mxu0 %v3157
    %3376 = vmatprep.subr.bf16.mxu0 %v3154
    %3377 = vmatpush2.bf16.msra.mxu0 %v3153
    %3378 = vmatprep.mubr.bf16.mxu0 %v2253
    %3379 = vmatmul.mubr.bf16.gmra.mxu0 %v2252
    %v3380 = vpop.f32.mrf.mxu0
    %v3381 = vadd.f32 %v2863, %v3380
    %v3382 = vpop.f32.mrf.mxu0
    %v3383 = vadd.f32 %v2865, %v3382
    %v3384 = vpop.f32.mrf.mxu0
    %v3385 = vadd.f32 %v2867, %v3384
    %v3386 = vpop.f32.mrf.mxu0
    %v3387 = vadd.f32 %v2869, %v3386
    %3388 = vmatprep.mubr.bf16.mxu0 %v2255
    %3389 = vmatmul.mubr.bf16.gmra.mxu0 %v2254
    %v3390 = vpop.f32.mrf.mxu0
    %v3391 = vadd.f32 %v2873, %v3390
    %v3392 = vpop.f32.mrf.mxu0
    %v3393 = vadd.f32 %v2875, %v3392
    %v3394 = vpop.f32.mrf.mxu0
    %v3395 = vadd.f32 %v2877, %v3394
    %v3396 = vpop.f32.mrf.mxu0
    %v3397 = vadd.f32 %v2879, %v3396
    %3398 = vmatprep.mubr.bf16.mxu0 %v2257
    %3399 = vmatmul.mubr.bf16.gmra.mxu0 %v2256
    %v3400 = vpop.f32.mrf.mxu0
    %v3401 = vadd.f32 %v2883, %v3400
    %v3402 = vpop.f32.mrf.mxu0
    %v3403 = vadd.f32 %v2885, %v3402
    %v3404 = vpop.f32.mrf.mxu0
    %v3405 = vadd.f32 %v2887, %v3404
    %v3406 = vpop.f32.mrf.mxu0
    %v3407 = vadd.f32 %v2889, %v3406
    %3408 = vmatprep.mubr.bf16.mxu0 %v2259
    %3409 = vmatmul.mubr.bf16.gmra.mxu0 %v2258
    %v3410 = vpop.f32.mrf.mxu0
    %v3411 = vadd.f32 %v2893, %v3410
    %v3412 = vpop.f32.mrf.mxu0
    %v3413 = vadd.f32 %v2895, %v3412
    %v3414 = vpop.f32.mrf.mxu0
    %v3415 = vadd.f32 %v2897, %v3414
    %v3416 = vpop.f32.mrf.mxu0
    %v3417 = vadd.f32 %v2899, %v3416
    %3418 = vmatprep.mubr.bf16.mxu0 %v2261
    %3419 = vmatmul.mubr.bf16.gmra.mxu0 %v2260
    %v3420 = vpop.f32.mrf.mxu0
    %v3421 = vadd.f32 %v2903, %v3420
    %v3422 = vpop.f32.mrf.mxu0
    %v3423 = vadd.f32 %v2905, %v3422
    %v3424 = vpop.f32.mrf.mxu0
    %v3425 = vadd.f32 %v2907, %v3424
    %v3426 = vpop.f32.mrf.mxu0
    %v3427 = vadd.f32 %v2909, %v3426
    %3428 = vmatprep.mubr.bf16.mxu0 %v2263
    %3429 = vmatmul.mubr.bf16.gmra.mxu0 %v2262
    %v3430 = vpop.f32.mrf.mxu0
    %v3431 = vadd.f32 %v2913, %v3430
    %v3432 = vpop.f32.mrf.mxu0
    %v3433 = vadd.f32 %v2915, %v3432
    %v3434 = vpop.f32.mrf.mxu0
    %v3435 = vadd.f32 %v2917, %v3434
    %v3436 = vpop.f32.mrf.mxu0
    %v3437 = vadd.f32 %v2919, %v3436
    %3438 = vmatprep.mubr.bf16.mxu0 %v2265
    %3439 = vmatmul.mubr.bf16.gmra.mxu0 %v2264
    %v3440 = vpop.f32.mrf.mxu0
    %v3441 = vpop.f32.mrf.mxu0
    %v3442 = vpop.f32.mrf.mxu0
    %v3443 = vpop.f32.mrf.mxu0
    %3444 = vdwg.mxu0
    %v3445 = vpack.c.bf16 %v2248, %v2246
    %v3446 = vpack.c.bf16 %v2249, %v2247
    %v3447 = vpack.c.bf16 %v2250, %v2250
    %v3448 = vpack.c.bf16 %v2251, %v2251
    %s3449 = scalar_lea.vmem [#allocation4], 1024
    %v3450 = vld [vmem:[%s3449] sm:$0xff]
    %v3451 = vld [vmem:[%s3449 + $0x8] sm:$0xff]
    %v3452 = vld [vmem:[%s3449 + $0x10] sm:$0xff]
    %v3453 = vld [vmem:[%s3449 + $0x18] sm:$0xff]
    %v3454 = vld [vmem:[%s3449 + $0x20] sm:$0xff]
    %v3455 = vld [vmem:[%s3449 + $0x28] sm:$0xff]
    %v3456 = vld [vmem:[%s3449 + $0x30] sm:$0xff]
    %v3457 = vld [vmem:[%s3449 + $0x38] sm:$0xff]
    %v3458 = vld [vmem:[%s3449 + $0x40] sm:$0xff]
    %v3459 = vld [vmem:[%s3449 + $0x48] sm:$0xff]
    %v3460 = vld [vmem:[%s3449 + $0x50] sm:$0xff]
    %v3461 = vld [vmem:[%s3449 + $0x58] sm:$0xff]
    %v3462 = vld [vmem:[%s3449 + $0x60] sm:$0xff]
    %v3463 = vld [vmem:[%s3449 + $0x68] sm:$0xff]
    %v3464 = vld [vmem:[%s3449 + $0x70] sm:$0xff]
    %v3465 = vld [vmem:[%s3449 + $0x78] sm:$0xff]
    %v3466 = vld [vmem:[%s3449 + $0x80] sm:$0xff]
    %v3467 = vld [vmem:[%s3449 + $0x88] sm:$0xff]
    %v3468 = vld [vmem:[%s3449 + $0x90] sm:$0xff]
    %v3469 = vld [vmem:[%s3449 + $0x98] sm:$0xff]
    %v3470 = vld [vmem:[%s3449 + $0xa0] sm:$0xff]
    %v3471 = vld [vmem:[%s3449 + $0xa8] sm:$0xff]
    %v3472 = vld [vmem:[%s3449 + $0xb0] sm:$0xff]
    %v3473 = vld [vmem:[%s3449 + $0xb8] sm:$0xff]
    %v3474 = vld [vmem:[%s3449 + $0xc0] sm:$0xff]
    %v3475 = vld [vmem:[%s3449 + $0xc8] sm:$0xff]
    %v3476 = vld [vmem:[%s3449 + $0xd0] sm:$0xff]
    %v3477 = vld [vmem:[%s3449 + $0xd8] sm:$0xff]
    %v3478 = vld [vmem:[%s3449 + $0xe0] sm:$0xff]
    %v3479 = vld [vmem:[%s3449 + $0xe8] sm:$0xff]
    %v3480 = vld [vmem:[%s3449 + $0xf0] sm:$0xff]
    %v3481 = vld [vmem:[%s3449 + $0xf8] sm:$0xff]
    %v3482 = vld [vmem:[%s3449 + $0x100] sm:$0xff]
    %v3483 = vld [vmem:[%s3449 + $0x108] sm:$0xff]
    %v3484 = vld [vmem:[%s3449 + $0x110] sm:$0xff]
    %v3485 = vld [vmem:[%s3449 + $0x118] sm:$0xff]
    %v3486 = vld [vmem:[%s3449 + $0x120] sm:$0xff]
    %v3487 = vld [vmem:[%s3449 + $0x128] sm:$0xff]
    %v3488 = vld [vmem:[%s3449 + $0x130] sm:$0xff]
    %v3489 = vld [vmem:[%s3449 + $0x138] sm:$0xff]
    %v3490 = vld [vmem:[%s3449 + $0x140] sm:$0xff]
    %v3491 = vld [vmem:[%s3449 + $0x148] sm:$0xff]
    %v3492 = vld [vmem:[%s3449 + $0x150] sm:$0xff]
    %v3493 = vld [vmem:[%s3449 + $0x158] sm:$0xff]
    %v3494 = vld [vmem:[%s3449 + $0x160] sm:$0xff]
    %v3495 = vld [vmem:[%s3449 + $0x168] sm:$0xff]
    %v3496 = vld [vmem:[%s3449 + $0x170] sm:$0xff]
    %v3497 = vld [vmem:[%s3449 + $0x178] sm:$0xff]
    %v3498 = vld [vmem:[%s3449 + $0x180] sm:$0xff]
    %v3499 = vld [vmem:[%s3449 + $0x188] sm:$0xff]
    %v3500 = vld [vmem:[%s3449 + $0x190] sm:$0xff]
    %v3501 = vld [vmem:[%s3449 + $0x198] sm:$0xff]
    %v3502 = vld [vmem:[%s3449 + $0x1a0] sm:$0xff]
    %v3503 = vld [vmem:[%s3449 + $0x1a8] sm:$0xff]
    %v3504 = vld [vmem:[%s3449 + $0x1b0] sm:$0xff]
    %v3505 = vld [vmem:[%s3449 + $0x1b8] sm:$0xff]
    %v3506 = vld [vmem:[%s3449 + $0x1c0] sm:$0xff]
    %v3507 = vld [vmem:[%s3449 + $0x1c8] sm:$0xff]
    %v3508 = vld [vmem:[%s3449 + $0x1d0] sm:$0xff]
    %v3509 = vld [vmem:[%s3449 + $0x1d8] sm:$0xff]
    %v3510 = vld [vmem:[%s3449 + $0x1e0] sm:$0xff]
    %v3511 = vld [vmem:[%s3449 + $0x1e8] sm:$0xff]
    %v3512 = vld [vmem:[%s3449 + $0x1f0] sm:$0xff]
    %v3513 = vld [vmem:[%s3449 + $0x1f8] sm:$0xff]
    %v3578 = vunpack.c.l.b16 %v3450
    %v3579 = vunpack.c.h.b16 %v3450
    %v3580 = vunpack.c.l.b16 %v3451
    %v3581 = vunpack.c.h.b16 %v3451
    %v3582 = vunpack.c.l.b16 %v3452
    %v3583 = vunpack.c.h.b16 %v3452
    %v3584 = vunpack.c.l.b16 %v3453
    %v3585 = vunpack.c.h.b16 %v3453
    %v3586 = vunpack.c.l.b16 %v3454
    %v3587 = vunpack.c.h.b16 %v3454
    %v3588 = vunpack.c.l.b16 %v3455
    %v3589 = vunpack.c.h.b16 %v3455
    %v3590 = vunpack.c.l.b16 %v3456
    %v3591 = vunpack.c.h.b16 %v3456
    %v3592 = vunpack.c.l.b16 %v3457
    %v3593 = vunpack.c.h.b16 %v3457
    %v3594 = vunpack.c.l.b16 %v3458
    %v3595 = vunpack.c.h.b16 %v3458
    %v3596 = vunpack.c.l.b16 %v3459
    %v3597 = vunpack.c.h.b16 %v3459
    %v3598 = vunpack.c.l.b16 %v3460
    %v3599 = vunpack.c.h.b16 %v3460
    %v3600 = vunpack.c.l.b16 %v3461
    %v3601 = vunpack.c.h.b16 %v3461
    %v3602 = vunpack.c.l.b16 %v3462
    %v3603 = vunpack.c.h.b16 %v3462
    %v3604 = vunpack.c.l.b16 %v3463
    %v3605 = vunpack.c.h.b16 %v3463
    %v3606 = vunpack.c.l.b16 %v3464
    %v3607 = vunpack.c.h.b16 %v3464
    %v3608 = vunpack.c.l.b16 %v3465
    %v3609 = vunpack.c.h.b16 %v3465
    %v3610 = vunpack.c.l.b16 %v3466
    %v3611 = vunpack.c.h.b16 %v3466
    %v3612 = vunpack.c.l.b16 %v3467
    %v3613 = vunpack.c.h.b16 %v3467
    %v3614 = vunpack.c.l.b16 %v3468
    %v3615 = vunpack.c.h.b16 %v3468
    %v3616 = vunpack.c.l.b16 %v3469
    %v3617 = vunpack.c.h.b16 %v3469
    %v3618 = vunpack.c.l.b16 %v3470
    %v3619 = vunpack.c.h.b16 %v3470
    %v3620 = vunpack.c.l.b16 %v3471
    %v3621 = vunpack.c.h.b16 %v3471
    %v3622 = vunpack.c.l.b16 %v3472
    %v3623 = vunpack.c.h.b16 %v3472
    %v3624 = vunpack.c.l.b16 %v3473
    %v3625 = vunpack.c.h.b16 %v3473
    %v3626 = vunpack.c.l.b16 %v3474
    %v3627 = vunpack.c.h.b16 %v3474
    %v3628 = vunpack.c.l.b16 %v3475
    %v3629 = vunpack.c.h.b16 %v3475
    %v3630 = vunpack.c.l.b16 %v3476
    %v3631 = vunpack.c.h.b16 %v3476
    %v3632 = vunpack.c.l.b16 %v3477
    %v3633 = vunpack.c.h.b16 %v3477
    %v3634 = vunpack.c.l.b16 %v3478
    %v3635 = vunpack.c.h.b16 %v3478
    %v3636 = vunpack.c.l.b16 %v3479
    %v3637 = vunpack.c.h.b16 %v3479
    %v3638 = vunpack.c.l.b16 %v3480
    %v3639 = vunpack.c.h.b16 %v3480
    %v3640 = vunpack.c.l.b16 %v3481
    %v3641 = vunpack.c.h.b16 %v3481
    %v3642 = vunpack.c.l.b16 %v3482
    %v3643 = vunpack.c.h.b16 %v3482
    %v3644 = vunpack.c.l.b16 %v3483
    %v3645 = vunpack.c.h.b16 %v3483
    %v3646 = vunpack.c.l.b16 %v3484
    %v3647 = vunpack.c.h.b16 %v3484
    %v3648 = vunpack.c.l.b16 %v3485
    %v3649 = vunpack.c.h.b16 %v3485
    %v3650 = vunpack.c.l.b16 %v3486
    %v3651 = vunpack.c.h.b16 %v3486
    %v3652 = vunpack.c.l.b16 %v3487
    %v3653 = vunpack.c.h.b16 %v3487
    %v3654 = vunpack.c.l.b16 %v3488
    %v3655 = vunpack.c.h.b16 %v3488
    %v3656 = vunpack.c.l.b16 %v3489
    %v3657 = vunpack.c.h.b16 %v3489
    %v3658 = vunpack.c.l.b16 %v3490
    %v3659 = vunpack.c.h.b16 %v3490
    %v3660 = vunpack.c.l.b16 %v3491
    %v3661 = vunpack.c.h.b16 %v3491
    %v3662 = vunpack.c.l.b16 %v3492
    %v3663 = vunpack.c.h.b16 %v3492
    %v3664 = vunpack.c.l.b16 %v3493
    %v3665 = vunpack.c.h.b16 %v3493
    %v3666 = vunpack.c.l.b16 %v3494
    %v3667 = vunpack.c.h.b16 %v3494
    %v3668 = vunpack.c.l.b16 %v3495
    %v3669 = vunpack.c.h.b16 %v3495
    %v3670 = vunpack.c.l.b16 %v3496
    %v3671 = vunpack.c.h.b16 %v3496
    %v3672 = vunpack.c.l.b16 %v3497
    %v3673 = vunpack.c.h.b16 %v3497
    %v3674 = vunpack.c.l.b16 %v3498
    %v3675 = vunpack.c.h.b16 %v3498
    %v3676 = vunpack.c.l.b16 %v3499
    %v3677 = vunpack.c.h.b16 %v3499
    %v3678 = vunpack.c.l.b16 %v3500
    %v3679 = vunpack.c.h.b16 %v3500
    %v3680 = vunpack.c.l.b16 %v3501
    %v3681 = vunpack.c.h.b16 %v3501
    %v3682 = vunpack.c.l.b16 %v3502
    %v3683 = vunpack.c.h.b16 %v3502
    %v3684 = vunpack.c.l.b16 %v3503
    %v3685 = vunpack.c.h.b16 %v3503
    %v3686 = vunpack.c.l.b16 %v3504
    %v3687 = vunpack.c.h.b16 %v3504
    %v3688 = vunpack.c.l.b16 %v3505
    %v3689 = vunpack.c.h.b16 %v3505
    %v3690 = vunpack.c.l.b16 %v3506
    %v3691 = vunpack.c.h.b16 %v3506
    %v3692 = vunpack.c.l.b16 %v3507
    %v3693 = vunpack.c.h.b16 %v3507
    %v3694 = vunpack.c.l.b16 %v3508
    %v3695 = vunpack.c.h.b16 %v3508
    %v3696 = vunpack.c.l.b16 %v3509
    %v3697 = vunpack.c.h.b16 %v3509
    %v3698 = vunpack.c.l.b16 %v3510
    %v3699 = vunpack.c.h.b16 %v3510
    %v3700 = vunpack.c.l.b16 %v3511
    %v3701 = vunpack.c.h.b16 %v3511
    %v3702 = vunpack.c.l.b16 %v3512
    %v3703 = vunpack.c.h.b16 %v3512
    %v3704 = vunpack.c.l.b16 %v3513
    %v3705 = vunpack.c.h.b16 %v3513
    %v3706 = vpack.c.b16 %v3582, %v3578
    %v3707 = vpack.c.b16 %v3583, %v3579
    %v3708 = vpack.c.b16 %v3584, %v3580
    %v3709 = vpack.c.b16 %v3585, %v3581
    %v3710 = vpack.c.b16 %v3590, %v3586
    %v3711 = vpack.c.b16 %v3591, %v3587
    %v3712 = vpack.c.b16 %v3592, %v3588
    %v3713 = vpack.c.b16 %v3593, %v3589
    %v3714 = vpack.c.b16 %v3598, %v3594
    %v3715 = vpack.c.b16 %v3599, %v3595
    %v3716 = vpack.c.b16 %v3600, %v3596
    %v3717 = vpack.c.b16 %v3601, %v3597
    %v3718 = vpack.c.b16 %v3606, %v3602
    %v3719 = vpack.c.b16 %v3607, %v3603
    %v3720 = vpack.c.b16 %v3608, %v3604
    %v3721 = vpack.c.b16 %v3609, %v3605
    %v3722 = vpack.c.b16 %v3614, %v3610
    %v3723 = vpack.c.b16 %v3615, %v3611
    %v3724 = vpack.c.b16 %v3616, %v3612
    %v3725 = vpack.c.b16 %v3617, %v3613
    %v3726 = vpack.c.b16 %v3622, %v3618
    %v3727 = vpack.c.b16 %v3623, %v3619
    %v3728 = vpack.c.b16 %v3624, %v3620
    %v3729 = vpack.c.b16 %v3625, %v3621
    %v3730 = vpack.c.b16 %v3630, %v3626
    %v3731 = vpack.c.b16 %v3631, %v3627
    %v3732 = vpack.c.b16 %v3632, %v3628
    %v3733 = vpack.c.b16 %v3633, %v3629
    %v3734 = vpack.c.b16 %v3638, %v3634
    %v3735 = vpack.c.b16 %v3639, %v3635
    %v3736 = vpack.c.b16 %v3640, %v3636
    %v3737 = vpack.c.b16 %v3641, %v3637
    %v3738 = vpack.c.b16 %v3646, %v3642
    %v3739 = vpack.c.b16 %v3647, %v3643
    %v3740 = vpack.c.b16 %v3648, %v3644
    %v3741 = vpack.c.b16 %v3649, %v3645
    %v3742 = vpack.c.b16 %v3654, %v3650
    %v3743 = vpack.c.b16 %v3655, %v3651
    %v3744 = vpack.c.b16 %v3656, %v3652
    %v3745 = vpack.c.b16 %v3657, %v3653
    %v3746 = vpack.c.b16 %v3662, %v3658
    %v3747 = vpack.c.b16 %v3663, %v3659
    %v3748 = vpack.c.b16 %v3664, %v3660
    %v3749 = vpack.c.b16 %v3665, %v3661
    %v3750 = vpack.c.b16 %v3670, %v3666
    %v3751 = vpack.c.b16 %v3671, %v3667
    %v3752 = vpack.c.b16 %v3672, %v3668
    %v3753 = vpack.c.b16 %v3673, %v3669
    %v3754 = vpack.c.b16 %v3678, %v3674
    %v3755 = vpack.c.b16 %v3679, %v3675
    %v3756 = vpack.c.b16 %v3680, %v3676
    %v3757 = vpack.c.b16 %v3681, %v3677
    %v3758 = vpack.c.b16 %v3686, %v3682
    %v3759 = vpack.c.b16 %v3687, %v3683
    %v3760 = vpack.c.b16 %v3688, %v3684
    %v3761 = vpack.c.b16 %v3689, %v3685
    %v3762 = vpack.c.b16 %v3694, %v3690
    %v3763 = vpack.c.b16 %v3695, %v3691
    %v3764 = vpack.c.b16 %v3696, %v3692
    %v3765 = vpack.c.b16 %v3697, %v3693
    %v3766 = vpack.c.b16 %v3702, %v3698
    %v3767 = vpack.c.b16 %v3703, %v3699
    %v3768 = vpack.c.b16 %v3704, %v3700
    %v3769 = vpack.c.b16 %v3705, %v3701
    %3834 = vmatprep.subr.bf16.mxu0 %v3735
    %3835 = vmatpush1.bf16.msra.mxu0 %v3734
    %3836 = vmatprep.subr.bf16.mxu0 %v3731
    %3837 = vmatpush1.bf16.msra.mxu0 %v3730
    %3838 = vmatprep.subr.bf16.mxu0 %v3727
    %3839 = vmatpush1.bf16.msra.mxu0 %v3726
    %3840 = vmatprep.subr.bf16.mxu0 %v3723
    %3841 = vmatpush1.bf16.msra.mxu0 %v3722
    %3842 = vmatprep.subr.bf16.mxu0 %v3719
    %3843 = vmatpush1.bf16.msra.mxu0 %v3718
    %3844 = vmatprep.subr.bf16.mxu0 %v3715
    %3845 = vmatpush1.bf16.msra.mxu0 %v3714
    %3846 = vmatprep.subr.bf16.mxu0 %v3711
    %3847 = vmatpush1.bf16.msra.mxu0 %v3710
    %3848 = vmatprep.subr.bf16.mxu0 %v3707
    %3849 = vmatpush1.bf16.msra.mxu0 %v3706
    %3850 = vmatprep.subr.bf16.mxu0 %v3767
    %3851 = vmatpush2.bf16.msra.mxu0 %v3766
    %3852 = vmatprep.subr.bf16.mxu0 %v3763
    %3853 = vmatpush2.bf16.msra.mxu0 %v3762
    %3854 = vmatprep.subr.bf16.mxu0 %v3759
    %3855 = vmatpush2.bf16.msra.mxu0 %v3758
    %3856 = vmatprep.subr.bf16.mxu0 %v3755
    %3857 = vmatpush2.bf16.msra.mxu0 %v3754
    %3858 = vmatprep.subr.bf16.mxu0 %v3751
    %3859 = vmatpush2.bf16.msra.mxu0 %v3750
    %3860 = vmatprep.subr.bf16.mxu0 %v3747
    %3861 = vmatpush2.bf16.msra.mxu0 %v3746
    %3862 = vmatprep.subr.bf16.mxu0 %v3743
    %3863 = vmatpush2.bf16.msra.mxu0 %v3742
    %3864 = vmatprep.subr.bf16.mxu0 %v3739
    %3865 = vmatpush2.bf16.msra.mxu0 %v3738
    %3866 = vmatprep.mubr.bf16.mxu0 %v2255
    %3867 = vmatmul.mubr.bf16.gmra.mxu0 %v2254
    %v3868 = vpop.f32.mrf.mxu0
    %v3869 = vadd.f32 0.0, %v3868
    %v3870 = vpop.f32.mrf.mxu0
    %v3871 = vadd.f32 0.0, %v3870
    %v3872 = vpop.f32.mrf.mxu0
    %v3873 = vadd.f32 0.0, %v3872
    %v3874 = vpop.f32.mrf.mxu0
    %v3875 = vadd.f32 0.0, %v3874
    %3876 = vmatprep.mubr.bf16.mxu0 %v2257
    %3877 = vmatmul.mubr.bf16.gmra.mxu0 %v2256
    %v3878 = vpop.f32.mrf.mxu0
    %v3879 = vadd.f32 0.0, %v3878
    %v3880 = vpop.f32.mrf.mxu0
    %v3881 = vadd.f32 0.0, %v3880
    %v3882 = vpop.f32.mrf.mxu0
    %v3883 = vadd.f32 0.0, %v3882
    %v3884 = vpop.f32.mrf.mxu0
    %v3885 = vadd.f32 0.0, %v3884
    %3886 = vmatprep.mubr.bf16.mxu0 %v2259
    %3887 = vmatmul.mubr.bf16.gmra.mxu0 %v2258
    %v3888 = vpop.f32.mrf.mxu0
    %v3889 = vadd.f32 0.0, %v3888
    %v3890 = vpop.f32.mrf.mxu0
    %v3891 = vadd.f32 0.0, %v3890
    %v3892 = vpop.f32.mrf.mxu0
    %v3893 = vadd.f32 0.0, %v3892
    %v3894 = vpop.f32.mrf.mxu0
    %v3895 = vadd.f32 0.0, %v3894
    %3896 = vmatprep.mubr.bf16.mxu0 %v2261
    %3897 = vmatmul.mubr.bf16.gmra.mxu0 %v2260
    %v3898 = vpop.f32.mrf.mxu0
    %v3899 = vadd.f32 0.0, %v3898
    %v3900 = vpop.f32.mrf.mxu0
    %v3901 = vadd.f32 0.0, %v3900
    %v3902 = vpop.f32.mrf.mxu0
    %v3903 = vadd.f32 0.0, %v3902
    %v3904 = vpop.f32.mrf.mxu0
    %v3905 = vadd.f32 0.0, %v3904
    %3906 = vmatprep.mubr.bf16.mxu0 %v2263
    %3907 = vmatmul.mubr.bf16.gmra.mxu0 %v2262
    %v3908 = vpop.f32.mrf.mxu0
    %v3909 = vadd.f32 0.0, %v3908
    %v3910 = vpop.f32.mrf.mxu0
    %v3911 = vadd.f32 0.0, %v3910
    %v3912 = vpop.f32.mrf.mxu0
    %v3913 = vadd.f32 0.0, %v3912
    %v3914 = vpop.f32.mrf.mxu0
    %v3915 = vadd.f32 0.0, %v3914
    %3916 = vmatprep.mubr.bf16.mxu0 %v3446
    %3917 = vmatmul.mubr.bf16.gmra.mxu0 %v3445
    %v3918 = vpop.f32.mrf.mxu0
    %v3919 = vadd.f32 0.0, %v3918
    %v3920 = vpop.f32.mrf.mxu0
    %v3921 = vadd.f32 0.0, %v3920
    %v3922 = vpop.f32.mrf.mxu0
    %v3923 = vadd.f32 0.0, %v3922
    %v3924 = vpop.f32.mrf.mxu0
    %v3925 = vadd.f32 0.0, %v3924
    %3926 = vmatprep.mubr.bf16.mxu0 %v3448
    %3927 = vmatmul.mubr.bf16.gmra.mxu0 %v3447
    %v3928 = vpop.f32.mrf.mxu0
    %v3929 = vpop.f32.mrf.mxu0
    %v3930 = vpop.f32.mrf.mxu0
    %v3931 = vpop.f32.mrf.mxu0
    %3932 = vdwg.mxu0
    %3933 = vmatprep.subr.bf16.mxu0 %v3737
    %3934 = vmatpush1.bf16.msra.mxu0 %v3736
    %3935 = vmatprep.subr.bf16.mxu0 %v3733
    %3936 = vmatpush1.bf16.msra.mxu0 %v3732
    %3937 = vmatprep.subr.bf16.mxu0 %v3729
    %3938 = vmatpush1.bf16.msra.mxu0 %v3728
    %3939 = vmatprep.subr.bf16.mxu0 %v3725
    %3940 = vmatpush1.bf16.msra.mxu0 %v3724
    %3941 = vmatprep.subr.bf16.mxu0 %v3721
    %3942 = vmatpush1.bf16.msra.mxu0 %v3720
    %3943 = vmatprep.subr.bf16.mxu0 %v3717
    %3944 = vmatpush1.bf16.msra.mxu0 %v3716
    %3945 = vmatprep.subr.bf16.mxu0 %v3713
    %3946 = vmatpush1.bf16.msra.mxu0 %v3712
    %3947 = vmatprep.subr.bf16.mxu0 %v3709
    %3948 = vmatpush1.bf16.msra.mxu0 %v3708
    %3949 = vmatprep.subr.bf16.mxu0 %v3769
    %3950 = vmatpush2.bf16.msra.mxu0 %v3768
    %3951 = vmatprep.subr.bf16.mxu0 %v3765
    %3952 = vmatpush2.bf16.msra.mxu0 %v3764
    %3953 = vmatprep.subr.bf16.mxu0 %v3761
    %3954 = vmatpush2.bf16.msra.mxu0 %v3760
    %3955 = vmatprep.subr.bf16.mxu0 %v3757
    %3956 = vmatpush2.bf16.msra.mxu0 %v3756
    %3957 = vmatprep.subr.bf16.mxu0 %v3753
    %3958 = vmatpush2.bf16.msra.mxu0 %v3752
    %3959 = vmatprep.subr.bf16.mxu0 %v3749
    %3960 = vmatpush2.bf16.msra.mxu0 %v3748
    %3961 = vmatprep.subr.bf16.mxu0 %v3745
    %3962 = vmatpush2.bf16.msra.mxu0 %v3744
    %3963 = vmatprep.subr.bf16.mxu0 %v3741
    %3964 = vmatpush2.bf16.msra.mxu0 %v3740
    %3965 = vmatprep.mubr.bf16.mxu0 %v2255
    %3966 = vmatmul.mubr.bf16.gmra.mxu0 %v2254
    %v3967 = vpop.f32.mrf.mxu0
    %v3968 = vadd.f32 0.0, %v3967
    %v3969 = vpop.f32.mrf.mxu0
    %v3970 = vadd.f32 0.0, %v3969
    %v3971 = vpop.f32.mrf.mxu0
    %v3972 = vadd.f32 0.0, %v3971
    %v3973 = vpop.f32.mrf.mxu0
    %v3974 = vadd.f32 0.0, %v3973
    %3975 = vmatprep.mubr.bf16.mxu0 %v2257
    %3976 = vmatmul.mubr.bf16.gmra.mxu0 %v2256
    %v3977 = vpop.f32.mrf.mxu0
    %v3978 = vadd.f32 0.0, %v3977
    %v3979 = vpop.f32.mrf.mxu0
    %v3980 = vadd.f32 0.0, %v3979
    %v3981 = vpop.f32.mrf.mxu0
    %v3982 = vadd.f32 0.0, %v3981
    %v3983 = vpop.f32.mrf.mxu0
    %v3984 = vadd.f32 0.0, %v3983
    %3985 = vmatprep.mubr.bf16.mxu0 %v2259
    %3986 = vmatmul.mubr.bf16.gmra.mxu0 %v2258
    %v3987 = vpop.f32.mrf.mxu0
    %v3988 = vadd.f32 0.0, %v3987
    %v3989 = vpop.f32.mrf.mxu0
    %v3990 = vadd.f32 0.0, %v3989
    %v3991 = vpop.f32.mrf.mxu0
    %v3992 = vadd.f32 0.0, %v3991
    %v3993 = vpop.f32.mrf.mxu0
    %v3994 = vadd.f32 0.0, %v3993
    %3995 = vmatprep.mubr.bf16.mxu0 %v2261
    %3996 = vmatmul.mubr.bf16.gmra.mxu0 %v2260
    %v3997 = vpop.f32.mrf.mxu0
    %v3998 = vadd.f32 0.0, %v3997
    %v3999 = vpop.f32.mrf.mxu0
    %v4000 = vadd.f32 0.0, %v3999
    %v4001 = vpop.f32.mrf.mxu0
    %v4002 = vadd.f32 0.0, %v4001
    %v4003 = vpop.f32.mrf.mxu0
    %v4004 = vadd.f32 0.0, %v4003
    %4005 = vmatprep.mubr.bf16.mxu0 %v2263
    %4006 = vmatmul.mubr.bf16.gmra.mxu0 %v2262
    %v4007 = vpop.f32.mrf.mxu0
    %v4008 = vadd.f32 0.0, %v4007
    %v4009 = vpop.f32.mrf.mxu0
    %v4010 = vadd.f32 0.0, %v4009
    %v4011 = vpop.f32.mrf.mxu0
    %v4012 = vadd.f32 0.0, %v4011
    %v4013 = vpop.f32.mrf.mxu0
    %v4014 = vadd.f32 0.0, %v4013
    %4015 = vmatprep.mubr.bf16.mxu0 %v3446
    %4016 = vmatmul.mubr.bf16.gmra.mxu0 %v3445
    %v4017 = vpop.f32.mrf.mxu0
    %v4018 = vadd.f32 0.0, %v4017
    %v4019 = vpop.f32.mrf.mxu0
    %v4020 = vadd.f32 0.0, %v4019
    %v4021 = vpop.f32.mrf.mxu0
    %v4022 = vadd.f32 0.0, %v4021
    %v4023 = vpop.f32.mrf.mxu0
    %v4024 = vadd.f32 0.0, %v4023
    %4025 = vmatprep.mubr.bf16.mxu0 %v3448
    %4026 = vmatmul.mubr.bf16.gmra.mxu0 %v3447
    %v4027 = vpop.f32.mrf.mxu0
    %v4028 = vpop.f32.mrf.mxu0
    %v4029 = vpop.f32.mrf.mxu0
    %v4030 = vpop.f32.mrf.mxu0
    %4031 = vdwg.mxu0
    %v4032 = vadd.f32 %v3282, %v3869
    %v4033 = vadd.f32 %v3284, %v3871
    %v4034 = vadd.f32 %v3381, %v3968
    %v4035 = vadd.f32 %v3383, %v3970
    %v4036 = vadd.f32 %v3286, %v3873
    %v4037 = vadd.f32 %v3288, %v3875
    %v4038 = vadd.f32 %v3385, %v3972
    %v4039 = vadd.f32 %v3387, %v3974
    %v4040 = vadd.f32 %v3292, %v3879
    %v4041 = vadd.f32 %v3294, %v3881
    %v4042 = vadd.f32 %v3391, %v3978
    %v4043 = vadd.f32 %v3393, %v3980
    %v4044 = vadd.f32 %v3296, %v3883
    %v4045 = vadd.f32 %v3298, %v3885
    %v4046 = vadd.f32 %v3395, %v3982
    %v4047 = vadd.f32 %v3397, %v3984
    %v4048 = vadd.f32 %v3302, %v3889
    %v4049 = vadd.f32 %v3304, %v3891
    %v4050 = vadd.f32 %v3401, %v3988
    %v4051 = vadd.f32 %v3403, %v3990
    %v4052 = vadd.f32 %v3306, %v3893
    %v4053 = vadd.f32 %v3308, %v3895
    %v4054 = vadd.f32 %v3405, %v3992
    %v4055 = vadd.f32 %v3407, %v3994
    %v4056 = vadd.f32 %v3312, %v3899
    %v4057 = vadd.f32 %v3314, %v3901
    %v4058 = vadd.f32 %v3411, %v3998
    %v4059 = vadd.f32 %v3413, %v4000
    %v4060 = vadd.f32 %v3316, %v3903
    %v4061 = vadd.f32 %v3318, %v3905
    %v4062 = vadd.f32 %v3415, %v4002
    %v4063 = vadd.f32 %v3417, %v4004
    %v4064 = vadd.f32 %v3322, %v3909
    %v4065 = vadd.f32 %v3324, %v3911
    %v4066 = vadd.f32 %v3421, %v4008
    %v4067 = vadd.f32 %v3423, %v4010
    %v4068 = vadd.f32 %v3326, %v3913
    %v4069 = vadd.f32 %v3328, %v3915
    %v4070 = vadd.f32 %v3425, %v4012
    %v4071 = vadd.f32 %v3427, %v4014
    %v4072 = vadd.f32 %v3332, %v3919
    %v4073 = vadd.f32 %v3334, %v3921
    %v4074 = vadd.f32 %v3431, %v4018
    %v4075 = vadd.f32 %v3433, %v4020
    %v4076 = vadd.f32 %v3336, %v3923
    %v4077 = vadd.f32 %v3338, %v3925
    %v4078 = vadd.f32 %v3435, %v4022
    %v4079 = vadd.f32 %v3437, %v4024
    %v4080 = vld [vmem:[%s4] sm:$0xf]
    %v4082 = vlaneseq
    %v4083 = vshrl.u32 %v4082, 7
    %v4084 = vsub.s32 0, %v4083
    %v4085 = vrot.slane %v4080, %v4084
    %v4086 = vlaneseq
    %v4087 = vshrl.u32 %v4086, 7
    %v4088 = vsub.s32 1, %v4087
    %v4089 = vrot.slane %v4080, %v4088
    %v4090 = vlaneseq
    %v4091 = vshrl.u32 %v4090, 7
    %v4092 = vsub.s32 2, %v4091
    %v4093 = vrot.slane %v4080, %v4092
    %v4094 = vlaneseq
    %v4095 = vshrl.u32 %v4094, 7
    %v4096 = vsub.s32 3, %v4095
    %v4097 = vrot.slane %v4080, %v4096
    %v4102 = vadd.f32 %v4032, %v4085
    %v4103 = vadd.f32 %v4033, %v4089
    %v4104 = vadd.f32 %v4034, %v4093
    %v4105 = vadd.f32 %v4035, %v4097
    %v4106 = vadd.f32 %v4036, %v4085
    %v4107 = vadd.f32 %v4037, %v4089
    %v4108 = vadd.f32 %v4038, %v4093
    %v4109 = vadd.f32 %v4039, %v4097
    %v4110 = vadd.f32 %v4040, %v4085
    %v4111 = vadd.f32 %v4041, %v4089
    %v4112 = vadd.f32 %v4042, %v4093
    %v4113 = vadd.f32 %v4043, %v4097
    %v4114 = vadd.f32 %v4044, %v4085
    %v4115 = vadd.f32 %v4045, %v4089
    %v4116 = vadd.f32 %v4046, %v4093
    %v4117 = vadd.f32 %v4047, %v4097
    %v4118 = vadd.f32 %v4048, %v4085
    %v4119 = vadd.f32 %v4049, %v4089
    %v4120 = vadd.f32 %v4050, %v4093
    %v4121 = vadd.f32 %v4051, %v4097
    %v4122 = vadd.f32 %v4052, %v4085
    %v4123 = vadd.f32 %v4053, %v4089
    %v4124 = vadd.f32 %v4054, %v4093
    %v4125 = vadd.f32 %v4055, %v4097
    %v4126 = vadd.f32 %v4056, %v4085
    %v4127 = vadd.f32 %v4057, %v4089
    %v4128 = vadd.f32 %v4058, %v4093
    %v4129 = vadd.f32 %v4059, %v4097
    %v4130 = vadd.f32 %v4060, %v4085
    %v4131 = vadd.f32 %v4061, %v4089
    %v4132 = vadd.f32 %v4062, %v4093
    %v4133 = vadd.f32 %v4063, %v4097
    %v4134 = vadd.f32 %v4064, %v4085
    %v4135 = vadd.f32 %v4065, %v4089
    %v4136 = vadd.f32 %v4066, %v4093
    %v4137 = vadd.f32 %v4067, %v4097
    %v4138 = vadd.f32 %v4068, %v4085
    %v4139 = vadd.f32 %v4069, %v4089
    %v4140 = vadd.f32 %v4070, %v4093
    %v4141 = vadd.f32 %v4071, %v4097
    %v4142 = vadd.f32 %v4072, %v4085
    %v4143 = vadd.f32 %v4073, %v4089
    %v4144 = vadd.f32 %v4074, %v4093
    %v4145 = vadd.f32 %v4075, %v4097
    %v4146 = vadd.f32 %v4076, %v4085
    %v4147 = vadd.f32 %v4077, %v4089
    %v4148 = vadd.f32 %v4078, %v4093
    %v4149 = vadd.f32 %v4079, %v4097
    %v4150 = vmax.f32 %v4102, 0.0
    %v4151 = vmax.f32 %v4103, 0.0
    %v4152 = vmax.f32 %v4104, 0.0
    %v4153 = vmax.f32 %v4105, 0.0
    %v4154 = vmax.f32 %v4106, 0.0
    %v4155 = vmax.f32 %v4107, 0.0
    %v4156 = vmax.f32 %v4108, 0.0
    %v4157 = vmax.f32 %v4109, 0.0
    %v4158 = vmax.f32 %v4110, 0.0
    %v4159 = vmax.f32 %v4111, 0.0
    %v4160 = vmax.f32 %v4112, 0.0
    %v4161 = vmax.f32 %v4113, 0.0
    %v4162 = vmax.f32 %v4114, 0.0
    %v4163 = vmax.f32 %v4115, 0.0
    %v4164 = vmax.f32 %v4116, 0.0
    %v4165 = vmax.f32 %v4117, 0.0
    %v4166 = vmax.f32 %v4118, 0.0
    %v4167 = vmax.f32 %v4119, 0.0
    %v4168 = vmax.f32 %v4120, 0.0
    %v4169 = vmax.f32 %v4121, 0.0
    %v4170 = vmax.f32 %v4122, 0.0
    %v4171 = vmax.f32 %v4123, 0.0
    %v4172 = vmax.f32 %v4124, 0.0
    %v4173 = vmax.f32 %v4125, 0.0
    %v4174 = vmax.f32 %v4126, 0.0
    %v4175 = vmax.f32 %v4127, 0.0
    %v4176 = vmax.f32 %v4128, 0.0
    %v4177 = vmax.f32 %v4129, 0.0
    %v4178 = vmax.f32 %v4130, 0.0
    %v4179 = vmax.f32 %v4131, 0.0
    %v4180 = vmax.f32 %v4132, 0.0
    %v4181 = vmax.f32 %v4133, 0.0
    %v4182 = vmax.f32 %v4134, 0.0
    %v4183 = vmax.f32 %v4135, 0.0
    %v4184 = vmax.f32 %v4136, 0.0
    %v4185 = vmax.f32 %v4137, 0.0
    %v4186 = vmax.f32 %v4138, 0.0
    %v4187 = vmax.f32 %v4139, 0.0
    %v4188 = vmax.f32 %v4140, 0.0
    %v4189 = vmax.f32 %v4141, 0.0
    %v4190 = vmax.f32 %v4142, 0.0
    %v4191 = vmax.f32 %v4143, 0.0
    %v4192 = vmax.f32 %v4144, 0.0
    %v4193 = vmax.f32 %v4145, 0.0
    %v4194 = vmax.f32 %v4146, 0.0
    %v4195 = vmax.f32 %v4147, 0.0
    %v4196 = vmax.f32 %v4148, 0.0
    %v4197 = vmax.f32 %v4149, 0.0
    %v4198 = vmax.f32 %v4150, %v4154
    %v4199 = vmax.f32 %v4151, %v4155
    %v4200 = vmax.f32 %v4152, %v4156
    %v4201 = vmax.f32 %v4153, %v4157
    %v4202 = vmax.f32 %v4158, %v4162
    %v4203 = vmax.f32 %v4159, %v4163
    %v4204 = vmax.f32 %v4160, %v4164
    %v4205 = vmax.f32 %v4161, %v4165
    %v4206 = vmax.f32 %v4166, %v4170
    %v4207 = vmax.f32 %v4167, %v4171
    %v4208 = vmax.f32 %v4168, %v4172
    %v4209 = vmax.f32 %v4169, %v4173
    %v4210 = vmax.f32 %v4174, %v4178
    %v4211 = vmax.f32 %v4175, %v4179
    %v4212 = vmax.f32 %v4176, %v4180
    %v4213 = vmax.f32 %v4177, %v4181
    %v4214 = vmax.f32 %v4182, %v4186
    %v4215 = vmax.f32 %v4183, %v4187
    %v4216 = vmax.f32 %v4184, %v4188
    %v4217 = vmax.f32 %v4185, %v4189
    %v4218 = vmax.f32 %v4190, %v4194
    %v4219 = vmax.f32 %v4191, %v4195
    %v4220 = vmax.f32 %v4192, %v4196
    %v4221 = vmax.f32 %v4193, %v4197
    %v4222 = vmax.f32 %v4198, %v4200
    %v4223 = vmax.f32 %v4199, %v4201
    %v4224 = vmax.f32 %v4202, %v4204
    %v4225 = vmax.f32 %v4203, %v4205
    %v4226 = vmax.f32 %v4206, %v4208
    %v4227 = vmax.f32 %v4207, %v4209
    %v4228 = vmax.f32 %v4210, %v4212
    %v4229 = vmax.f32 %v4211, %v4213
    %v4230 = vmax.f32 %v4214, %v4216
    %v4231 = vmax.f32 %v4215, %v4217
    %v4232 = vmax.f32 %v4218, %v4220
    %v4233 = vmax.f32 %v4219, %v4221
    %v4234 = vpack.c.bf16 %v4224, %v4222
    %v4235 = vpack.c.bf16 %v4225, %v4223
    %v4236 = vpack.c.bf16 %v4228, %v4226
    %v4237 = vpack.c.bf16 %v4229, %v4227
    %v4238 = vld [vmem:[%s5] sm:$0xff]
    %v4239 = vld [vmem:[%s5 + $0x8] sm:$0xff]
    %v4240 = vld [vmem:[%s5 + $0x10] sm:$0xff]
    %v4241 = vld [vmem:[%s5 + $0x18] sm:$0xff]
    %v4242 = vld [vmem:[%s5 + $0x20] sm:$0xff]
    %v4243 = vld [vmem:[%s5 + $0x28] sm:$0xff]
    %v4244 = vld [vmem:[%s5 + $0x30] sm:$0xff]
    %v4245 = vld [vmem:[%s5 + $0x38] sm:$0xff]
    %v4246 = vld [vmem:[%s5 + $0x40] sm:$0xff]
    %v4247 = vld [vmem:[%s5 + $0x48] sm:$0xff]
    %v4248 = vld [vmem:[%s5 + $0x50] sm:$0xff]
    %v4249 = vld [vmem:[%s5 + $0x58] sm:$0xff]
    %v4250 = vld [vmem:[%s5 + $0x60] sm:$0xff]
    %v4251 = vld [vmem:[%s5 + $0x68] sm:$0xff]
    %v4252 = vld [vmem:[%s5 + $0x70] sm:$0xff]
    %v4253 = vld [vmem:[%s5 + $0x78] sm:$0xff]
    %v4254 = vld [vmem:[%s5 + $0x80] sm:$0xff]
    %v4255 = vld [vmem:[%s5 + $0x88] sm:$0xff]
    %v4256 = vld [vmem:[%s5 + $0x90] sm:$0xff]
    %v4257 = vld [vmem:[%s5 + $0x98] sm:$0xff]
    %v4258 = vld [vmem:[%s5 + $0xa0] sm:$0xff]
    %v4259 = vld [vmem:[%s5 + $0xa8] sm:$0xff]
    %v4260 = vld [vmem:[%s5 + $0xb0] sm:$0xff]
    %v4261 = vld [vmem:[%s5 + $0xb8] sm:$0xff]
    %v4262 = vld [vmem:[%s5 + $0xc0] sm:$0xff]
    %v4263 = vld [vmem:[%s5 + $0xc8] sm:$0xff]
    %v4264 = vld [vmem:[%s5 + $0xd0] sm:$0xff]
    %v4265 = vld [vmem:[%s5 + $0xd8] sm:$0xff]
    %v4266 = vld [vmem:[%s5 + $0xe0] sm:$0xff]
    %v4267 = vld [vmem:[%s5 + $0xe8] sm:$0xff]
    %v4268 = vld [vmem:[%s5 + $0xf0] sm:$0xff]
    %v4269 = vld [vmem:[%s5 + $0xf8] sm:$0xff]
    %v4270 = vpack.c.bf16 %v4226, %v4224
    %v4271 = vpack.c.bf16 %v4227, %v4225
    %v4272 = vpack.c.bf16 %v4230, %v4228
    %v4273 = vpack.c.bf16 %v4231, %v4229
    %s4274 = scalar_lea.vmem %s5, 256
    %v4275 = vld [vmem:[%s4274] sm:$0xff]
    %v4276 = vld [vmem:[%s4274 + $0x8] sm:$0xff]
    %v4277 = vld [vmem:[%s4274 + $0x10] sm:$0xff]
    %v4278 = vld [vmem:[%s4274 + $0x18] sm:$0xff]
    %v4279 = vld [vmem:[%s4274 + $0x20] sm:$0xff]
    %v4280 = vld [vmem:[%s4274 + $0x28] sm:$0xff]
    %v4281 = vld [vmem:[%s4274 + $0x30] sm:$0xff]
    %v4282 = vld [vmem:[%s4274 + $0x38] sm:$0xff]
    %v4283 = vld [vmem:[%s4274 + $0x40] sm:$0xff]
    %v4284 = vld [vmem:[%s4274 + $0x48] sm:$0xff]
    %v4285 = vld [vmem:[%s4274 + $0x50] sm:$0xff]
    %v4286 = vld [vmem:[%s4274 + $0x58] sm:$0xff]
    %v4287 = vld [vmem:[%s4274 + $0x60] sm:$0xff]
    %v4288 = vld [vmem:[%s4274 + $0x68] sm:$0xff]
    %v4289 = vld [vmem:[%s4274 + $0x70] sm:$0xff]
    %v4290 = vld [vmem:[%s4274 + $0x78] sm:$0xff]
    %v4291 = vld [vmem:[%s4274 + $0x80] sm:$0xff]
    %v4292 = vld [vmem:[%s4274 + $0x88] sm:$0xff]
    %v4293 = vld [vmem:[%s4274 + $0x90] sm:$0xff]
    %v4294 = vld [vmem:[%s4274 + $0x98] sm:$0xff]
    %v4295 = vld [vmem:[%s4274 + $0xa0] sm:$0xff]
    %v4296 = vld [vmem:[%s4274 + $0xa8] sm:$0xff]
    %v4297 = vld [vmem:[%s4274 + $0xb0] sm:$0xff]
    %v4298 = vld [vmem:[%s4274 + $0xb8] sm:$0xff]
    %v4299 = vld [vmem:[%s4274 + $0xc0] sm:$0xff]
    %v4300 = vld [vmem:[%s4274 + $0xc8] sm:$0xff]
    %v4301 = vld [vmem:[%s4274 + $0xd0] sm:$0xff]
    %v4302 = vld [vmem:[%s4274 + $0xd8] sm:$0xff]
    %v4303 = vld [vmem:[%s4274 + $0xe0] sm:$0xff]
    %v4304 = vld [vmem:[%s4274 + $0xe8] sm:$0xff]
    %v4305 = vld [vmem:[%s4274 + $0xf0] sm:$0xff]
    %v4306 = vld [vmem:[%s4274 + $0xf8] sm:$0xff]
    %v4339 = vunpack.c.l.b16 %v4275
    %v4340 = vunpack.c.h.b16 %v4275
    %v4341 = vunpack.c.l.b16 %v4276
    %v4342 = vunpack.c.h.b16 %v4276
    %v4343 = vunpack.c.l.b16 %v4277
    %v4344 = vunpack.c.h.b16 %v4277
    %v4345 = vunpack.c.l.b16 %v4278
    %v4346 = vunpack.c.h.b16 %v4278
    %v4347 = vunpack.c.l.b16 %v4279
    %v4348 = vunpack.c.h.b16 %v4279
    %v4349 = vunpack.c.l.b16 %v4280
    %v4350 = vunpack.c.h.b16 %v4280
    %v4351 = vunpack.c.l.b16 %v4281
    %v4352 = vunpack.c.h.b16 %v4281
    %v4353 = vunpack.c.l.b16 %v4282
    %v4354 = vunpack.c.h.b16 %v4282
    %v4355 = vunpack.c.l.b16 %v4283
    %v4356 = vunpack.c.h.b16 %v4283
    %v4357 = vunpack.c.l.b16 %v4284
    %v4358 = vunpack.c.h.b16 %v4284
    %v4359 = vunpack.c.l.b16 %v4285
    %v4360 = vunpack.c.h.b16 %v4285
    %v4361 = vunpack.c.l.b16 %v4286
    %v4362 = vunpack.c.h.b16 %v4286
    %v4363 = vunpack.c.l.b16 %v4287
    %v4364 = vunpack.c.h.b16 %v4287
    %v4365 = vunpack.c.l.b16 %v4288
    %v4366 = vunpack.c.h.b16 %v4288
    %v4367 = vunpack.c.l.b16 %v4289
    %v4368 = vunpack.c.h.b16 %v4289
    %v4369 = vunpack.c.l.b16 %v4290
    %v4370 = vunpack.c.h.b16 %v4290
    %v4371 = vunpack.c.l.b16 %v4291
    %v4372 = vunpack.c.h.b16 %v4291
    %v4373 = vunpack.c.l.b16 %v4292
    %v4374 = vunpack.c.h.b16 %v4292
    %v4375 = vunpack.c.l.b16 %v4293
    %v4376 = vunpack.c.h.b16 %v4293
    %v4377 = vunpack.c.l.b16 %v4294
    %v4378 = vunpack.c.h.b16 %v4294
    %v4379 = vunpack.c.l.b16 %v4295
    %v4380 = vunpack.c.h.b16 %v4295
    %v4381 = vunpack.c.l.b16 %v4296
    %v4382 = vunpack.c.h.b16 %v4296
    %v4383 = vunpack.c.l.b16 %v4297
    %v4384 = vunpack.c.h.b16 %v4297
    %v4385 = vunpack.c.l.b16 %v4298
    %v4386 = vunpack.c.h.b16 %v4298
    %v4387 = vunpack.c.l.b16 %v4299
    %v4388 = vunpack.c.h.b16 %v4299
    %v4389 = vunpack.c.l.b16 %v4300
    %v4390 = vunpack.c.h.b16 %v4300
    %v4391 = vunpack.c.l.b16 %v4301
    %v4392 = vunpack.c.h.b16 %v4301
    %v4393 = vunpack.c.l.b16 %v4302
    %v4394 = vunpack.c.h.b16 %v4302
    %v4395 = vunpack.c.l.b16 %v4303
    %v4396 = vunpack.c.h.b16 %v4303
    %v4397 = vunpack.c.l.b16 %v4304
    %v4398 = vunpack.c.h.b16 %v4304
    %v4399 = vunpack.c.l.b16 %v4305
    %v4400 = vunpack.c.h.b16 %v4305
    %v4401 = vunpack.c.l.b16 %v4306
    %v4402 = vunpack.c.h.b16 %v4306
    %v4403 = vpack.c.b16 %v4341, %v4339
    %v4404 = vpack.c.b16 %v4342, %v4340
    %v4405 = vpack.c.b16 %v4345, %v4343
    %v4406 = vpack.c.b16 %v4346, %v4344
    %v4407 = vpack.c.b16 %v4349, %v4347
    %v4408 = vpack.c.b16 %v4350, %v4348
    %v4409 = vpack.c.b16 %v4353, %v4351
    %v4410 = vpack.c.b16 %v4354, %v4352
    %v4411 = vpack.c.b16 %v4357, %v4355
    %v4412 = vpack.c.b16 %v4358, %v4356
    %v4413 = vpack.c.b16 %v4361, %v4359
    %v4414 = vpack.c.b16 %v4362, %v4360
    %v4415 = vpack.c.b16 %v4365, %v4363
    %v4416 = vpack.c.b16 %v4366, %v4364
    %v4417 = vpack.c.b16 %v4369, %v4367
    %v4418 = vpack.c.b16 %v4370, %v4368
    %v4419 = vpack.c.b16 %v4373, %v4371
    %v4420 = vpack.c.b16 %v4374, %v4372
    %v4421 = vpack.c.b16 %v4377, %v4375
    %v4422 = vpack.c.b16 %v4378, %v4376
    %v4423 = vpack.c.b16 %v4381, %v4379
    %v4424 = vpack.c.b16 %v4382, %v4380
    %v4425 = vpack.c.b16 %v4385, %v4383
    %v4426 = vpack.c.b16 %v4386, %v4384
    %v4427 = vpack.c.b16 %v4389, %v4387
    %v4428 = vpack.c.b16 %v4390, %v4388
    %v4429 = vpack.c.b16 %v4393, %v4391
    %v4430 = vpack.c.b16 %v4394, %v4392
    %v4431 = vpack.c.b16 %v4397, %v4395
    %v4432 = vpack.c.b16 %v4398, %v4396
    %v4433 = vpack.c.b16 %v4401, %v4399
    %v4434 = vpack.c.b16 %v4402, %v4400
    %4467 = vmatprep.subr.bf16.mxu0 %v4418
    %4468 = vmatpush1.bf16.msra.mxu0 %v4417
    %4469 = vmatprep.subr.bf16.mxu0 %v4416
    %4470 = vmatpush1.bf16.msra.mxu0 %v4415
    %4471 = vmatprep.subr.bf16.mxu0 %v4414
    %4472 = vmatpush1.bf16.msra.mxu0 %v4413
    %4473 = vmatprep.subr.bf16.mxu0 %v4412
    %4474 = vmatpush1.bf16.msra.mxu0 %v4411
    %4475 = vmatprep.subr.bf16.mxu0 %v4410
    %4476 = vmatpush1.bf16.msra.mxu0 %v4409
    %4477 = vmatprep.subr.bf16.mxu0 %v4408
    %4478 = vmatpush1.bf16.msra.mxu0 %v4407
    %4479 = vmatprep.subr.bf16.mxu0 %v4406
    %4480 = vmatpush1.bf16.msra.mxu0 %v4405
    %4481 = vmatprep.subr.bf16.mxu0 %v4404
    %4482 = vmatpush1.bf16.msra.mxu0 %v4403
    %4483 = vmatprep.subr.bf16.mxu0 %v4434
    %4484 = vmatpush2.bf16.msra.mxu0 %v4433
    %4485 = vmatprep.subr.bf16.mxu0 %v4432
    %4486 = vmatpush2.bf16.msra.mxu0 %v4431
    %4487 = vmatprep.subr.bf16.mxu0 %v4430
    %4488 = vmatpush2.bf16.msra.mxu0 %v4429
    %4489 = vmatprep.subr.bf16.mxu0 %v4428
    %4490 = vmatpush2.bf16.msra.mxu0 %v4427
    %4491 = vmatprep.subr.bf16.mxu0 %v4426
    %4492 = vmatpush2.bf16.msra.mxu0 %v4425
    %4493 = vmatprep.subr.bf16.mxu0 %v4424
    %4494 = vmatpush2.bf16.msra.mxu0 %v4423
    %4495 = vmatprep.subr.bf16.mxu0 %v4422
    %4496 = vmatpush2.bf16.msra.mxu0 %v4421
    %4497 = vmatprep.subr.bf16.mxu0 %v4420
    %4498 = vmatpush2.bf16.msra.mxu0 %v4419
    %4499 = vmatprep.mubr.bf16.mxu0 %v4271
    %4500 = vmatmul.mubr.bf16.gmra.mxu0 %v4270
    %v4501 = vpop.f32.mrf.mxu0
    %v4502 = vadd.f32 0.0, %v4501
    %v4503 = vpop.f32.mrf.mxu0
    %v4504 = vadd.f32 0.0, %v4503
    %v4505 = vpop.f32.mrf.mxu0
    %v4506 = vadd.f32 0.0, %v4505
    %v4507 = vpop.f32.mrf.mxu0
    %v4508 = vadd.f32 0.0, %v4507
    %4509 = vmatprep.mubr.bf16.mxu0 %v4273
    %4510 = vmatmul.mubr.bf16.gmra.mxu0 %v4272
    %v4511 = vpop.f32.mrf.mxu0
    %v4512 = vadd.f32 0.0, %v4511
    %v4513 = vpop.f32.mrf.mxu0
    %v4514 = vadd.f32 0.0, %v4513
    %v4515 = vpop.f32.mrf.mxu0
    %v4516 = vadd.f32 0.0, %v4515
    %v4517 = vpop.f32.mrf.mxu0
    %v4518 = vadd.f32 0.0, %v4517
    %4519 = vdwg.mxu0
    %v4552 = vunpack.c.l.b16 %v4238
    %v4553 = vunpack.c.h.b16 %v4238
    %v4554 = vunpack.c.l.b16 %v4239
    %v4555 = vunpack.c.h.b16 %v4239
    %v4556 = vunpack.c.l.b16 %v4240
    %v4557 = vunpack.c.h.b16 %v4240
    %v4558 = vunpack.c.l.b16 %v4241
    %v4559 = vunpack.c.h.b16 %v4241
    %v4560 = vunpack.c.l.b16 %v4242
    %v4561 = vunpack.c.h.b16 %v4242
    %v4562 = vunpack.c.l.b16 %v4243
    %v4563 = vunpack.c.h.b16 %v4243
    %v4564 = vunpack.c.l.b16 %v4244
    %v4565 = vunpack.c.h.b16 %v4244
    %v4566 = vunpack.c.l.b16 %v4245
    %v4567 = vunpack.c.h.b16 %v4245
    %v4568 = vunpack.c.l.b16 %v4246
    %v4569 = vunpack.c.h.b16 %v4246
    %v4570 = vunpack.c.l.b16 %v4247
    %v4571 = vunpack.c.h.b16 %v4247
    %v4572 = vunpack.c.l.b16 %v4248
    %v4573 = vunpack.c.h.b16 %v4248
    %v4574 = vunpack.c.l.b16 %v4249
    %v4575 = vunpack.c.h.b16 %v4249
    %v4576 = vunpack.c.l.b16 %v4250
    %v4577 = vunpack.c.h.b16 %v4250
    %v4578 = vunpack.c.l.b16 %v4251
    %v4579 = vunpack.c.h.b16 %v4251
    %v4580 = vunpack.c.l.b16 %v4252
    %v4581 = vunpack.c.h.b16 %v4252
    %v4582 = vunpack.c.l.b16 %v4253
    %v4583 = vunpack.c.h.b16 %v4253
    %v4584 = vunpack.c.l.b16 %v4254
    %v4585 = vunpack.c.h.b16 %v4254
    %v4586 = vunpack.c.l.b16 %v4255
    %v4587 = vunpack.c.h.b16 %v4255
    %v4588 = vunpack.c.l.b16 %v4256
    %v4589 = vunpack.c.h.b16 %v4256
    %v4590 = vunpack.c.l.b16 %v4257
    %v4591 = vunpack.c.h.b16 %v4257
    %v4592 = vunpack.c.l.b16 %v4258
    %v4593 = vunpack.c.h.b16 %v4258
    %v4594 = vunpack.c.l.b16 %v4259
    %v4595 = vunpack.c.h.b16 %v4259
    %v4596 = vunpack.c.l.b16 %v4260
    %v4597 = vunpack.c.h.b16 %v4260
    %v4598 = vunpack.c.l.b16 %v4261
    %v4599 = vunpack.c.h.b16 %v4261
    %v4600 = vunpack.c.l.b16 %v4262
    %v4601 = vunpack.c.h.b16 %v4262
    %v4602 = vunpack.c.l.b16 %v4263
    %v4603 = vunpack.c.h.b16 %v4263
    %v4604 = vunpack.c.l.b16 %v4264
    %v4605 = vunpack.c.h.b16 %v4264
    %v4606 = vunpack.c.l.b16 %v4265
    %v4607 = vunpack.c.h.b16 %v4265
    %v4608 = vunpack.c.l.b16 %v4266
    %v4609 = vunpack.c.h.b16 %v4266
    %v4610 = vunpack.c.l.b16 %v4267
    %v4611 = vunpack.c.h.b16 %v4267
    %v4612 = vunpack.c.l.b16 %v4268
    %v4613 = vunpack.c.h.b16 %v4268
    %v4614 = vunpack.c.l.b16 %v4269
    %v4615 = vunpack.c.h.b16 %v4269
    %v4616 = vpack.c.b16 %v4554, %v4552
    %v4617 = vpack.c.b16 %v4555, %v4553
    %v4618 = vpack.c.b16 %v4558, %v4556
    %v4619 = vpack.c.b16 %v4559, %v4557
    %v4620 = vpack.c.b16 %v4562, %v4560
    %v4621 = vpack.c.b16 %v4563, %v4561
    %v4622 = vpack.c.b16 %v4566, %v4564
    %v4623 = vpack.c.b16 %v4567, %v4565
    %v4624 = vpack.c.b16 %v4570, %v4568
    %v4625 = vpack.c.b16 %v4571, %v4569
    %v4626 = vpack.c.b16 %v4574, %v4572
    %v4627 = vpack.c.b16 %v4575, %v4573
    %v4628 = vpack.c.b16 %v4578, %v4576
    %v4629 = vpack.c.b16 %v4579, %v4577
    %v4630 = vpack.c.b16 %v4582, %v4580
    %v4631 = vpack.c.b16 %v4583, %v4581
    %v4632 = vpack.c.b16 %v4586, %v4584
    %v4633 = vpack.c.b16 %v4587, %v4585
    %v4634 = vpack.c.b16 %v4590, %v4588
    %v4635 = vpack.c.b16 %v4591, %v4589
    %v4636 = vpack.c.b16 %v4594, %v4592
    %v4637 = vpack.c.b16 %v4595, %v4593
    %v4638 = vpack.c.b16 %v4598, %v4596
    %v4639 = vpack.c.b16 %v4599, %v4597
    %v4640 = vpack.c.b16 %v4602, %v4600
    %v4641 = vpack.c.b16 %v4603, %v4601
    %v4642 = vpack.c.b16 %v4606, %v4604
    %v4643 = vpack.c.b16 %v4607, %v4605
    %v4644 = vpack.c.b16 %v4610, %v4608
    %v4645 = vpack.c.b16 %v4611, %v4609
    %v4646 = vpack.c.b16 %v4614, %v4612
    %v4647 = vpack.c.b16 %v4615, %v4613
    %4680 = vmatprep.subr.bf16.mxu0 %v4631
    %4681 = vmatpush1.bf16.msra.mxu0 %v4630
    %4682 = vmatprep.subr.bf16.mxu0 %v4629
    %4683 = vmatpush1.bf16.msra.mxu0 %v4628
    %4684 = vmatprep.subr.bf16.mxu0 %v4627
    %4685 = vmatpush1.bf16.msra.mxu0 %v4626
    %4686 = vmatprep.subr.bf16.mxu0 %v4625
    %4687 = vmatpush1.bf16.msra.mxu0 %v4624
    %4688 = vmatprep.subr.bf16.mxu0 %v4623
    %4689 = vmatpush1.bf16.msra.mxu0 %v4622
    %4690 = vmatprep.subr.bf16.mxu0 %v4621
    %4691 = vmatpush1.bf16.msra.mxu0 %v4620
    %4692 = vmatprep.subr.bf16.mxu0 %v4619
    %4693 = vmatpush1.bf16.msra.mxu0 %v4618
    %4694 = vmatprep.subr.bf16.mxu0 %v4617
    %4695 = vmatpush1.bf16.msra.mxu0 %v4616
    %4696 = vmatprep.subr.bf16.mxu0 %v4647
    %4697 = vmatpush2.bf16.msra.mxu0 %v4646
    %4698 = vmatprep.subr.bf16.mxu0 %v4645
    %4699 = vmatpush2.bf16.msra.mxu0 %v4644
    %4700 = vmatprep.subr.bf16.mxu0 %v4643
    %4701 = vmatpush2.bf16.msra.mxu0 %v4642
    %4702 = vmatprep.subr.bf16.mxu0 %v4641
    %4703 = vmatpush2.bf16.msra.mxu0 %v4640
    %4704 = vmatprep.subr.bf16.mxu0 %v4639
    %4705 = vmatpush2.bf16.msra.mxu0 %v4638
    %4706 = vmatprep.subr.bf16.mxu0 %v4637
    %4707 = vmatpush2.bf16.msra.mxu0 %v4636
    %4708 = vmatprep.subr.bf16.mxu0 %v4635
    %4709 = vmatpush2.bf16.msra.mxu0 %v4634
    %4710 = vmatprep.subr.bf16.mxu0 %v4633
    %4711 = vmatpush2.bf16.msra.mxu0 %v4632
    %4712 = vmatprep.mubr.bf16.mxu0 %v4235
    %4713 = vmatmul.mubr.bf16.gmra.mxu0 %v4234
    %v4714 = vpop.f32.mrf.mxu0
    %v4715 = vadd.f32 %v4502, %v4714
    %v4716 = vpop.f32.mrf.mxu0
    %v4717 = vadd.f32 %v4504, %v4716
    %v4718 = vpop.f32.mrf.mxu0
    %v4719 = vadd.f32 %v4506, %v4718
    %v4720 = vpop.f32.mrf.mxu0
    %v4721 = vadd.f32 %v4508, %v4720
    %4722 = vmatprep.mubr.bf16.mxu0 %v4237
    %4723 = vmatmul.mubr.bf16.gmra.mxu0 %v4236
    %v4724 = vpop.f32.mrf.mxu0
    %v4725 = vadd.f32 %v4512, %v4724
    %v4726 = vpop.f32.mrf.mxu0
    %v4727 = vadd.f32 %v4514, %v4726
    %v4728 = vpop.f32.mrf.mxu0
    %v4729 = vadd.f32 %v4516, %v4728
    %v4730 = vpop.f32.mrf.mxu0
    %v4731 = vadd.f32 %v4518, %v4730
    %4732 = vdwg.mxu0
    %v4733 = vpack.c.bf16 %v4232, %v4230
    %v4734 = vpack.c.bf16 %v4233, %v4231
    %s4735 = scalar_lea.vmem %s5, 512
    %v4736 = vld [vmem:[%s4735] sm:$0xff]
    %v4737 = vld [vmem:[%s4735 + $0x8] sm:$0xff]
    %v4738 = vld [vmem:[%s4735 + $0x10] sm:$0xff]
    %v4739 = vld [vmem:[%s4735 + $0x18] sm:$0xff]
    %v4740 = vld [vmem:[%s4735 + $0x20] sm:$0xff]
    %v4741 = vld [vmem:[%s4735 + $0x28] sm:$0xff]
    %v4742 = vld [vmem:[%s4735 + $0x30] sm:$0xff]
    %v4743 = vld [vmem:[%s4735 + $0x38] sm:$0xff]
    %v4744 = vld [vmem:[%s4735 + $0x40] sm:$0xff]
    %v4745 = vld [vmem:[%s4735 + $0x48] sm:$0xff]
    %v4746 = vld [vmem:[%s4735 + $0x50] sm:$0xff]
    %v4747 = vld [vmem:[%s4735 + $0x58] sm:$0xff]
    %v4748 = vld [vmem:[%s4735 + $0x60] sm:$0xff]
    %v4749 = vld [vmem:[%s4735 + $0x68] sm:$0xff]
    %v4750 = vld [vmem:[%s4735 + $0x70] sm:$0xff]
    %v4751 = vld [vmem:[%s4735 + $0x78] sm:$0xff]
    %v4752 = vld [vmem:[%s4735 + $0x80] sm:$0xff]
    %v4753 = vld [vmem:[%s4735 + $0x88] sm:$0xff]
    %v4754 = vld [vmem:[%s4735 + $0x90] sm:$0xff]
    %v4755 = vld [vmem:[%s4735 + $0x98] sm:$0xff]
    %v4756 = vld [vmem:[%s4735 + $0xa0] sm:$0xff]
    %v4757 = vld [vmem:[%s4735 + $0xa8] sm:$0xff]
    %v4758 = vld [vmem:[%s4735 + $0xb0] sm:$0xff]
    %v4759 = vld [vmem:[%s4735 + $0xb8] sm:$0xff]
    %v4760 = vld [vmem:[%s4735 + $0xc0] sm:$0xff]
    %v4761 = vld [vmem:[%s4735 + $0xc8] sm:$0xff]
    %v4762 = vld [vmem:[%s4735 + $0xd0] sm:$0xff]
    %v4763 = vld [vmem:[%s4735 + $0xd8] sm:$0xff]
    %v4764 = vld [vmem:[%s4735 + $0xe0] sm:$0xff]
    %v4765 = vld [vmem:[%s4735 + $0xe8] sm:$0xff]
    %v4766 = vld [vmem:[%s4735 + $0xf0] sm:$0xff]
    %v4767 = vld [vmem:[%s4735 + $0xf8] sm:$0xff]
    %v4800 = vunpack.c.l.b16 %v4736
    %v4801 = vunpack.c.h.b16 %v4736
    %v4802 = vunpack.c.l.b16 %v4737
    %v4803 = vunpack.c.h.b16 %v4737
    %v4804 = vunpack.c.l.b16 %v4738
    %v4805 = vunpack.c.h.b16 %v4738
    %v4806 = vunpack.c.l.b16 %v4739
    %v4807 = vunpack.c.h.b16 %v4739
    %v4808 = vunpack.c.l.b16 %v4740
    %v4809 = vunpack.c.h.b16 %v4740
    %v4810 = vunpack.c.l.b16 %v4741
    %v4811 = vunpack.c.h.b16 %v4741
    %v4812 = vunpack.c.l.b16 %v4742
    %v4813 = vunpack.c.h.b16 %v4742
    %v4814 = vunpack.c.l.b16 %v4743
    %v4815 = vunpack.c.h.b16 %v4743
    %v4816 = vunpack.c.l.b16 %v4744
    %v4817 = vunpack.c.h.b16 %v4744
    %v4818 = vunpack.c.l.b16 %v4745
    %v4819 = vunpack.c.h.b16 %v4745
    %v4820 = vunpack.c.l.b16 %v4746
    %v4821 = vunpack.c.h.b16 %v4746
    %v4822 = vunpack.c.l.b16 %v4747
    %v4823 = vunpack.c.h.b16 %v4747
    %v4824 = vunpack.c.l.b16 %v4748
    %v4825 = vunpack.c.h.b16 %v4748
    %v4826 = vunpack.c.l.b16 %v4749
    %v4827 = vunpack.c.h.b16 %v4749
    %v4828 = vunpack.c.l.b16 %v4750
    %v4829 = vunpack.c.h.b16 %v4750
    %v4830 = vunpack.c.l.b16 %v4751
    %v4831 = vunpack.c.h.b16 %v4751
    %v4832 = vunpack.c.l.b16 %v4752
    %v4833 = vunpack.c.h.b16 %v4752
    %v4834 = vunpack.c.l.b16 %v4753
    %v4835 = vunpack.c.h.b16 %v4753
    %v4836 = vunpack.c.l.b16 %v4754
    %v4837 = vunpack.c.h.b16 %v4754
    %v4838 = vunpack.c.l.b16 %v4755
    %v4839 = vunpack.c.h.b16 %v4755
    %v4840 = vunpack.c.l.b16 %v4756
    %v4841 = vunpack.c.h.b16 %v4756
    %v4842 = vunpack.c.l.b16 %v4757
    %v4843 = vunpack.c.h.b16 %v4757
    %v4844 = vunpack.c.l.b16 %v4758
    %v4845 = vunpack.c.h.b16 %v4758
    %v4846 = vunpack.c.l.b16 %v4759
    %v4847 = vunpack.c.h.b16 %v4759
    %v4848 = vunpack.c.l.b16 %v4760
    %v4849 = vunpack.c.h.b16 %v4760
    %v4850 = vunpack.c.l.b16 %v4761
    %v4851 = vunpack.c.h.b16 %v4761
    %v4852 = vunpack.c.l.b16 %v4762
    %v4853 = vunpack.c.h.b16 %v4762
    %v4854 = vunpack.c.l.b16 %v4763
    %v4855 = vunpack.c.h.b16 %v4763
    %v4856 = vunpack.c.l.b16 %v4764
    %v4857 = vunpack.c.h.b16 %v4764
    %v4858 = vunpack.c.l.b16 %v4765
    %v4859 = vunpack.c.h.b16 %v4765
    %v4860 = vunpack.c.l.b16 %v4766
    %v4861 = vunpack.c.h.b16 %v4766
    %v4862 = vunpack.c.l.b16 %v4767
    %v4863 = vunpack.c.h.b16 %v4767
    %v4864 = vpack.c.b16 %v4802, %v4800
    %v4865 = vpack.c.b16 %v4803, %v4801
    %v4866 = vpack.c.b16 %v4806, %v4804
    %v4867 = vpack.c.b16 %v4807, %v4805
    %v4868 = vpack.c.b16 %v4810, %v4808
    %v4869 = vpack.c.b16 %v4811, %v4809
    %v4870 = vpack.c.b16 %v4814, %v4812
    %v4871 = vpack.c.b16 %v4815, %v4813
    %v4872 = vpack.c.b16 %v4818, %v4816
    %v4873 = vpack.c.b16 %v4819, %v4817
    %v4874 = vpack.c.b16 %v4822, %v4820
    %v4875 = vpack.c.b16 %v4823, %v4821
    %v4876 = vpack.c.b16 %v4826, %v4824
    %v4877 = vpack.c.b16 %v4827, %v4825
    %v4878 = vpack.c.b16 %v4830, %v4828
    %v4879 = vpack.c.b16 %v4831, %v4829
    %v4880 = vpack.c.b16 %v4834, %v4832
    %v4881 = vpack.c.b16 %v4835, %v4833
    %v4882 = vpack.c.b16 %v4838, %v4836
    %v4883 = vpack.c.b16 %v4839, %v4837
    %v4884 = vpack.c.b16 %v4842, %v4840
    %v4885 = vpack.c.b16 %v4843, %v4841
    %v4886 = vpack.c.b16 %v4846, %v4844
    %v4887 = vpack.c.b16 %v4847, %v4845
    %v4888 = vpack.c.b16 %v4850, %v4848
    %v4889 = vpack.c.b16 %v4851, %v4849
    %v4890 = vpack.c.b16 %v4854, %v4852
    %v4891 = vpack.c.b16 %v4855, %v4853
    %v4892 = vpack.c.b16 %v4858, %v4856
    %v4893 = vpack.c.b16 %v4859, %v4857
    %v4894 = vpack.c.b16 %v4862, %v4860
    %v4895 = vpack.c.b16 %v4863, %v4861
    %4928 = vmatprep.subr.bf16.mxu0 %v4879
    %4929 = vmatpush1.bf16.msra.mxu0 %v4878
    %4930 = vmatprep.subr.bf16.mxu0 %v4877
    %4931 = vmatpush1.bf16.msra.mxu0 %v4876
    %4932 = vmatprep.subr.bf16.mxu0 %v4875
    %4933 = vmatpush1.bf16.msra.mxu0 %v4874
    %4934 = vmatprep.subr.bf16.mxu0 %v4873
    %4935 = vmatpush1.bf16.msra.mxu0 %v4872
    %4936 = vmatprep.subr.bf16.mxu0 %v4871
    %4937 = vmatpush1.bf16.msra.mxu0 %v4870
    %4938 = vmatprep.subr.bf16.mxu0 %v4869
    %4939 = vmatpush1.bf16.msra.mxu0 %v4868
    %4940 = vmatprep.subr.bf16.mxu0 %v4867
    %4941 = vmatpush1.bf16.msra.mxu0 %v4866
    %4942 = vmatprep.subr.bf16.mxu0 %v4865
    %4943 = vmatpush1.bf16.msra.mxu0 %v4864
    %4944 = vmatprep.subr.bf16.mxu0 %v4895
    %4945 = vmatpush2.bf16.msra.mxu0 %v4894
    %4946 = vmatprep.subr.bf16.mxu0 %v4893
    %4947 = vmatpush2.bf16.msra.mxu0 %v4892
    %4948 = vmatprep.subr.bf16.mxu0 %v4891
    %4949 = vmatpush2.bf16.msra.mxu0 %v4890
    %4950 = vmatprep.subr.bf16.mxu0 %v4889
    %4951 = vmatpush2.bf16.msra.mxu0 %v4888
    %4952 = vmatprep.subr.bf16.mxu0 %v4887
    %4953 = vmatpush2.bf16.msra.mxu0 %v4886
    %4954 = vmatprep.subr.bf16.mxu0 %v4885
    %4955 = vmatpush2.bf16.msra.mxu0 %v4884
    %4956 = vmatprep.subr.bf16.mxu0 %v4883
    %4957 = vmatpush2.bf16.msra.mxu0 %v4882
    %4958 = vmatprep.subr.bf16.mxu0 %v4881
    %4959 = vmatpush2.bf16.msra.mxu0 %v4880
    %4960 = vmatprep.mubr.bf16.mxu0 %v4237
    %4961 = vmatmul.mubr.bf16.gmra.mxu0 %v4236
    %v4962 = vpop.f32.mrf.mxu0
    %v4963 = vadd.f32 0.0, %v4962
    %v4964 = vpop.f32.mrf.mxu0
    %v4965 = vadd.f32 0.0, %v4964
    %v4966 = vpop.f32.mrf.mxu0
    %v4967 = vadd.f32 0.0, %v4966
    %v4968 = vpop.f32.mrf.mxu0
    %v4969 = vadd.f32 0.0, %v4968
    %4970 = vmatprep.mubr.bf16.mxu0 %v4734
    %4971 = vmatmul.mubr.bf16.gmra.mxu0 %v4733
    %v4972 = vpop.f32.mrf.mxu0
    %v4973 = vadd.f32 0.0, %v4972
    %v4974 = vpop.f32.mrf.mxu0
    %v4975 = vadd.f32 0.0, %v4974
    %v4976 = vpop.f32.mrf.mxu0
    %v4977 = vadd.f32 0.0, %v4976
    %v4978 = vpop.f32.mrf.mxu0
    %v4979 = vadd.f32 0.0, %v4978
    %4980 = vdwg.mxu0
    %v4981 = vadd.f32 %v4715, %v4963
    %v4982 = vadd.f32 %v4717, %v4965
    %v4983 = vadd.f32 %v4719, %v4967
    %v4984 = vadd.f32 %v4721, %v4969
    %v4985 = vadd.f32 %v4725, %v4973
    %v4986 = vadd.f32 %v4727, %v4975
    %v4987 = vadd.f32 %v4729, %v4977
    %v4988 = vadd.f32 %v4731, %v4979
    %v4989 = vld [vmem:[%s6] sm:$0x3]
    %v4991 = vlaneseq
    %v4992 = vshrl.u32 %v4991, 7
    %v4993 = vsub.s32 0, %v4992
    %v4994 = vrot.slane %v4989, %v4993
    %v4995 = vlaneseq
    %v4996 = vshrl.u32 %v4995, 7
    %v4997 = vsub.s32 1, %v4996
    %v4998 = vrot.slane %v4989, %v4997
    %v5001 = vadd.f32 %v4981, %v4994
    %v5002 = vadd.f32 %v4982, %v4998
    %v5003 = vadd.f32 %v4983, %v4994
    %v5004 = vadd.f32 %v4984, %v4998
    %v5005 = vadd.f32 %v4985, %v4994
    %v5006 = vadd.f32 %v4986, %v4998
    %v5007 = vadd.f32 %v4987, %v4994
    %v5008 = vadd.f32 %v4988, %v4998
    %v5009 = vmax.f32 %v5001, 0.0
    %v5010 = vmax.f32 %v5002, 0.0
    %v5011 = vmax.f32 %v5003, 0.0
    %v5012 = vmax.f32 %v5004, 0.0
    %v5013 = vmax.f32 %v5005, 0.0
    %v5014 = vmax.f32 %v5006, 0.0
    %v5015 = vmax.f32 %v5007, 0.0
    %v5016 = vmax.f32 %v5008, 0.0
    %v5017 = vmax.f32 %v5009, %v5011
    %v5018 = vmax.f32 %v5010, %v5012
    %v5019 = vmax.f32 %v5013, %v5015
    %v5020 = vmax.f32 %v5014, %v5016
    %v5021 = vmax.f32 %v5017, %v5018
    %v5022 = vmax.f32 %v5019, %v5020
    %v5023 = vpack.c.bf16 %v5021, %v5021
    %v5024 = vpack.c.bf16 %v5022, %v5022
    %v5025 = vld [vmem:[#allocation6] sm:$0xff]
    %v5026 = vld [vmem:[#allocation6 + $0x8] sm:$0xff]
    %v5027 = vld [vmem:[#allocation6 + $0x10] sm:$0xff]
    %v5028 = vld [vmem:[#allocation6 + $0x18] sm:$0xff]
    %v5029 = vld [vmem:[#allocation6 + $0x20] sm:$0xff]
    %v5030 = vld [vmem:[#allocation6 + $0x28] sm:$0xff]
    %v5031 = vld [vmem:[#allocation6 + $0x30] sm:$0xff]
    %v5032 = vld [vmem:[#allocation6 + $0x38] sm:$0xff]
    %v5033 = vld [vmem:[#allocation6 + $0x40] sm:$0xff]
    %v5034 = vld [vmem:[#allocation6 + $0x48] sm:$0xff]
    %v5035 = vld [vmem:[#allocation6 + $0x50] sm:$0xff]
    %v5036 = vld [vmem:[#allocation6 + $0x58] sm:$0xff]
    %v5037 = vld [vmem:[#allocation6 + $0x60] sm:$0xff]
    %v5038 = vld [vmem:[#allocation6 + $0x68] sm:$0xff]
    %v5039 = vld [vmem:[#allocation6 + $0x70] sm:$0xff]
    %v5040 = vld [vmem:[#allocation6 + $0x78] sm:$0xff]
    %v5041 = vld [vmem:[#allocation6 + $0x80] sm:$0xff]
    %v5042 = vld [vmem:[#allocation6 + $0x88] sm:$0xff]
    %v5043 = vld [vmem:[#allocation6 + $0x90] sm:$0xff]
    %v5044 = vld [vmem:[#allocation6 + $0x98] sm:$0xff]
    %v5045 = vld [vmem:[#allocation6 + $0xa0] sm:$0xff]
    %v5046 = vld [vmem:[#allocation6 + $0xa8] sm:$0xff]
    %v5047 = vld [vmem:[#allocation6 + $0xb0] sm:$0xff]
    %v5048 = vld [vmem:[#allocation6 + $0xb8] sm:$0xff]
    %v5049 = vld [vmem:[#allocation6 + $0xc0] sm:$0xff]
    %v5050 = vld [vmem:[#allocation6 + $0xc8] sm:$0xff]
    %v5051 = vld [vmem:[#allocation6 + $0xd0] sm:$0xff]
    %v5052 = vld [vmem:[#allocation6 + $0xd8] sm:$0xff]
    %v5053 = vld [vmem:[#allocation6 + $0xe0] sm:$0xff]
    %v5054 = vld [vmem:[#allocation6 + $0xe8] sm:$0xff]
    %v5055 = vld [vmem:[#allocation6 + $0xf0] sm:$0xff]
    %v5056 = vld [vmem:[#allocation6 + $0xf8] sm:$0xff]
    %s5057 = scalar_lea.vmem [#allocation6], 256
    %v5058 = vld [vmem:[%s5057] sm:$0xff]
    %v5059 = vld [vmem:[%s5057 + $0x8] sm:$0xff]
    %v5060 = vld [vmem:[%s5057 + $0x10] sm:$0xff]
    %v5061 = vld [vmem:[%s5057 + $0x18] sm:$0xff]
    %v5062 = vld [vmem:[%s5057 + $0x20] sm:$0xff]
    %v5063 = vld [vmem:[%s5057 + $0x28] sm:$0xff]
    %v5064 = vld [vmem:[%s5057 + $0x30] sm:$0xff]
    %v5065 = vld [vmem:[%s5057 + $0x38] sm:$0xff]
    %v5066 = vld [vmem:[%s5057 + $0x40] sm:$0xff]
    %v5067 = vld [vmem:[%s5057 + $0x48] sm:$0xff]
    %v5068 = vld [vmem:[%s5057 + $0x50] sm:$0xff]
    %v5069 = vld [vmem:[%s5057 + $0x58] sm:$0xff]
    %v5070 = vld [vmem:[%s5057 + $0x60] sm:$0xff]
    %v5071 = vld [vmem:[%s5057 + $0x68] sm:$0xff]
    %v5072 = vld [vmem:[%s5057 + $0x70] sm:$0xff]
    %v5073 = vld [vmem:[%s5057 + $0x78] sm:$0xff]
    %v5074 = vld [vmem:[%s5057 + $0x80] sm:$0xff]
    %v5075 = vld [vmem:[%s5057 + $0x88] sm:$0xff]
    %v5076 = vld [vmem:[%s5057 + $0x90] sm:$0xff]
    %v5077 = vld [vmem:[%s5057 + $0x98] sm:$0xff]
    %v5078 = vld [vmem:[%s5057 + $0xa0] sm:$0xff]
    %v5079 = vld [vmem:[%s5057 + $0xa8] sm:$0xff]
    %v5080 = vld [vmem:[%s5057 + $0xb0] sm:$0xff]
    %v5081 = vld [vmem:[%s5057 + $0xb8] sm:$0xff]
    %v5082 = vld [vmem:[%s5057 + $0xc0] sm:$0xff]
    %v5083 = vld [vmem:[%s5057 + $0xc8] sm:$0xff]
    %v5084 = vld [vmem:[%s5057 + $0xd0] sm:$0xff]
    %v5085 = vld [vmem:[%s5057 + $0xd8] sm:$0xff]
    %v5086 = vld [vmem:[%s5057 + $0xe0] sm:$0xff]
    %v5087 = vld [vmem:[%s5057 + $0xe8] sm:$0xff]
    %v5088 = vld [vmem:[%s5057 + $0xf0] sm:$0xff]
    %v5089 = vld [vmem:[%s5057 + $0xf8] sm:$0xff]
    %v5122 = vunpack.c.l.b16 %v5058
    %v5123 = vunpack.c.h.b16 %v5058
    %v5124 = vunpack.c.l.b16 %v5059
    %v5125 = vunpack.c.h.b16 %v5059
    %v5126 = vunpack.c.l.b16 %v5060
    %v5127 = vunpack.c.h.b16 %v5060
    %v5128 = vunpack.c.l.b16 %v5061
    %v5129 = vunpack.c.h.b16 %v5061
    %v5130 = vunpack.c.l.b16 %v5062
    %v5131 = vunpack.c.h.b16 %v5062
    %v5132 = vunpack.c.l.b16 %v5063
    %v5133 = vunpack.c.h.b16 %v5063
    %v5134 = vunpack.c.l.b16 %v5064
    %v5135 = vunpack.c.h.b16 %v5064
    %v5136 = vunpack.c.l.b16 %v5065
    %v5137 = vunpack.c.h.b16 %v5065
    %v5138 = vunpack.c.l.b16 %v5066
    %v5139 = vunpack.c.h.b16 %v5066
    %v5140 = vunpack.c.l.b16 %v5067
    %v5141 = vunpack.c.h.b16 %v5067
    %v5142 = vunpack.c.l.b16 %v5068
    %v5143 = vunpack.c.h.b16 %v5068
    %v5144 = vunpack.c.l.b16 %v5069
    %v5145 = vunpack.c.h.b16 %v5069
    %v5146 = vunpack.c.l.b16 %v5070
    %v5147 = vunpack.c.h.b16 %v5070
    %v5148 = vunpack.c.l.b16 %v5071
    %v5149 = vunpack.c.h.b16 %v5071
    %v5150 = vunpack.c.l.b16 %v5072
    %v5151 = vunpack.c.h.b16 %v5072
    %v5152 = vunpack.c.l.b16 %v5073
    %v5153 = vunpack.c.h.b16 %v5073
    %v5154 = vunpack.c.l.b16 %v5074
    %v5155 = vunpack.c.h.b16 %v5074
    %v5156 = vunpack.c.l.b16 %v5075
    %v5157 = vunpack.c.h.b16 %v5075
    %v5158 = vunpack.c.l.b16 %v5076
    %v5159 = vunpack.c.h.b16 %v5076
    %v5160 = vunpack.c.l.b16 %v5077
    %v5161 = vunpack.c.h.b16 %v5077
    %v5162 = vunpack.c.l.b16 %v5078
    %v5163 = vunpack.c.h.b16 %v5078
    %v5164 = vunpack.c.l.b16 %v5079
    %v5165 = vunpack.c.h.b16 %v5079
    %v5166 = vunpack.c.l.b16 %v5080
    %v5167 = vunpack.c.h.b16 %v5080
    %v5168 = vunpack.c.l.b16 %v5081
    %v5169 = vunpack.c.h.b16 %v5081
    %v5170 = vunpack.c.l.b16 %v5082
    %v5171 = vunpack.c.h.b16 %v5082
    %v5172 = vunpack.c.l.b16 %v5083
    %v5173 = vunpack.c.h.b16 %v5083
    %v5174 = vunpack.c.l.b16 %v5084
    %v5175 = vunpack.c.h.b16 %v5084
    %v5176 = vunpack.c.l.b16 %v5085
    %v5177 = vunpack.c.h.b16 %v5085
    %v5178 = vunpack.c.l.b16 %v5086
    %v5179 = vunpack.c.h.b16 %v5086
    %v5180 = vunpack.c.l.b16 %v5087
    %v5181 = vunpack.c.h.b16 %v5087
    %v5182 = vunpack.c.l.b16 %v5088
    %v5183 = vunpack.c.h.b16 %v5088
    %v5184 = vunpack.c.l.b16 %v5089
    %v5185 = vunpack.c.h.b16 %v5089
    %v5186 = vpack.c.b16 %v5126, %v5122
    %v5187 = vpack.c.b16 %v5127, %v5123
    %v5188 = vpack.c.b16 %v5128, %v5124
    %v5189 = vpack.c.b16 %v5129, %v5125
    %v5190 = vpack.c.b16 %v5134, %v5130
    %v5191 = vpack.c.b16 %v5135, %v5131
    %v5192 = vpack.c.b16 %v5136, %v5132
    %v5193 = vpack.c.b16 %v5137, %v5133
    %v5194 = vpack.c.b16 %v5142, %v5138
    %v5195 = vpack.c.b16 %v5143, %v5139
    %v5196 = vpack.c.b16 %v5144, %v5140
    %v5197 = vpack.c.b16 %v5145, %v5141
    %v5198 = vpack.c.b16 %v5150, %v5146
    %v5199 = vpack.c.b16 %v5151, %v5147
    %v5200 = vpack.c.b16 %v5152, %v5148
    %v5201 = vpack.c.b16 %v5153, %v5149
    %v5202 = vpack.c.b16 %v5158, %v5154
    %v5203 = vpack.c.b16 %v5159, %v5155
    %v5204 = vpack.c.b16 %v5160, %v5156
    %v5205 = vpack.c.b16 %v5161, %v5157
    %v5206 = vpack.c.b16 %v5166, %v5162
    %v5207 = vpack.c.b16 %v5167, %v5163
    %v5208 = vpack.c.b16 %v5168, %v5164
    %v5209 = vpack.c.b16 %v5169, %v5165
    %v5210 = vpack.c.b16 %v5174, %v5170
    %v5211 = vpack.c.b16 %v5175, %v5171
    %v5212 = vpack.c.b16 %v5176, %v5172
    %v5213 = vpack.c.b16 %v5177, %v5173
    %v5214 = vpack.c.b16 %v5182, %v5178
    %v5215 = vpack.c.b16 %v5183, %v5179
    %v5216 = vpack.c.b16 %v5184, %v5180
    %v5217 = vpack.c.b16 %v5185, %v5181
    %5250 = vmatprep.subr.bf16.mxu0 %v5215
    %5251 = vmatpush1.bf16.msra.mxu0 %v5214
    %5252 = vmatprep.subr.bf16.mxu0 %v5211
    %5253 = vmatpush1.bf16.msra.mxu0 %v5210
    %5254 = vmatprep.subr.bf16.mxu0 %v5207
    %5255 = vmatpush1.bf16.msra.mxu0 %v5206
    %5256 = vmatprep.subr.bf16.mxu0 %v5203
    %5257 = vmatpush1.bf16.msra.mxu0 %v5202
    %5258 = vmatprep.subr.bf16.mxu0 %v5199
    %5259 = vmatpush1.bf16.msra.mxu0 %v5198
    %5260 = vmatprep.subr.bf16.mxu0 %v5195
    %5261 = vmatpush1.bf16.msra.mxu0 %v5194
    %5262 = vmatprep.subr.bf16.mxu0 %v5191
    %5263 = vmatpush1.bf16.msra.mxu0 %v5190
    %5264 = vmatprep.subr.bf16.mxu0 %v5187
    %5265 = vmatpush1.bf16.msra.mxu0 %v5186
    %5266 = vmatprep.subr.bf16.mxu0 0
    %5267 = vmatpush2.bf16.msra.mxu0 0
    %5268 = vmatprep.subr.bf16.mxu0 0
    %5269 = vmatpush2.bf16.msra.mxu0 0
    %5270 = vmatprep.subr.bf16.mxu0 0
    %5271 = vmatpush2.bf16.msra.mxu0 0
    %5272 = vmatprep.subr.bf16.mxu0 0
    %5273 = vmatpush2.bf16.msra.mxu0 0
    %5274 = vmatprep.subr.bf16.mxu0 0
    %5275 = vmatpush2.bf16.msra.mxu0 0
    %5276 = vmatprep.subr.bf16.mxu0 0
    %5277 = vmatpush2.bf16.msra.mxu0 0
    %5278 = vmatprep.subr.bf16.mxu0 0
    %5279 = vmatpush2.bf16.msra.mxu0 0
    %5280 = vmatprep.subr.bf16.mxu0 0
    %5281 = vmatpush2.bf16.msra.mxu0 0
    %5282 = vmatprep.mubr.bf16.mxu0 0
    %5283 = vmatmul.mubr.bf16.gmra.mxu0 %v5024
    %v5284 = vpop.f32.mrf.mxu0
    %v5285 = vadd.f32 0.0, %v5284
    %v5286 = vpop.f32.mrf.mxu0
    %v5287 = vadd.f32 0.0, %v5286
    %v5288 = vpop.f32.mrf.mxu0
    %v5289 = vpop.f32.mrf.mxu0
    %5290 = vdwg.mxu0
    %5291 = vmatprep.subr.bf16.mxu0 %v5217
    %5292 = vmatpush1.bf16.msra.mxu0 %v5216
    %5293 = vmatprep.subr.bf16.mxu0 %v5213
    %5294 = vmatpush1.bf16.msra.mxu0 %v5212
    %5295 = vmatprep.subr.bf16.mxu0 %v5209
    %5296 = vmatpush1.bf16.msra.mxu0 %v5208
    %5297 = vmatprep.subr.bf16.mxu0 %v5205
    %5298 = vmatpush1.bf16.msra.mxu0 %v5204
    %5299 = vmatprep.subr.bf16.mxu0 %v5201
    %5300 = vmatpush1.bf16.msra.mxu0 %v5200
    %5301 = vmatprep.subr.bf16.mxu0 %v5197
    %5302 = vmatpush1.bf16.msra.mxu0 %v5196
    %5303 = vmatprep.subr.bf16.mxu0 %v5193
    %5304 = vmatpush1.bf16.msra.mxu0 %v5192
    %5305 = vmatprep.subr.bf16.mxu0 %v5189
    %5306 = vmatpush1.bf16.msra.mxu0 %v5188
    %5307 = vmatprep.subr.bf16.mxu0 0
    %5308 = vmatpush2.bf16.msra.mxu0 0
    %5309 = vmatprep.subr.bf16.mxu0 0
    %5310 = vmatpush2.bf16.msra.mxu0 0
    %5311 = vmatprep.subr.bf16.mxu0 0
    %5312 = vmatpush2.bf16.msra.mxu0 0
    %5313 = vmatprep.subr.bf16.mxu0 0
    %5314 = vmatpush2.bf16.msra.mxu0 0
    %5315 = vmatprep.subr.bf16.mxu0 0
    %5316 = vmatpush2.bf16.msra.mxu0 0
    %5317 = vmatprep.subr.bf16.mxu0 0
    %5318 = vmatpush2.bf16.msra.mxu0 0
    %5319 = vmatprep.subr.bf16.mxu0 0
    %5320 = vmatpush2.bf16.msra.mxu0 0
    %5321 = vmatprep.subr.bf16.mxu0 0
    %5322 = vmatpush2.bf16.msra.mxu0 0
    %5323 = vmatprep.mubr.bf16.mxu0 0
    %5324 = vmatmul.mubr.bf16.gmra.mxu0 %v5024
    %v5325 = vpop.f32.mrf.mxu0
    %v5326 = vadd.f32 0.0, %v5325
    %v5327 = vpop.f32.mrf.mxu0
    %v5328 = vadd.f32 0.0, %v5327
    %v5329 = vpop.f32.mrf.mxu0
    %v5330 = vpop.f32.mrf.mxu0
    %5331 = vdwg.mxu0
    %v5364 = vunpack.c.l.b16 %v5025
    %v5365 = vunpack.c.h.b16 %v5025
    %v5366 = vunpack.c.l.b16 %v5026
    %v5367 = vunpack.c.h.b16 %v5026
    %v5368 = vunpack.c.l.b16 %v5027
    %v5369 = vunpack.c.h.b16 %v5027
    %v5370 = vunpack.c.l.b16 %v5028
    %v5371 = vunpack.c.h.b16 %v5028
    %v5372 = vunpack.c.l.b16 %v5029
    %v5373 = vunpack.c.h.b16 %v5029
    %v5374 = vunpack.c.l.b16 %v5030
    %v5375 = vunpack.c.h.b16 %v5030
    %v5376 = vunpack.c.l.b16 %v5031
    %v5377 = vunpack.c.h.b16 %v5031
    %v5378 = vunpack.c.l.b16 %v5032
    %v5379 = vunpack.c.h.b16 %v5032
    %v5380 = vunpack.c.l.b16 %v5033
    %v5381 = vunpack.c.h.b16 %v5033
    %v5382 = vunpack.c.l.b16 %v5034
    %v5383 = vunpack.c.h.b16 %v5034
    %v5384 = vunpack.c.l.b16 %v5035
    %v5385 = vunpack.c.h.b16 %v5035
    %v5386 = vunpack.c.l.b16 %v5036
    %v5387 = vunpack.c.h.b16 %v5036
    %v5388 = vunpack.c.l.b16 %v5037
    %v5389 = vunpack.c.h.b16 %v5037
    %v5390 = vunpack.c.l.b16 %v5038
    %v5391 = vunpack.c.h.b16 %v5038
    %v5392 = vunpack.c.l.b16 %v5039
    %v5393 = vunpack.c.h.b16 %v5039
    %v5394 = vunpack.c.l.b16 %v5040
    %v5395 = vunpack.c.h.b16 %v5040
    %v5396 = vunpack.c.l.b16 %v5041
    %v5397 = vunpack.c.h.b16 %v5041
    %v5398 = vunpack.c.l.b16 %v5042
    %v5399 = vunpack.c.h.b16 %v5042
    %v5400 = vunpack.c.l.b16 %v5043
    %v5401 = vunpack.c.h.b16 %v5043
    %v5402 = vunpack.c.l.b16 %v5044
    %v5403 = vunpack.c.h.b16 %v5044
    %v5404 = vunpack.c.l.b16 %v5045
    %v5405 = vunpack.c.h.b16 %v5045
    %v5406 = vunpack.c.l.b16 %v5046
    %v5407 = vunpack.c.h.b16 %v5046
    %v5408 = vunpack.c.l.b16 %v5047
    %v5409 = vunpack.c.h.b16 %v5047
    %v5410 = vunpack.c.l.b16 %v5048
    %v5411 = vunpack.c.h.b16 %v5048
    %v5412 = vunpack.c.l.b16 %v5049
    %v5413 = vunpack.c.h.b16 %v5049
    %v5414 = vunpack.c.l.b16 %v5050
    %v5415 = vunpack.c.h.b16 %v5050
    %v5416 = vunpack.c.l.b16 %v5051
    %v5417 = vunpack.c.h.b16 %v5051
    %v5418 = vunpack.c.l.b16 %v5052
    %v5419 = vunpack.c.h.b16 %v5052
    %v5420 = vunpack.c.l.b16 %v5053
    %v5421 = vunpack.c.h.b16 %v5053
    %v5422 = vunpack.c.l.b16 %v5054
    %v5423 = vunpack.c.h.b16 %v5054
    %v5424 = vunpack.c.l.b16 %v5055
    %v5425 = vunpack.c.h.b16 %v5055
    %v5426 = vunpack.c.l.b16 %v5056
    %v5427 = vunpack.c.h.b16 %v5056
    %v5428 = vpack.c.b16 %v5368, %v5364
    %v5429 = vpack.c.b16 %v5369, %v5365
    %v5430 = vpack.c.b16 %v5370, %v5366
    %v5431 = vpack.c.b16 %v5371, %v5367
    %v5432 = vpack.c.b16 %v5376, %v5372
    %v5433 = vpack.c.b16 %v5377, %v5373
    %v5434 = vpack.c.b16 %v5378, %v5374
    %v5435 = vpack.c.b16 %v5379, %v5375
    %v5436 = vpack.c.b16 %v5384, %v5380
    %v5437 = vpack.c.b16 %v5385, %v5381
    %v5438 = vpack.c.b16 %v5386, %v5382
    %v5439 = vpack.c.b16 %v5387, %v5383
    %v5440 = vpack.c.b16 %v5392, %v5388
    %v5441 = vpack.c.b16 %v5393, %v5389
    %v5442 = vpack.c.b16 %v5394, %v5390
    %v5443 = vpack.c.b16 %v5395, %v5391
    %v5444 = vpack.c.b16 %v5400, %v5396
    %v5445 = vpack.c.b16 %v5401, %v5397
    %v5446 = vpack.c.b16 %v5402, %v5398
    %v5447 = vpack.c.b16 %v5403, %v5399
    %v5448 = vpack.c.b16 %v5408, %v5404
    %v5449 = vpack.c.b16 %v5409, %v5405
    %v5450 = vpack.c.b16 %v5410, %v5406
    %v5451 = vpack.c.b16 %v5411, %v5407
    %v5452 = vpack.c.b16 %v5416, %v5412
    %v5453 = vpack.c.b16 %v5417, %v5413
    %v5454 = vpack.c.b16 %v5418, %v5414
    %v5455 = vpack.c.b16 %v5419, %v5415
    %v5456 = vpack.c.b16 %v5424, %v5420
    %v5457 = vpack.c.b16 %v5425, %v5421
    %v5458 = vpack.c.b16 %v5426, %v5422
    %v5459 = vpack.c.b16 %v5427, %v5423
    %5492 = vmatprep.subr.bf16.mxu0 %v5457
    %5493 = vmatpush1.bf16.msra.mxu0 %v5456
    %5494 = vmatprep.subr.bf16.mxu0 %v5453
    %5495 = vmatpush1.bf16.msra.mxu0 %v5452
    %5496 = vmatprep.subr.bf16.mxu0 %v5449
    %5497 = vmatpush1.bf16.msra.mxu0 %v5448
    %5498 = vmatprep.subr.bf16.mxu0 %v5445
    %5499 = vmatpush1.bf16.msra.mxu0 %v5444
    %5500 = vmatprep.subr.bf16.mxu0 %v5441
    %5501 = vmatpush1.bf16.msra.mxu0 %v5440
    %5502 = vmatprep.subr.bf16.mxu0 %v5437
    %5503 = vmatpush1.bf16.msra.mxu0 %v5436
    %5504 = vmatprep.subr.bf16.mxu0 %v5433
    %5505 = vmatpush1.bf16.msra.mxu0 %v5432
    %5506 = vmatprep.subr.bf16.mxu0 %v5429
    %5507 = vmatpush1.bf16.msra.mxu0 %v5428
    %5508 = vmatprep.subr.bf16.mxu0 0
    %5509 = vmatpush2.bf16.msra.mxu0 0
    %5510 = vmatprep.subr.bf16.mxu0 0
    %5511 = vmatpush2.bf16.msra.mxu0 0
    %5512 = vmatprep.subr.bf16.mxu0 0
    %5513 = vmatpush2.bf16.msra.mxu0 0
    %5514 = vmatprep.subr.bf16.mxu0 0
    %5515 = vmatpush2.bf16.msra.mxu0 0
    %5516 = vmatprep.subr.bf16.mxu0 0
    %5517 = vmatpush2.bf16.msra.mxu0 0
    %5518 = vmatprep.subr.bf16.mxu0 0
    %5519 = vmatpush2.bf16.msra.mxu0 0
    %5520 = vmatprep.subr.bf16.mxu0 0
    %5521 = vmatpush2.bf16.msra.mxu0 0
    %5522 = vmatprep.subr.bf16.mxu0 0
    %5523 = vmatpush2.bf16.msra.mxu0 0
    %5524 = vmatprep.mubr.bf16.mxu0 0
    %5525 = vmatmul.mubr.bf16.gmra.mxu0 %v5023
    %v5526 = vpop.f32.mrf.mxu0
    %v5527 = vadd.f32 %v5285, %v5526
    %v5528 = vpop.f32.mrf.mxu0
    %v5529 = vadd.f32 %v5287, %v5528
    %v5530 = vpop.f32.mrf.mxu0
    %v5531 = vpop.f32.mrf.mxu0
    %5532 = vdwg.mxu0
    %5533 = vmatprep.subr.bf16.mxu0 %v5459
    %5534 = vmatpush1.bf16.msra.mxu0 %v5458
    %5535 = vmatprep.subr.bf16.mxu0 %v5455
    %5536 = vmatpush1.bf16.msra.mxu0 %v5454
    %5537 = vmatprep.subr.bf16.mxu0 %v5451
    %5538 = vmatpush1.bf16.msra.mxu0 %v5450
    %5539 = vmatprep.subr.bf16.mxu0 %v5447
    %5540 = vmatpush1.bf16.msra.mxu0 %v5446
    %5541 = vmatprep.subr.bf16.mxu0 %v5443
    %5542 = vmatpush1.bf16.msra.mxu0 %v5442
    %5543 = vmatprep.subr.bf16.mxu0 %v5439
    %5544 = vmatpush1.bf16.msra.mxu0 %v5438
    %5545 = vmatprep.subr.bf16.mxu0 %v5435
    %5546 = vmatpush1.bf16.msra.mxu0 %v5434
    %5547 = vmatprep.subr.bf16.mxu0 %v5431
    %5548 = vmatpush1.bf16.msra.mxu0 %v5430
    %5549 = vmatprep.subr.bf16.mxu0 0
    %5550 = vmatpush2.bf16.msra.mxu0 0
    %5551 = vmatprep.subr.bf16.mxu0 0
    %5552 = vmatpush2.bf16.msra.mxu0 0
    %5553 = vmatprep.subr.bf16.mxu0 0
    %5554 = vmatpush2.bf16.msra.mxu0 0
    %5555 = vmatprep.subr.bf16.mxu0 0
    %5556 = vmatpush2.bf16.msra.mxu0 0
    %5557 = vmatprep.subr.bf16.mxu0 0
    %5558 = vmatpush2.bf16.msra.mxu0 0
    %5559 = vmatprep.subr.bf16.mxu0 0
    %5560 = vmatpush2.bf16.msra.mxu0 0
    %5561 = vmatprep.subr.bf16.mxu0 0
    %5562 = vmatpush2.bf16.msra.mxu0 0
    %5563 = vmatprep.subr.bf16.mxu0 0
    %5564 = vmatpush2.bf16.msra.mxu0 0
    %5565 = vmatprep.mubr.bf16.mxu0 0
    %5566 = vmatmul.mubr.bf16.gmra.mxu0 %v5023
    %v5567 = vpop.f32.mrf.mxu0
    %v5568 = vadd.f32 %v5326, %v5567
    %v5569 = vpop.f32.mrf.mxu0
    %v5570 = vadd.f32 %v5328, %v5569
    %v5571 = vpop.f32.mrf.mxu0
    %v5572 = vpop.f32.mrf.mxu0
    %5573 = vdwg.mxu0
    %v5574 = vld [vmem:[%s8] sm:$0xf]
    %v5576 = vlaneseq
    %v5577 = vshrl.u32 %v5576, 7
    %v5578 = vsub.s32 0, %v5577
    %v5579 = vrot.slane %v5574, %v5578
    %v5580 = vlaneseq
    %v5581 = vshrl.u32 %v5580, 7
    %v5582 = vsub.s32 1, %v5581
    %v5583 = vrot.slane %v5574, %v5582
    %v5584 = vlaneseq
    %v5585 = vshrl.u32 %v5584, 7
    %v5586 = vsub.s32 2, %v5585
    %v5587 = vrot.slane %v5574, %v5586
    %v5588 = vlaneseq
    %v5589 = vshrl.u32 %v5588, 7
    %v5590 = vsub.s32 3, %v5589
    %v5591 = vrot.slane %v5574, %v5590
    %v5596 = vadd.f32 %v5527, %v5579
    %v5597 = vadd.f32 %v5529, %v5583
    %v5598 = vadd.f32 %v5568, %v5587
    %v5599 = vadd.f32 %v5570, %v5591
    %v5600 = vmax.f32 %v5596, 0.0
    %v5601 = vmax.f32 %v5597, 0.0
    %v5602 = vmax.f32 %v5598, 0.0
    %v5603 = vmax.f32 %v5599, 0.0
    %v5604 = vpack.c.bf16 %v5600, %v5600
    %v5605 = vpack.c.bf16 %v5601, %v5601
    %v5606 = vpack.c.bf16 %v5602, %v5602
    %v5607 = vpack.c.bf16 %v5603, %v5603
    %v5608 = vld [vmem:[#allocation7] sm:$0xf]
    %v5609 = vld [vmem:[#allocation7 + $0x4] sm:$0xf]
    %v5610 = vld [vmem:[#allocation7 + $0x8] sm:$0xf]
    %v5611 = vld [vmem:[#allocation7 + $0xc] sm:$0xf]
    %v5612 = vld [vmem:[#allocation7 + $0x10] sm:$0xf]
    %v5613 = vld [vmem:[#allocation7 + $0x14] sm:$0xf]
    %v5614 = vld [vmem:[#allocation7 + $0x18] sm:$0xf]
    %v5615 = vld [vmem:[#allocation7 + $0x1c] sm:$0xf]
    %v5616 = vld [vmem:[#allocation7 + $0x20] sm:$0xf]
    %v5617 = vld [vmem:[#allocation7 + $0x24] sm:$0xf]
    %v5618 = vld [vmem:[#allocation7 + $0x28] sm:$0xf]
    %v5619 = vld [vmem:[#allocation7 + $0x2c] sm:$0xf]
    %v5620 = vld [vmem:[#allocation7 + $0x30] sm:$0xf]
    %v5621 = vld [vmem:[#allocation7 + $0x34] sm:$0xf]
    %v5622 = vld [vmem:[#allocation7 + $0x38] sm:$0xf]
    %v5623 = vld [vmem:[#allocation7 + $0x3c] sm:$0xf]
    %v5624 = vld [vmem:[#allocation7 + $0x40] sm:$0xf]
    %v5625 = vld [vmem:[#allocation7 + $0x44] sm:$0xf]
    %v5626 = vld [vmem:[#allocation7 + $0x48] sm:$0xf]
    %v5627 = vld [vmem:[#allocation7 + $0x4c] sm:$0xf]
    %v5628 = vld [vmem:[#allocation7 + $0x50] sm:$0xf]
    %v5629 = vld [vmem:[#allocation7 + $0x54] sm:$0xf]
    %v5630 = vld [vmem:[#allocation7 + $0x58] sm:$0xf]
    %v5631 = vld [vmem:[#allocation7 + $0x5c] sm:$0xf]
    %v5632 = vld [vmem:[#allocation7 + $0x60] sm:$0xf]
    %v5633 = vld [vmem:[#allocation7 + $0x64] sm:$0xf]
    %v5634 = vld [vmem:[#allocation7 + $0x68] sm:$0xf]
    %v5635 = vld [vmem:[#allocation7 + $0x6c] sm:$0xf]
    %v5636 = vld [vmem:[#allocation7 + $0x70] sm:$0xf]
    %v5637 = vld [vmem:[#allocation7 + $0x74] sm:$0xf]
    %v5638 = vld [vmem:[#allocation7 + $0x78] sm:$0xf]
    %v5639 = vld [vmem:[#allocation7 + $0x7c] sm:$0xf]
    %v5640 = vld [vmem:[#allocation7 + $0x80] sm:$0xf]
    %v5641 = vld [vmem:[#allocation7 + $0x84] sm:$0xf]
    %v5642 = vld [vmem:[#allocation7 + $0x88] sm:$0xf]
    %v5643 = vld [vmem:[#allocation7 + $0x8c] sm:$0xf]
    %v5644 = vld [vmem:[#allocation7 + $0x90] sm:$0xf]
    %v5645 = vld [vmem:[#allocation7 + $0x94] sm:$0xf]
    %v5646 = vld [vmem:[#allocation7 + $0x98] sm:$0xf]
    %v5647 = vld [vmem:[#allocation7 + $0x9c] sm:$0xf]
    %v5648 = vld [vmem:[#allocation7 + $0xa0] sm:$0xf]
    %v5649 = vld [vmem:[#allocation7 + $0xa4] sm:$0xf]
    %v5650 = vld [vmem:[#allocation7 + $0xa8] sm:$0xf]
    %v5651 = vld [vmem:[#allocation7 + $0xac] sm:$0xf]
    %v5652 = vld [vmem:[#allocation7 + $0xb0] sm:$0xf]
    %v5653 = vld [vmem:[#allocation7 + $0xb4] sm:$0xf]
    %v5654 = vld [vmem:[#allocation7 + $0xb8] sm:$0xf]
    %v5655 = vld [vmem:[#allocation7 + $0xbc] sm:$0xf]
    %v5656 = vld [vmem:[#allocation7 + $0xc0] sm:$0xf]
    %v5657 = vld [vmem:[#allocation7 + $0xc4] sm:$0xf]
    %v5658 = vld [vmem:[#allocation7 + $0xc8] sm:$0xf]
    %v5659 = vld [vmem:[#allocation7 + $0xcc] sm:$0xf]
    %v5660 = vld [vmem:[#allocation7 + $0xd0] sm:$0xf]
    %v5661 = vld [vmem:[#allocation7 + $0xd4] sm:$0xf]
    %v5662 = vld [vmem:[#allocation7 + $0xd8] sm:$0xf]
    %v5663 = vld [vmem:[#allocation7 + $0xdc] sm:$0xf]
    %v5664 = vld [vmem:[#allocation7 + $0xe0] sm:$0xf]
    %v5665 = vld [vmem:[#allocation7 + $0xe4] sm:$0xf]
    %v5666 = vld [vmem:[#allocation7 + $0xe8] sm:$0xf]
    %v5667 = vld [vmem:[#allocation7 + $0xec] sm:$0xf]
    %v5668 = vld [vmem:[#allocation7 + $0xf0] sm:$0xf]
    %v5669 = vld [vmem:[#allocation7 + $0xf4] sm:$0xf]
    %v5670 = vld [vmem:[#allocation7 + $0xf8] sm:$0xf]
    %v5671 = vld [vmem:[#allocation7 + $0xfc] sm:$0xf]
    %v5736 = vunpack.c.l.b16 %v5608
    %v5737 = vunpack.c.l.b16 %v5609
    %v5738 = vunpack.c.l.b16 %v5610
    %v5739 = vunpack.c.l.b16 %v5611
    %v5740 = vunpack.c.l.b16 %v5612
    %v5741 = vunpack.c.l.b16 %v5613
    %v5742 = vunpack.c.l.b16 %v5614
    %v5743 = vunpack.c.l.b16 %v5615
    %v5744 = vunpack.c.l.b16 %v5616
    %v5745 = vunpack.c.l.b16 %v5617
    %v5746 = vunpack.c.l.b16 %v5618
    %v5747 = vunpack.c.l.b16 %v5619
    %v5748 = vunpack.c.l.b16 %v5620
    %v5749 = vunpack.c.l.b16 %v5621
    %v5750 = vunpack.c.l.b16 %v5622
    %v5751 = vunpack.c.l.b16 %v5623
    %v5752 = vunpack.c.l.b16 %v5624
    %v5753 = vunpack.c.l.b16 %v5625
    %v5754 = vunpack.c.l.b16 %v5626
    %v5755 = vunpack.c.l.b16 %v5627
    %v5756 = vunpack.c.l.b16 %v5628
    %v5757 = vunpack.c.l.b16 %v5629
    %v5758 = vunpack.c.l.b16 %v5630
    %v5759 = vunpack.c.l.b16 %v5631
    %v5760 = vunpack.c.l.b16 %v5632
    %v5761 = vunpack.c.l.b16 %v5633
    %v5762 = vunpack.c.l.b16 %v5634
    %v5763 = vunpack.c.l.b16 %v5635
    %v5764 = vunpack.c.l.b16 %v5636
    %v5765 = vunpack.c.l.b16 %v5637
    %v5766 = vunpack.c.l.b16 %v5638
    %v5767 = vunpack.c.l.b16 %v5639
    %v5768 = vunpack.c.l.b16 %v5640
    %v5769 = vunpack.c.l.b16 %v5641
    %v5770 = vunpack.c.l.b16 %v5642
    %v5771 = vunpack.c.l.b16 %v5643
    %v5772 = vunpack.c.l.b16 %v5644
    %v5773 = vunpack.c.l.b16 %v5645
    %v5774 = vunpack.c.l.b16 %v5646
    %v5775 = vunpack.c.l.b16 %v5647
    %v5776 = vunpack.c.l.b16 %v5648
    %v5777 = vunpack.c.l.b16 %v5649
    %v5778 = vunpack.c.l.b16 %v5650
    %v5779 = vunpack.c.l.b16 %v5651
    %v5780 = vunpack.c.l.b16 %v5652
    %v5781 = vunpack.c.l.b16 %v5653
    %v5782 = vunpack.c.l.b16 %v5654
    %v5783 = vunpack.c.l.b16 %v5655
    %v5784 = vunpack.c.l.b16 %v5656
    %v5785 = vunpack.c.l.b16 %v5657
    %v5786 = vunpack.c.l.b16 %v5658
    %v5787 = vunpack.c.l.b16 %v5659
    %v5788 = vunpack.c.l.b16 %v5660
    %v5789 = vunpack.c.l.b16 %v5661
    %v5790 = vunpack.c.l.b16 %v5662
    %v5791 = vunpack.c.l.b16 %v5663
    %v5792 = vunpack.c.l.b16 %v5664
    %v5793 = vunpack.c.l.b16 %v5665
    %v5794 = vunpack.c.l.b16 %v5666
    %v5795 = vunpack.c.l.b16 %v5667
    %v5796 = vunpack.c.l.b16 %v5668
    %v5797 = vunpack.c.l.b16 %v5669
    %v5798 = vunpack.c.l.b16 %v5670
    %v5799 = vunpack.c.l.b16 %v5671
    %v5800 = vpack.c.b16 %v5737, %v5736
    %v5801 = vpack.c.b16 %v5739, %v5738
    %v5802 = vpack.c.b16 %v5741, %v5740
    %v5803 = vpack.c.b16 %v5743, %v5742
    %v5804 = vpack.c.b16 %v5745, %v5744
    %v5805 = vpack.c.b16 %v5747, %v5746
    %v5806 = vpack.c.b16 %v5749, %v5748
    %v5807 = vpack.c.b16 %v5751, %v5750
    %v5808 = vpack.c.b16 %v5753, %v5752
    %v5809 = vpack.c.b16 %v5755, %v5754
    %v5810 = vpack.c.b16 %v5757, %v5756
    %v5811 = vpack.c.b16 %v5759, %v5758
    %v5812 = vpack.c.b16 %v5761, %v5760
    %v5813 = vpack.c.b16 %v5763, %v5762
    %v5814 = vpack.c.b16 %v5765, %v5764
    %v5815 = vpack.c.b16 %v5767, %v5766
    %v5816 = vpack.c.b16 %v5769, %v5768
    %v5817 = vpack.c.b16 %v5771, %v5770
    %v5818 = vpack.c.b16 %v5773, %v5772
    %v5819 = vpack.c.b16 %v5775, %v5774
    %v5820 = vpack.c.b16 %v5777, %v5776
    %v5821 = vpack.c.b16 %v5779, %v5778
    %v5822 = vpack.c.b16 %v5781, %v5780
    %v5823 = vpack.c.b16 %v5783, %v5782
    %v5824 = vpack.c.b16 %v5785, %v5784
    %v5825 = vpack.c.b16 %v5787, %v5786
    %v5826 = vpack.c.b16 %v5789, %v5788
    %v5827 = vpack.c.b16 %v5791, %v5790
    %v5828 = vpack.c.b16 %v5793, %v5792
    %v5829 = vpack.c.b16 %v5795, %v5794
    %v5830 = vpack.c.b16 %v5797, %v5796
    %v5831 = vpack.c.b16 %v5799, %v5798
    %5864 = vmatprep.subr.bf16.mxu0 0
    %5865 = vmatpush1.bf16.msra.mxu0 %v5807
    %5866 = vmatprep.subr.bf16.mxu0 0
    %5867 = vmatpush1.bf16.msra.mxu0 %v5806
    %5868 = vmatprep.subr.bf16.mxu0 0
    %5869 = vmatpush1.bf16.msra.mxu0 %v5805
    %5870 = vmatprep.subr.bf16.mxu0 0
    %5871 = vmatpush1.bf16.msra.mxu0 %v5804
    %5872 = vmatprep.subr.bf16.mxu0 0
    %5873 = vmatpush1.bf16.msra.mxu0 %v5803
    %5874 = vmatprep.subr.bf16.mxu0 0
    %5875 = vmatpush1.bf16.msra.mxu0 %v5802
    %5876 = vmatprep.subr.bf16.mxu0 0
    %5877 = vmatpush1.bf16.msra.mxu0 %v5801
    %5878 = vmatprep.subr.bf16.mxu0 0
    %5879 = vmatpush1.bf16.msra.mxu0 %v5800
    %5880 = vmatprep.subr.bf16.mxu0 0
    %5881 = vmatpush2.bf16.msra.mxu0 %v5815
    %5882 = vmatprep.subr.bf16.mxu0 0
    %5883 = vmatpush2.bf16.msra.mxu0 %v5814
    %5884 = vmatprep.subr.bf16.mxu0 0
    %5885 = vmatpush2.bf16.msra.mxu0 %v5813
    %5886 = vmatprep.subr.bf16.mxu0 0
    %5887 = vmatpush2.bf16.msra.mxu0 %v5812
    %5888 = vmatprep.subr.bf16.mxu0 0
    %5889 = vmatpush2.bf16.msra.mxu0 %v5811
    %5890 = vmatprep.subr.bf16.mxu0 0
    %5891 = vmatpush2.bf16.msra.mxu0 %v5810
    %5892 = vmatprep.subr.bf16.mxu0 0
    %5893 = vmatpush2.bf16.msra.mxu0 %v5809
    %5894 = vmatprep.subr.bf16.mxu0 0
    %5895 = vmatpush2.bf16.msra.mxu0 %v5808
    %5896 = vmatprep.mubr.bf16.mxu0 %v5605
    %5897 = vmatmul.mubr.bf16.gmra.mxu0 %v5604
    %v5898 = vpop.f32.mrf.mxu0
    %v5899 = vadd.f32 0.0, %v5898
    %v5900 = vpop.f32.mrf.mxu0
    %v5901 = vpop.f32.mrf.mxu0
    %v5902 = vpop.f32.mrf.mxu0
    %5903 = vdwg.mxu0
    %5904 = vmatprep.subr.bf16.mxu0 0
    %5905 = vmatpush1.bf16.msra.mxu0 %v5823
    %5906 = vmatprep.subr.bf16.mxu0 0
    %5907 = vmatpush1.bf16.msra.mxu0 %v5822
    %5908 = vmatprep.subr.bf16.mxu0 0
    %5909 = vmatpush1.bf16.msra.mxu0 %v5821
    %5910 = vmatprep.subr.bf16.mxu0 0
    %5911 = vmatpush1.bf16.msra.mxu0 %v5820
    %5912 = vmatprep.subr.bf16.mxu0 0
    %5913 = vmatpush1.bf16.msra.mxu0 %v5819
    %5914 = vmatprep.subr.bf16.mxu0 0
    %5915 = vmatpush1.bf16.msra.mxu0 %v5818
    %5916 = vmatprep.subr.bf16.mxu0 0
    %5917 = vmatpush1.bf16.msra.mxu0 %v5817
    %5918 = vmatprep.subr.bf16.mxu0 0
    %5919 = vmatpush1.bf16.msra.mxu0 %v5816
    %5920 = vmatprep.subr.bf16.mxu0 0
    %5921 = vmatpush2.bf16.msra.mxu0 %v5831
    %5922 = vmatprep.subr.bf16.mxu0 0
    %5923 = vmatpush2.bf16.msra.mxu0 %v5830
    %5924 = vmatprep.subr.bf16.mxu0 0
    %5925 = vmatpush2.bf16.msra.mxu0 %v5829
    %5926 = vmatprep.subr.bf16.mxu0 0
    %5927 = vmatpush2.bf16.msra.mxu0 %v5828
    %5928 = vmatprep.subr.bf16.mxu0 0
    %5929 = vmatpush2.bf16.msra.mxu0 %v5827
    %5930 = vmatprep.subr.bf16.mxu0 0
    %5931 = vmatpush2.bf16.msra.mxu0 %v5826
    %5932 = vmatprep.subr.bf16.mxu0 0
    %5933 = vmatpush2.bf16.msra.mxu0 %v5825
    %5934 = vmatprep.subr.bf16.mxu0 0
    %5935 = vmatpush2.bf16.msra.mxu0 %v5824
    %5936 = vmatprep.mubr.bf16.mxu0 %v5607
    %5937 = vmatmul.mubr.bf16.gmra.mxu0 %v5606
    %v5938 = vpop.f32.mrf.mxu0
    %v5939 = vadd.f32 %v5899, %v5938
    %v5940 = vpop.f32.mrf.mxu0
    %v5941 = vpop.f32.mrf.mxu0
    %v5942 = vpop.f32.mrf.mxu0
    %5943 = vdwg.mxu0
    %5944 = vst [vmem:[%s10] sm:$0xff] %v5939
    // Predicated region
    $region58: #{dnet_forward.1} parent=1 // pred_check
      _
    $region59: #{dnet_forward.1} parent=1 // pred_check_branch
      %5946 = sbr.rel (0) target = $region61
    $region60: #{dnet_forward.1} parent=1 // pred_region
      _
    $region61: #{dnet_forward.1} parent=1 // pred_fallthru
      _
    // Predicated region
    $region62: #{dnet_forward.1} parent=1 // pred_check
      _
    $region63: #{dnet_forward.1} parent=1 // pred_check_branch
      %5948 = sbr.rel (0) target = $region65
    $region64: #{dnet_forward.1} parent=1 // pred_region
      _
    $region65: #{dnet_forward.1} parent=1 // pred_fallthru
      _
    %5949 = vsyncpa [#allocation3], 1
    %5950 = vsyncpa [#allocation5], 1
    %5951 = vsyncpa [#allocation8], 1

</llo_original>
